<compile_context>
chip_gen: v7x
topology: tpu7x:2x2x1
jax: 0.10.0
libtpu: 0.0.40
codegen_flags: <defaults>
</compile_context>

<pallas_src>
import functools
import math

import jax
import jax.numpy as jnp
from jax.experimental import pallas as pl
from jax.experimental.pallas import tpu as pltpu

EPS = 1e-5        # modules.LayerNorm eps
NEG_INF = -1e4    # VITS masked_fill value
LANE = 128


def _round_up(n, m):
    return ((n + m - 1) // m) * m


# --------------------------------------------------------------------------
# pltpu.roll direction probe (runs once, eagerly, before the main kernel is
# traced).  Guarantees the conv shifts are correct regardless of the rotate
# convention; falls back to slice+concat if roll is unavailable.
# --------------------------------------------------------------------------
@functools.lru_cache(maxsize=None)
def _probe_roll_style():
    def k(x_ref, o_ref):
        o_ref[...] = pltpu.roll(x_ref[...], 1, 0)

    x = jnp.arange(8 * 128, dtype=jnp.float32).reshape(8, 128)
    try:
        out = pl.pallas_call(
            k, out_shape=jax.ShapeDtypeStruct((8, 128), jnp.float32))(x)
    except Exception:
        return "concat"
    if bool(jnp.array_equal(out, jnp.roll(x, 1, axis=0))):
        return "np"      # out[i] = x[(i - shift) % n]
    if bool(jnp.array_equal(out, jnp.roll(x, -1, axis=0))):
        return "inv"     # out[i] = x[(i + shift) % n]
    return "concat"


# --------------------------------------------------------------------------
# In-kernel helpers
# --------------------------------------------------------------------------
def _layer_norm(h, gamma, beta):
    """LayerNorm over channels.  h: (T, C) f32; gamma/beta: (1, C) f32."""
    mu = jnp.mean(h, axis=-1, keepdims=True)
    var = jnp.mean(jnp.square(h - mu), axis=-1, keepdims=True)
    return (h - mu) * jax.lax.rsqrt(var + EPS) * gamma + beta


def _shift_rows(h, d, roll_style):
    """y[t] = h[t + d] for 0 <= t + d < T else 0."""
    if d == 0:
        return h
    T, C = h.shape
    if abs(d) >= T:
        return jnp.zeros_like(h)
    if roll_style == "concat":
        z = jnp.zeros((abs(d), C), h.dtype)
        if d > 0:
            return jnp.concatenate([h[d:, :], z], axis=0)
        return jnp.concatenate([z, h[: T + d, :]], axis=0)
    # XLU sublane rotate + VPU mask (frees the vld/vst slots).
    shift = (-d) % T if roll_style == "np" else d % T
    rolled = pltpu.roll(h, shift, 0)
    t = jax.lax.broadcasted_iota(jnp.int32, h.shape, 0)
    valid = (t < T - d) if d > 0 else (t >= -d)
    return jnp.where(valid, rolled, jnp.zeros_like(h))


def _conv1d(h, w, b, offsets, roll_style):
    """'same' Conv1d on the MXU.

    h: (T, Cin) f32; w: (K*Cin, Cout) bf16 with rows [j*Cin:(j+1)*Cin] = tap j;
    b: (1, Cout) f32; offsets[j] = time offset of tap j.

    Cin >= 128: accumulate K per-tap bf16 matmuls (no im2col patch buffer).
    Cin <  128: one fused (T, K*Cin) @ (K*Cin, Cout) matmul.
    """
    cin = h.shape[1]
    if cin >= 128:
        out = None
        for j, d in enumerate(offsets):
            tap = _shift_rows(h, d, roll_style).astype(jnp.bfloat16)
            y = jnp.dot(tap, w[j * cin:(j + 1) * cin, :],
                        preferred_element_type=jnp.float32)
            out = y if out is None else out + y
    else:
        cols = [_shift_rows(h, d, roll_style) for d in offsets]
        patches = cols[0] if len(cols) == 1 else jnp.concatenate(cols, axis=1)
        out = jnp.dot(patches.astype(jnp.bfloat16), w,
                      preferred_element_type=jnp.float32)
    return out + b


# --------------------------------------------------------------------------
# Kernel
# --------------------------------------------------------------------------
def _rc_transformers_kernel(
        x_ref, m_ref, mt_ref,
        wqkv_ref, bqkv_ref, wo_ref, bo_ref, ln1g_ref, ln1b_ref,
        fw1_ref, fb1_ref, fw2_ref, fb2_ref, ln2g_ref, ln2b_ref,
        wpre_ref, bpre_ref,
        wnin_w_ref, wnin_b_ref, wnrs_w_ref, wnrs_b_ref,
        wpost_ref, bpost_ref,
        xout_ref, ldsum_ref,
        *, n_tf_layers, n_heads, tf_kernel_size,
        n_wn_layers, wn_kernel_size, dilation_rate,
        half_channels, hidden_padded, roll_style):
    C = half_channels
    HP = hidden_padded
    dk = C // n_heads
    T = x_ref.shape[1]
    bf = jnp.bfloat16

    x = x_ref[0]                       # (T, 2C) f32
    m = m_ref[0]                       # (T, 1)
    mt = mt_ref[0]                     # (1, T)
    x0 = x[:, :C]
    x1 = x[:, C:]

    # Additive attention-mask bias, hoisted out of the layer loop and tiled over
    # heads for the merged-head score matmul.
    bias = jnp.where((m * mt) == 0.0, NEG_INF, 0.0)              # (T, T)
    bias_all = jnp.concatenate([bias] * n_heads, axis=0)         # (nh*T, T)
    lane = jax.lax.broadcasted_iota(jnp.int32, (1, C), 1)
    head_masks = [((lane >= hh * dk) & (lane < (hh + 1) * dk)).astype(jnp.float32)
                  for hh in range(n_heads)]

    tf_offsets = [j - (tf_kernel_size - 1) // 2 for j in range(tf_kernel_size)]

    # ---------------- pre_transformer (attentions.Encoder) ----------------
    def tf_layer(l, h):
        hb = h.astype(bf)
        # fused q/k/v projection (1/sqrt(dk) folded into the q columns)
        qkv = jnp.dot(hb, wqkv_ref[l],
                      preferred_element_type=jnp.float32) + bqkv_ref[l]
        q = qkv[:, :C]
        k = qkv[:, C:2 * C].astype(bf)
        v = qkv[:, 2 * C:].astype(bf)
        # Merged heads: block-diagonal q stacked along M -> one score matmul and
        # one PV matmul for all heads.
        q_bd = jnp.concatenate([q * head_masks[hh] for hh in range(n_heads)],
                               axis=0)                              # (nh*T, C)
        sc = jax.lax.dot_general(q_bd.astype(bf), k,
                                 (((1,), (1,)), ((), ())),
                                 preferred_element_type=jnp.float32)  # (nh*T, T)
        p = jax.nn.softmax(sc + bias_all, axis=-1)
        ctx = jnp.dot(p.astype(bf), v,
                      preferred_element_type=jnp.float32)             # (nh*T, C)
        att = jnp.concatenate(
            [ctx[hh * T:(hh + 1) * T, hh * dk:(hh + 1) * dk]
             for hh in range(n_heads)], axis=1)                       # (T, C)
        att = jnp.dot(att.astype(bf), wo_ref[l],
                      preferred_element_type=jnp.float32) + bo_ref[l]
        h = _layer_norm(h + att, ln1g_ref[l], ln1b_ref[l])

        # FFN: conv(k=3) -> relu -> conv(k=3), masked (dropout = identity)
        ff = _conv1d(h * m, fw1_ref[l], fb1_ref[l], tf_offsets, roll_style)
        ff = jnp.maximum(ff, 0.0)
        ff = _conv1d(ff * m, fw2_ref[l], fb2_ref[l], tf_offsets, roll_style) * m
        return _layer_norm(h + ff, ln2g_ref[l], ln2b_ref[l])

    h = jax.lax.fori_loop(0, n_tf_layers, tf_layer, x0 * m)
    x0_ = h * m + x0

    # ---------------- pre (1x1 conv) ----------------
    wn_x = (jnp.dot(x0_.astype(bf), wpre_ref[...],
                    preferred_element_type=jnp.float32) + bpre_ref[...]) * m

    # ---------------- WN (gated dilated conv stack, g=None) ----------------
    def wn_step(i, wn_x, skip, offsets):
        x_in = _conv1d(wn_x, wnin_w_ref[i], wnin_b_ref[i], offsets, roll_style)
        acts = jnp.tanh(x_in[:, :HP]) * jax.nn.sigmoid(x_in[:, HP:])
        rs = jnp.dot(acts.astype(bf), wnrs_w_ref[i],
                     preferred_element_type=jnp.float32) + wnrs_b_ref[i]
        # Last layer's res half is zero-packed in the wrapper, so this is a no-op
        # there; pad lanes stay exactly zero throughout.
        wn_x = (wn_x + rs[:, :HP]) * m
        skip = skip + rs[:, HP:]
        return wn_x, skip

    skip0 = jnp.zeros_like(wn_x)
    if dilation_rate == 1:
        offsets = [j - (wn_kernel_size - 1) // 2 for j in range(wn_kernel_size)]
        wn_x, skip = jax.lax.fori_loop(
            0, n_wn_layers,
            lambda i, c: wn_step(i, c[0], c[1], offsets),
            (wn_x, skip0))
    else:
        # Dilation (and hence the shift offsets) varies per layer -> keep the
        # loop unrolled with layer-static offsets.
        skip = skip0
        for i in range(n_wn_layers):
            dil = dilation_rate ** i
            pad = dil * (wn_kernel_size - 1) // 2
            offsets = [j * dil - pad for j in range(wn_kernel_size)]
            wn_x, skip = wn_step(i, wn_x, skip, offsets)
    out_wn = skip * m

    # ------------- post (1x1 conv) + affine coupling (forward) -------------
    stats = (jnp.dot(out_wn.astype(bf), wpost_ref[...],
                     preferred_element_type=jnp.float32) + bpost_ref[...]) * m
    mean = stats[:, :C]
    logs = stats[:, C:]
    x1n = mean + x1 * jnp.exp(logs) * m

    # x_out aliases x (input_output_aliases): store both halves, no concat.
    xout_ref[0, :, :C] = x0.astype(xout_ref.dtype)
    xout_ref[0, :, C:] = x1n.astype(xout_ref.dtype)
    # Per-sample logdet partial (reduced over T here, over C in the wrapper) —
    # avoids writing the full (T, C) logs slab back to HBM.
    ldsum_ref[0] = jnp.sum(logs, axis=0, keepdims=True).astype(ldsum_ref.dtype)


# --------------------------------------------------------------------------
# Wrapper
# --------------------------------------------------------------------------
def residual_coupling_transformers_layer(x, x_mask, packed_params, cfg):
    """x: (B, T, channels) channels-last, x_mask: (B, T, 1).

    Returns (x_out (B, T, channels), logdet (B,))."""
    B, T, channels = x.shape
    C = channels // 2
    HP = _round_up(cfg["hidden_channels"], LANE)
    x_mask = x_mask.astype(jnp.float32)
    x_mask_t = jnp.swapaxes(x_mask, 1, 2)          # (B, 1, T)
    roll_style = _probe_roll_style()               # resolved before tracing

    def const_spec(a):
        nd = a.ndim
        return pl.BlockSpec(a.shape, lambda b, _nd=nd: (0,) * _nd)

    in_specs = [
        pl.BlockSpec((1, T, channels), lambda b: (b, 0, 0)),   # x
        pl.BlockSpec((1, T, 1), lambda b: (b, 0, 0)),          # x_mask
        pl.BlockSpec((1, 1, T), lambda b: (b, 0, 0)),          # x_mask transposed
    ] + [const_spec(w) for w in packed_params]                 # weights: VMEM-resident

    out_specs = (
        pl.BlockSpec((1, T, channels), lambda b: (b, 0, 0)),   # x_out (aliases x)
        pl.BlockSpec((1, 1, C), lambda b: (b, 0, 0)),          # logdet partial
    )

    kernel = functools.partial(
        _rc_transformers_kernel,
        n_tf_layers=cfg["n_tf_layers"], n_heads=cfg["n_heads"],
        tf_kernel_size=cfg["tf_kernel_size"],
        n_wn_layers=cfg["n_layers"], wn_kernel_size=cfg["kernel_size"],
        dilation_rate=cfg["dilation_rate"],
        half_channels=C, hidden_padded=HP, roll_style=roll_style)

    x_out, ld_part = pl.pallas_call(
        kernel,
        out_shape=(jax.ShapeDtypeStruct((B, T, channels), jnp.float32),
                   jax.ShapeDtypeStruct((B, 1, C), jnp.float32)),
        grid_spec=pltpu.PrefetchScalarGridSpec(
            num_scalar_prefetch=0,
            grid=(B,),
            in_specs=in_specs,
            out_specs=out_specs),
        input_output_aliases={0: 0},       # x_out reuses x's HBM buffer
        compiler_params=pltpu.CompilerParams(
            dimension_semantics=("parallel",),
            # explicit scoped-VMEM cap; re-derive for production shapes / v7x
            vmem_limit_bytes=64 * 1024 * 1024),
    )(x, x_mask, x_mask_t, *packed_params)

    logdet = jnp.sum(ld_part, axis=(1, 2))
    return x_out, logdet


# --------------------------------------------------------------------------
# Parameters (natural layout) + packing into the fused/stacked kernel layout
# --------------------------------------------------------------------------
def make_params(key, channels, hidden_channels, kernel_size, n_layers,
                n_tf_layers=2, n_heads=2, tf_kernel_size=3, scale=0.1):
    """Weights in channels-last matmul orientation.

    Conv1d weights are stored as (K, Cin, Cout) == transpose of torch's
    (Cout, Cin, K); WN weight_norm is folded into the effective weights.
    (post is zero-init in the PyTorch module; random here to exercise the math.)"""
    C = channels // 2
    keys = iter(jax.random.split(key, 256))

    def rnd(shape, s=scale):
        return s * jax.random.normal(next(keys), shape, jnp.float32)

    tf_layers = []
    for _ in range(n_tf_layers):
        tf_layers.append(dict(
            wq=rnd((C, C)), bq=rnd((1, C)),
            wk=rnd((C, C)), bk=rnd((1, C)),
            wv=rnd((C, C)), bv=rnd((1, C)),
            wo=rnd((C, C)), bo=rnd((1, C)),
            g1=1.0 + rnd((1, C)), b1=rnd((1, C)),
            fw1=rnd((tf_kernel_size, C, C)), fb1=rnd((1, C)),
            fw2=rnd((tf_kernel_size, C, C)), fb2=rnd((1, C)),
            g2=1.0 + rnd((1, C)), b2=rnd((1, C)),
        ))
    H = hidden_channels
    wpre, bpre = rnd((C, H)), rnd((1, H))
    wn_in = [(rnd((kernel_size, H, 2 * H)), rnd((1, 2 * H))) for _ in range(n_layers)]
    wn_rs = []
    for i in range(n_layers):
        out_ch = 2 * H if i < n_layers - 1 else H
        wn_rs.append((rnd((H, out_ch)), rnd((1, out_ch))))
    wpost, bpost = rnd((H, 2 * C)), rnd((1, 2 * C))
    return dict(tf=tf_layers, wpre=wpre, bpre=bpre, wn_in=wn_in, wn_rs=wn_rs,
                wpost=wpost, bpost=bpost)


def pack_params(p, cfg):
    """Stack per-layer weights, fold the 1/sqrt(dk) q scale, pre-reshape conv
    weights to (K*Cin, Cout), zero-pad hidden_channels to a 128-lane multiple,
    and cast matmul weights to bf16 (biases / LN params stay f32)."""
    tf = p["tf"]
    C = p["wpre"].shape[0]
    H = cfg["hidden_channels"]
    HP = _round_up(H, LANE)
    n_layers = cfg["n_layers"]
    dk = C // cfg["n_heads"]
    qs = 1.0 / math.sqrt(dk)
    bf = jnp.bfloat16
    stack = lambda xs: jnp.stack(xs, axis=0)

    wqkv = stack([jnp.concatenate([l["wq"] * qs, l["wk"], l["wv"]], 1) for l in tf]).astype(bf)
    bqkv = stack([jnp.concatenate([l["bq"] * qs, l["bk"], l["bv"]], 1) for l in tf])
    wo = stack([l["wo"] for l in tf]).astype(bf)
    bo = stack([l["bo"] for l in tf])
    g1 = stack([l["g1"] for l in tf]);  b1 = stack([l["b1"] for l in tf])
    fw1 = stack([l["fw1"].reshape(-1, l["fw1"].shape[-1]) for l in tf]).astype(bf)
    fb1 = stack([l["fb1"] for l in tf])
    fw2 = stack([l["fw2"].reshape(-1, l["fw2"].shape[-1]) for l in tf]).astype(bf)
    fb2 = stack([l["fb2"] for l in tf])
    g2 = stack([l["g2"] for l in tf]);  b2 = stack([l["b2"] for l in tf])

    wpre = jnp.zeros((C, HP), jnp.float32).at[:, :H].set(p["wpre"]).astype(bf)
    bpre = jnp.zeros((1, HP), jnp.float32).at[:, :H].set(p["bpre"])

    # WN in_layers: (K, H, 2H) -> (K*HP, 2HP); tanh half at [0:H], sigmoid half
    # at [HP:HP+H].  Pad lanes keep exactly zero activations downstream.
    wnin_w, wnin_b = [], []
    for w, b in p["wn_in"]:
        K = w.shape[0]
        wp = jnp.zeros((K, HP, 2 * HP), jnp.float32)
        wp = wp.at[:, :H, :H].set(w[:, :, :H])
        wp = wp.at[:, :H, HP:HP + H].set(w[:, :, H:])
        bp = jnp.zeros((1, 2 * HP), jnp.float32)
        bp = bp.at[:, :H].set(b[:, :H]).at[:, HP:HP + H].set(b[:, H:])
        wnin_w.append(wp.reshape(K * HP, 2 * HP)); wnin_b.append(bp)
    wnin_w = stack(wnin_w).astype(bf); wnin_b = stack(wnin_b)

    # WN res_skip: res half at [0:HP], skip half at [HP:2HP]; the last layer has
    # only a skip half (its res half stays zero -> uniform in-kernel update).
    wnrs_w, wnrs_b = [], []
    for i, (w, b) in enumerate(p["wn_rs"]):
        wp = jnp.zeros((HP, 2 * HP), jnp.float32)
        bp = jnp.zeros((1, 2 * HP), jnp.float32)
        if i < n_layers - 1:
            wp = wp.at[:H, :H].set(w[:, :H]).at[:H, HP:HP + H].set(w[:, H:])
            bp = bp.at[:, :H].set(b[:, :H]).at[:, HP:HP + H].set(b[:, H:])
        else:
            wp = wp.at[:H, HP:HP + H].set(w)
            bp = bp.at[:, HP:HP + H].set(b)
        wnrs_w.append(wp); wnrs_b.append(bp)
    wnrs_w = stack(wnrs_w).astype(bf); wnrs_b = stack(wnrs_b)

    wpost = jnp.zeros((HP, 2 * C), jnp.float32).at[:H, :].set(p["wpost"]).astype(bf)
    bpost = p["bpost"]

    return (wqkv, bqkv, wo, bo, g1, b1, fw1, fb1, fw2, fb2, g2, b2,
            wpre, bpre, wnin_w, wnin_b, wnrs_w, wnrs_b, wpost, bpost)


# --------------------------------------------------------------------------
# Pure-JAX reference (channels-last, f32), mirrors the PyTorch forward
# --------------------------------------------------------------------------
def ref_forward(x, x_mask, p, cfg):
    B, T, channels = x.shape
    C = channels // 2
    H = cfg["hidden_channels"]
    n_heads = cfg["n_heads"]
    dk = C // n_heads

    def conv1d(h, w, b, dilation=1):
        K = w.shape[0]
        P = dilation * (K - 1) // 2
        hp = jnp.pad(h, ((0, 0), (P, P), (0, 0)))
        out = sum(jnp.einsum("btc,cd->btd", hp[:, j * dilation:j * dilation + T], w[j])
                  for j in range(K))
        return out + b

    def ln(h, g, be):
        mu = jnp.mean(h, axis=-1, keepdims=True)
        var = jnp.mean(jnp.square(h - mu), axis=-1, keepdims=True)
        return (h - mu) * jax.lax.rsqrt(var + EPS) * g + be

    x0, x1 = x[..., :C], x[..., C:]
    mask2d = x_mask * jnp.swapaxes(x_mask, 1, 2)     # (B, T, T)

    h = x0 * x_mask
    for lp in p["tf"]:
        q = jnp.einsum("btc,cd->btd", h, lp["wq"]) + lp["bq"]
        k = jnp.einsum("btc,cd->btd", h, lp["wk"]) + lp["bk"]
        v = jnp.einsum("btc,cd->btd", h, lp["wv"]) + lp["bv"]
        qh = q.reshape(B, T, n_heads, dk)
        kh = k.reshape(B, T, n_heads, dk)
        vh = v.reshape(B, T, n_heads, dk)
        sc = jnp.einsum("bthd,bshd->bhts", qh / math.sqrt(dk), kh)
        sc = jnp.where(mask2d[:, None] == 0, NEG_INF, sc)
        attn = jax.nn.softmax(sc, axis=-1)
        y = jnp.einsum("bhts,bshd->bthd", attn, vh).reshape(B, T, C)
        y = jnp.einsum("btc,cd->btd", y, lp["wo"]) + lp["bo"]
        h = ln(h + y, lp["g1"], lp["b1"])
        ff = conv1d(h * x_mask, lp["fw1"], lp["fb1"])
        ff = jax.nn.relu(ff)
        ff = conv1d(ff * x_mask, lp["fw2"], lp["fb2"]) * x_mask
        h = ln(h + ff, lp["g2"], lp["b2"])
    h = h * x_mask
    x0_ = h + x0

    wn_x = (jnp.einsum("btc,cd->btd", x0_, p["wpre"]) + p["bpre"]) * x_mask

    skip = jnp.zeros_like(wn_x)
    for i in range(cfg["n_layers"]):
        dil = cfg["dilation_rate"] ** i
        w_in, b_in = p["wn_in"][i]
        x_in = conv1d(wn_x, w_in, b_in, dilation=dil)
        acts = jnp.tanh(x_in[..., :H]) * jax.nn.sigmoid(x_in[..., H:])
        w_rs, b_rs = p["wn_rs"][i]
        rs = jnp.einsum("btc,cd->btd", acts, w_rs) + b_rs
        if i < cfg["n_layers"] - 1:
            wn_x = (wn_x + rs[..., :H]) * x_mask
            skip = skip + rs[..., H:]
        else:
            skip = skip + rs
    out_wn = skip * x_mask

    stats = (jnp.einsum("btc,cd->btd", out_wn, p["wpost"]) + p["bpost"]) * x_mask
    mean, logs = stats[..., :C], stats[..., C:]
    x1n = mean + x1 * jnp.exp(logs) * x_mask
    x_out = jnp.concatenate([x0, x1n], axis=-1)
    logdet = jnp.sum(logs, axis=(1, 2))
    return x_out, logdet


# --------------------------------------------------------------------------
if __name__ == "__main__":
    B, T = 2, 16
    channels, hidden_channels = 16, 32              # channels even (half = 8)
    kernel_size, dilation_rate, n_layers = 5, 1, 4  # WN config
    n_tf_layers, n_heads, tf_kernel_size = 2, 2, 3  # fixed by the module

    cfg = dict(hidden_channels=hidden_channels, kernel_size=kernel_size,
               dilation_rate=dilation_rate, n_layers=n_layers,
               n_tf_layers=n_tf_layers, n_heads=n_heads,
               tf_kernel_size=tf_kernel_size)

    key = jax.random.PRNGKey(0)
    kx, kp = jax.random.split(key)
    x = jax.random.normal(kx, (B, T, channels), jnp.float32)   # channels-last (NTC)
    lengths = jnp.array([T, T - 5])
    x_mask = (jnp.arange(T)[None, :] < lengths[:, None]).astype(jnp.float32)[..., None]

    params = make_params(kp, channels, hidden_channels, kernel_size, n_layers,
                         n_tf_layers, n_heads, tf_kernel_size)
    packed = pack_params(params, cfg)

    # Reference FIRST: the pallas_call aliases x's buffer (input_output_aliases),
    # so x is not reused afterwards.
    x_ref_out, logdet_ref = ref_forward(x, x_mask, params, cfg)
    x_ref_out = jax.block_until_ready(x_ref_out)

    x_out, logdet = residual_coupling_transformers_layer(x, x_mask, packed, cfg)
    x_out = jax.block_until_ready(x_out)
    logdet = jax.block_until_ready(logdet)

    assert x_out.shape == (B, T, channels) and logdet.shape == (B,)
    err_x = float(jnp.max(jnp.abs(x_out - x_ref_out)))
    err_ld = float(jnp.max(jnp.abs(logdet - logdet_ref)))
    assert err_x < 5e-2, f"x_out max abs err {err_x}"
    assert err_ld < 5e-1, f"logdet max abs err {err_ld}"
    print("KERNEL_OK")
</pallas_src>

<mosaic_0001>
module attributes {stable_mosaic.version = 11 : i64} {
  func.func @k(%arg0: memref<8x128xf32, #tpu.memory_space<vmem>>, %arg1: memref<8x128xf32, #tpu.memory_space<vmem>>) attributes {dimension_semantics = [], scalar_prefetch = 0 : i64, scratch_operands = 0 : i64, tpu.core_type = #tpu.core_type<tc>} {
    %c0 = arith.constant 0 : index
    %c0_0 = arith.constant 0 : index
    %0 = vector.load %arg0[%c0, %c0_0] : memref<8x128xf32, #tpu.memory_space<vmem>>, vector<8x128xf32>
    %c1_i32 = arith.constant 1 : i32
    %1 = tpu.dynamic_rotate %0 by %c1_i32 dim 0 : vector<8x128xf32>, i32 -> vector<8x128xf32>
    %c0_1 = arith.constant 0 : index
    %c0_2 = arith.constant 0 : index
    %2 = vector.load %arg1[%c0_1, %c0_2] : memref<8x128xf32, #tpu.memory_space<vmem>>, vector<8x128xf32>
    tpu.vector_store %arg1[%c0_1, %c0_2], %1 {strides = array<i32>} : memref<8x128xf32, #tpu.memory_space<vmem>>, vector<8x128xf32>,
    return
  }
}

module attributes {stable_mosaic.version = 11 : i64} {
  func.func @_rc_transformers_kernel(%arg0: i32, %arg1: memref<1x16x16xf32, #tpu.memory_space<vmem>>, %arg2: memref<1x16x1xf32, #tpu.memory_space<vmem>>, %arg3: memref<1x1x16xf32, #tpu.memory_space<vmem>>, %arg4: memref<2x8x24xbf16, #tpu.memory_space<vmem>>, %arg5: memref<2x1x24xf32, #tpu.memory_space<vmem>>, %arg6: memref<2x8x8xbf16, #tpu.memory_space<vmem>>, %arg7: memref<2x1x8xf32, #tpu.memory_space<vmem>>, %arg8: memref<2x1x8xf32, #tpu.memory_space<vmem>>, %arg9: memref<2x1x8xf32, #tpu.memory_space<vmem>>, %arg10: memref<2x24x8xbf16, #tpu.memory_space<vmem>>, %arg11: memref<2x1x8xf32, #tpu.memory_space<vmem>>, %arg12: memref<2x24x8xbf16, #tpu.memory_space<vmem>>, %arg13: memref<2x1x8xf32, #tpu.memory_space<vmem>>, %arg14: memref<2x1x8xf32, #tpu.memory_space<vmem>>, %arg15: memref<2x1x8xf32, #tpu.memory_space<vmem>>, %arg16: memref<8x128xbf16, #tpu.memory_space<vmem>>, %arg17: memref<1x128xf32, #tpu.memory_space<vmem>>, %arg18: memref<4x640x256xbf16, #tpu.memory_space<vmem>>, %arg19: memref<4x1x256xf32, #tpu.memory_space<vmem>>, %arg20: memref<4x128x256xbf16, #tpu.memory_space<vmem>>, %arg21: memref<4x1x256xf32, #tpu.memory_space<vmem>>, %arg22: memref<128x16xbf16, #tpu.memory_space<vmem>>, %arg23: memref<1x16xf32, #tpu.memory_space<vmem>>, %arg24: memref<1x16x16xf32, #tpu.memory_space<vmem>>, %arg25: memref<1x1x8xf32, #tpu.memory_space<vmem>>) attributes {dimension_semantics = [#tpu.dimension_semantics<parallel>], iteration_bounds = array<i64: 2>, scalar_prefetch = 0 : i64, scratch_operands = 0 : i64, tpu.core_type = #tpu.core_type<tc>, window_params = [{transform_indices = @transform_0, window_bounds = array<i64: 1, 16, 16>}, {transform_indices = @transform_1, window_bounds = array<i64: 1, 16, 1>}, {transform_indices = @transform_2, window_bounds = array<i64: 1, 1, 16>}, {pipeline_mode = #tpu.pipeline_mode<synchronous>, transform_indices = @transform_3, window_bounds = array<i64: 2, 8, 24>}, {pipeline_mode = #tpu.pipeline_mode<synchronous>, transform_indices = @transform_4, window_bounds = array<i64: 2, 1, 24>}, {pipeline_mode = #tpu.pipeline_mode<synchronous>, transform_indices = @transform_5, window_bounds = array<i64: 2, 8, 8>}, {pipeline_mode = #tpu.pipeline_mode<synchronous>, transform_indices = @transform_6, window_bounds = array<i64: 2, 1, 8>}, {pipeline_mode = #tpu.pipeline_mode<synchronous>, transform_indices = @transform_7, window_bounds = array<i64: 2, 1, 8>}, {pipeline_mode = #tpu.pipeline_mode<synchronous>, transform_indices = @transform_8, window_bounds = array<i64: 2, 1, 8>}, {pipeline_mode = #tpu.pipeline_mode<synchronous>, transform_indices = @transform_9, window_bounds = array<i64: 2, 24, 8>}, {pipeline_mode = #tpu.pipeline_mode<synchronous>, transform_indices = @transform_10, window_bounds = array<i64: 2, 1, 8>}, {pipeline_mode = #tpu.pipeline_mode<synchronous>, transform_indices = @transform_11, window_bounds = array<i64: 2, 24, 8>}, {pipeline_mode = #tpu.pipeline_mode<synchronous>, transform_indices = @transform_12, window_bounds = array<i64: 2, 1, 8>}, {pipeline_mode = #tpu.pipeline_mode<synchronous>, transform_indices = @transform_13, window_bounds = array<i64: 2, 1, 8>}, {pipeline_mode = #tpu.pipeline_mode<synchronous>, transform_indices = @transform_14, window_bounds = array<i64: 2, 1, 8>}, {pipeline_mode = #tpu.pipeline_mode<synchronous>, transform_indices = @transform_15, window_bounds = array<i64: 8, 128>}, {pipeline_mode = #tpu.pipeline_mode<synchronous>, transform_indices = @transform_16, window_bounds = array<i64: 1, 128>}, {pipeline_mode = #tpu.pipeline_mode<synchronous>, transform_indices = @transform_17, window_bounds = array<i64: 4, 640, 256>}, {pipeline_mode = #tpu.pipeline_mode<synchronous>, transform_indices = @transform_18, window_bounds = array<i64: 4, 1, 256>}, {pipeline_mode = #tpu.pipeline_mode<synchronous>, transform_indices = @transform_19, window_bounds = array<i64: 4, 128, 256>}, {pipeline_mode = #tpu.pipeline_mode<synchronous>, transform_indices = @transform_20, window_bounds = array<i64: 4, 1, 256>}, {pipeline_mode = #tpu.pipeline_mode<synchronous>, transform_indices = @transform_21, window_bounds = array<i64: 128, 16>}, {pipeline_mode = #tpu.pipeline_mode<synchronous>, transform_indices = @transform_22, window_bounds = array<i64: 1, 16>}, {transform_indices = @transform_23, window_bounds = array<i64: 1, 16, 16>}, {transform_indices = @transform_24, window_bounds = array<i64: 1, 1, 8>}]} {
    %c0 = arith.constant 0 : index
    %c0_0 = arith.constant 0 : index
    %c0_1 = arith.constant 0 : index
    %0 = vector.load %arg1[%c0, %c0_0, %c0_1] : memref<1x16x16xf32, #tpu.memory_space<vmem>>, vector<1x16x16xf32>
    %1 = vector.shape_cast %0 : vector<1x16x16xf32> to vector<16x16xf32>
    %c0_2 = arith.constant 0 : index
    %c0_3 = arith.constant 0 : index
    %c0_4 = arith.constant 0 : index
    %2 = vector.load %arg2[%c0_2, %c0_3, %c0_4] : memref<1x16x1xf32, #tpu.memory_space<vmem>>, vector<1x16x1xf32>
    %3 = vector.shape_cast %2 : vector<1x16x1xf32> to vector<16x1xf32>
    %c0_5 = arith.constant 0 : index
    %c0_6 = arith.constant 0 : index
    %c0_7 = arith.constant 0 : index
    %4 = vector.load %arg3[%c0_5, %c0_6, %c0_7] : memref<1x1x16xf32, #tpu.memory_space<vmem>>, vector<1x1x16xf32>
    %5 = vector.shape_cast %4 : vector<1x1x16xf32> to vector<1x16xf32>
    %6 = vector.extract_strided_slice %1 {offsets = [0, 0], sizes = [16, 8], strides = [1, 1]} : vector<16x16xf32> to vector<16x8xf32>
    %7 = vector.extract_strided_slice %1 {offsets = [0, 8], sizes = [16, 8], strides = [1, 1]} : vector<16x16xf32> to vector<16x8xf32>
    %8 = vector.broadcast %3 : vector<16x1xf32> to vector<16x16xf32>
    %9 = vector.broadcast %5 : vector<1x16xf32> to vector<16x16xf32>
    %10 = arith.mulf %8, %9 : vector<16x16xf32>
    %cst = arith.constant 0.000000e+00 : f32
    %11 = vector.broadcast %cst : f32 to vector<16x16xf32>
    %12 = arith.cmpf oeq, %10, %11 : vector<16x16xf32>
    %cst_8 = arith.constant -1.000000e+04 : f32
    %cst_9 = arith.constant 0.000000e+00 : f32
    %13 = vector.broadcast %cst_8 : f32 to vector<16x16xf32>
    %14 = vector.broadcast %cst_9 : f32 to vector<16x16xf32>
    %15 = arith.select %12, %13, %14 : vector<16x16xi1>, vector<16x16xf32>
    %16 = tpu.concatenate %15, %15 in 0 : vector<16x16xf32>, vector<16x16xf32> -> vector<32x16xf32>
    %17 = tpu.iota {dimensions = array<i32: 1>} : vector<1x8xi32>
    %c0_i32 = arith.constant 0 : i32
    %18 = vector.broadcast %c0_i32 : i32 to vector<1x8xi32>
    %19 = arith.cmpi sge, %17, %18 : vector<1x8xi32>
    %c4_i32 = arith.constant 4 : i32
    %20 = vector.broadcast %c4_i32 : i32 to vector<1x8xi32>
    %21 = arith.cmpi slt, %17, %20 : vector<1x8xi32>
    %22 = arith.andi %19, %21 : vector<1x8xi1>
    %23 = arith.extui %22 : vector<1x8xi1> to vector<1x8xi32>
    %24 = arith.sitofp %23 : vector<1x8xi32> to vector<1x8xf32>
    %c4_i32_10 = arith.constant 4 : i32
    %25 = vector.broadcast %c4_i32_10 : i32 to vector<1x8xi32>
    %26 = arith.cmpi sge, %17, %25 : vector<1x8xi32>
    %c8_i32 = arith.constant 8 : i32
    %27 = vector.broadcast %c8_i32 : i32 to vector<1x8xi32>
    %28 = arith.cmpi slt, %17, %27 : vector<1x8xi32>
    %29 = arith.andi %26, %28 : vector<1x8xi1>
    %30 = arith.extui %29 : vector<1x8xi1> to vector<1x8xi32>
    %31 = arith.sitofp %30 : vector<1x8xi32> to vector<1x8xf32>
    %32 = vector.broadcast %3 : vector<16x1xf32> to vector<16x8xf32>
    %33 = arith.mulf %6, %32 : vector<16x8xf32>
    %c0_i32_11 = arith.constant 0 : i32
    %c2_i32 = arith.constant 2 : i32
    %34 = arith.addi %c0_i32_11, %c2_i32 : i32
    %c1_i32 = arith.constant 1 : i32
    %35 = scf.for %arg26 = %c0_i32_11 to %34 step %c1_i32 iter_args(%arg27 = %33) -> (vector<16x8xf32>)  : i32 {
      %78 = arith.truncf %arg27 : vector<16x8xf32> to vector<16x8xbf16>
      %79 = arith.index_cast %arg26 : i32 to index
      %c0_37 = arith.constant 0 : index
      %c0_38 = arith.constant 0 : index
      %80 = vector.load %arg4[%79, %c0_37, %c0_38] : memref<2x8x24xbf16, #tpu.memory_space<vmem>>, vector<1x8x24xbf16>
      %81 = vector.shape_cast %80 : vector<1x8x24xbf16> to vector<8x24xbf16>
      %cst_39 = arith.constant dense<0.000000e+00> : vector<16x24xf32>
      %82 = tpu.matmul %78, %81, %cst_39 {dimension_numbers = #tpu.dot_dimension_numbers<[1], [0], [0], [1], [0, 0, 1, 1], [], []>} : vector<16x8xbf16>, vector<8x24xbf16>, vector<16x24xf32> -> vector<16x24xf32>
      %83 = arith.index_cast %arg26 : i32 to index
      %c0_40 = arith.constant 0 : index
      %c0_41 = arith.constant 0 : index
      %84 = vector.load %arg5[%83, %c0_40, %c0_41] : memref<2x1x24xf32, #tpu.memory_space<vmem>>, vector<1x1x24xf32>
      %85 = vector.shape_cast %84 : vector<1x1x24xf32> to vector<1x24xf32>
      %86 = vector.broadcast %85 : vector<1x24xf32> to vector<16x24xf32>
      %87 = arith.addf %82, %86 : vector<16x24xf32>
      %88 = vector.extract_strided_slice %87 {offsets = [0, 0], sizes = [16, 8], strides = [1, 1]} : vector<16x24xf32> to vector<16x8xf32>
      %89 = vector.extract_strided_slice %87 {offsets = [0, 8], sizes = [16, 8], strides = [1, 1]} : vector<16x24xf32> to vector<16x8xf32>
      %90 = arith.truncf %89 : vector<16x8xf32> to vector<16x8xbf16>
      %91 = vector.extract_strided_slice %87 {offsets = [0, 16], sizes = [16, 8], strides = [1, 1]} : vector<16x24xf32> to vector<16x8xf32>
      %92 = arith.truncf %91 : vector<16x8xf32> to vector<16x8xbf16>
      %93 = vector.broadcast %24 : vector<1x8xf32> to vector<16x8xf32>
      %94 = arith.mulf %88, %93 : vector<16x8xf32>
      %95 = vector.broadcast %31 : vector<1x8xf32> to vector<16x8xf32>
      %96 = arith.mulf %88, %95 : vector<16x8xf32>
      %97 = tpu.concatenate %94, %96 in 0 : vector<16x8xf32>, vector<16x8xf32> -> vector<32x8xf32>
      %98 = arith.truncf %97 : vector<32x8xf32> to vector<32x8xbf16>
      %cst_42 = arith.constant dense<0.000000e+00> : vector<32x16xf32>
      %99 = tpu.matmul %98, %90, %cst_42 {dimension_numbers = #tpu.dot_dimension_numbers<[1], [1], [0], [0], [0, 0, 1, 0], [], []>} : vector<32x8xbf16>, vector<16x8xbf16>, vector<32x16xf32> -> vector<32x16xf32>
      %100 = arith.addf %99, %16 : vector<32x16xf32>
      %cst_43 = arith.constant dense<0xFF800000> : vector<32xf32>
      %101 = vector.multi_reduction <maximumf>, %100, %cst_43 [1] : vector<32x16xf32> to vector<32xf32>
      %cst_44 = arith.constant 0xFF800000 : f32
      %102 = vector.broadcast %cst_44 : f32 to vector<32xf32>
      %103 = arith.maximumf %102, %101 : vector<32xf32>
      %104 = vector.shape_cast %103 : vector<32xf32> to vector<32x1xf32>
      %105 = vector.broadcast %104 : vector<32x1xf32> to vector<32x16xf32>
      %106 = arith.subf %100, %105 : vector<32x16xf32>
      %107 = math.exp %106 : vector<32x16xf32>
      %cst_45 = arith.constant dense<0.000000e+00> : vector<32xf32>
      %108 = vector.multi_reduction <add>, %107, %cst_45 [1] : vector<32x16xf32> to vector<32xf32>
      %109 = vector.shape_cast %108 : vector<32xf32> to vector<32x1xf32>
      %110 = vector.broadcast %109 : vector<32x1xf32> to vector<32x16xf32>
      %111 = arith.divf %107, %110 : vector<32x16xf32>
      %112 = arith.truncf %111 : vector<32x16xf32> to vector<32x16xbf16>
      %cst_46 = arith.constant dense<0.000000e+00> : vector<32x8xf32>
      %113 = tpu.matmul %112, %92, %cst_46 {dimension_numbers = #tpu.dot_dimension_numbers<[1], [0], [0], [1], [0, 0, 1, 1], [], []>} : vector<32x16xbf16>, vector<16x8xbf16>, vector<32x8xf32> -> vector<32x8xf32>
      %114 = vector.extract_strided_slice %113 {offsets = [0, 0], sizes = [16, 4], strides = [1, 1]} : vector<32x8xf32> to vector<16x4xf32>
      %115 = vector.extract_strided_slice %113 {offsets = [16, 4], sizes = [16, 4], strides = [1, 1]} : vector<32x8xf32> to vector<16x4xf32>
      %116 = tpu.concatenate %114, %115 in 1 : vector<16x4xf32>, vector<16x4xf32> -> vector<16x8xf32>
      %117 = arith.truncf %116 : vector<16x8xf32> to vector<16x8xbf16>
      %118 = arith.index_cast %arg26 : i32 to index
      %c0_47 = arith.constant 0 : index
      %c0_48 = arith.constant 0 : index
      %119 = vector.load %arg6[%118, %c0_47, %c0_48] : memref<2x8x8xbf16, #tpu.memory_space<vmem>>, vector<1x8x8xbf16>
      %120 = vector.shape_cast %119 : vector<1x8x8xbf16> to vector<8x8xbf16>
      %cst_49 = arith.constant dense<0.000000e+00> : vector<16x8xf32>
      %121 = tpu.matmul %117, %120, %cst_49 {dimension_numbers = #tpu.dot_dimension_numbers<[1], [0], [0], [1], [0, 0, 1, 1], [], []>} : vector<16x8xbf16>, vector<8x8xbf16>, vector<16x8xf32> -> vector<16x8xf32>
      %122 = arith.index_cast %arg26 : i32 to index
      %c0_50 = arith.constant 0 : index
      %c0_51 = arith.constant 0 : index
      %123 = vector.load %arg7[%122, %c0_50, %c0_51] : memref<2x1x8xf32, #tpu.memory_space<vmem>>, vector<1x1x8xf32>
      %124 = vector.shape_cast %123 : vector<1x1x8xf32> to vector<1x8xf32>
      %125 = vector.broadcast %124 : vector<1x8xf32> to vector<16x8xf32>
      %126 = arith.addf %121, %125 : vector<16x8xf32>
      %127 = arith.addf %arg27, %126 : vector<16x8xf32>
      %128 = arith.index_cast %arg26 : i32 to index
      %c0_52 = arith.constant 0 : index
      %c0_53 = arith.constant 0 : index
      %129 = vector.load %arg8[%128, %c0_52, %c0_53] : memref<2x1x8xf32, #tpu.memory_space<vmem>>, vector<1x1x8xf32>
      %130 = vector.shape_cast %129 : vector<1x1x8xf32> to vector<1x8xf32>
      %131 = arith.index_cast %arg26 : i32 to index
      %c0_54 = arith.constant 0 : index
      %c0_55 = arith.constant 0 : index
      %132 = vector.load %arg9[%131, %c0_54, %c0_55] : memref<2x1x8xf32, #tpu.memory_space<vmem>>, vector<1x1x8xf32>
      %133 = vector.shape_cast %132 : vector<1x1x8xf32> to vector<1x8xf32>
      %cst_56 = arith.constant dense<0.000000e+00> : vector<16xf32>
      %134 = vector.multi_reduction <add>, %127, %cst_56 [1] : vector<16x8xf32> to vector<16xf32>
      %135 = vector.shape_cast %134 : vector<16xf32> to vector<16x1xf32>
      %cst_57 = arith.constant 8.000000e+00 : f32
      %136 = vector.broadcast %cst_57 : f32 to vector<16x1xf32>
      %137 = arith.divf %135, %136 : vector<16x1xf32>
      %138 = vector.broadcast %137 : vector<16x1xf32> to vector<16x8xf32>
      %139 = arith.subf %127, %138 : vector<16x8xf32>
      %140 = arith.mulf %139, %139 : vector<16x8xf32>
      %cst_58 = arith.constant dense<0.000000e+00> : vector<16xf32>
      %141 = vector.multi_reduction <add>, %140, %cst_58 [1] : vector<16x8xf32> to vector<16xf32>
      %142 = vector.shape_cast %141 : vector<16xf32> to vector<16x1xf32>
      %cst_59 = arith.constant 8.000000e+00 : f32
      %143 = vector.broadcast %cst_59 : f32 to vector<16x1xf32>
      %144 = arith.divf %142, %143 : vector<16x1xf32>
      %145 = vector.broadcast %137 : vector<16x1xf32> to vector<16x8xf32>
      %146 = arith.subf %127, %145 : vector<16x8xf32>
      %cst_60 = arith.constant 9.99999974E-6 : f32
      %147 = vector.broadcast %cst_60 : f32 to vector<16x1xf32>
      %148 = arith.addf %144, %147 : vector<16x1xf32>
      %149 = math.rsqrt %148 : vector<16x1xf32>
      %150 = vector.broadcast %149 : vector<16x1xf32> to vector<16x8xf32>
      %151 = arith.mulf %146, %150 : vector<16x8xf32>
      %152 = vector.broadcast %130 : vector<1x8xf32> to vector<16x8xf32>
      %153 = arith.mulf %151, %152 : vector<16x8xf32>
      %154 = vector.broadcast %133 : vector<1x8xf32> to vector<16x8xf32>
      %155 = arith.addf %153, %154 : vector<16x8xf32>
      %156 = vector.broadcast %3 : vector<16x1xf32> to vector<16x8xf32>
      %157 = arith.mulf %155, %156 : vector<16x8xf32>
      %158 = arith.index_cast %arg26 : i32 to index
      %c0_61 = arith.constant 0 : index
      %c0_62 = arith.constant 0 : index
      %159 = vector.load %arg10[%158, %c0_61, %c0_62] : memref<2x24x8xbf16, #tpu.memory_space<vmem>>, vector<1x24x8xbf16>
      %160 = vector.shape_cast %159 : vector<1x24x8xbf16> to vector<24x8xbf16>
      %161 = arith.index_cast %arg26 : i32 to index
      %c0_63 = arith.constant 0 : index
      %c0_64 = arith.constant 0 : index
      %162 = vector.load %arg11[%161, %c0_63, %c0_64] : memref<2x1x8xf32, #tpu.memory_space<vmem>>, vector<1x1x8xf32>
      %163 = vector.shape_cast %162 : vector<1x1x8xf32> to vector<1x8xf32>
      %cst_65 = arith.constant 0.000000e+00 : f32
      %164 = vector.broadcast %cst_65 : f32 to vector<1x8xf32>
      %165 = vector.extract_strided_slice %157 {offsets = [0, 0], sizes = [15, 8], strides = [1, 1]} : vector<16x8xf32> to vector<15x8xf32>
      %166 = tpu.concatenate %164, %165 in 0 : vector<1x8xf32>, vector<15x8xf32> -> vector<16x8xf32>
      %cst_66 = arith.constant 0.000000e+00 : f32
      %167 = vector.broadcast %cst_66 : f32 to vector<1x8xf32>
      %168 = vector.extract_strided_slice %157 {offsets = [1, 0], sizes = [15, 8], strides = [1, 1]} : vector<16x8xf32> to vector<15x8xf32>
      %169 = tpu.concatenate %168, %167 in 0 : vector<15x8xf32>, vector<1x8xf32> -> vector<16x8xf32>
      %170 = tpu.concatenate %166, %157, %169 in 1 : vector<16x8xf32>, vector<16x8xf32>, vector<16x8xf32> -> vector<16x24xf32>
      %171 = arith.truncf %170 : vector<16x24xf32> to vector<16x24xbf16>
      %cst_67 = arith.constant dense<0.000000e+00> : vector<16x8xf32>
      %172 = tpu.matmul %171, %160, %cst_67 {dimension_numbers = #tpu.dot_dimension_numbers<[1], [0], [0], [1], [0, 0, 1, 1], [], []>} : vector<16x24xbf16>, vector<24x8xbf16>, vector<16x8xf32> -> vector<16x8xf32>
      %173 = vector.broadcast %163 : vector<1x8xf32> to vector<16x8xf32>
      %174 = arith.addf %172, %173 : vector<16x8xf32>
      %cst_68 = arith.constant 0.000000e+00 : f32
      %175 = vector.broadcast %cst_68 : f32 to vector<16x8xf32>
      %176 = arith.maximumf %174, %175 : vector<16x8xf32>
      %177 = vector.broadcast %3 : vector<16x1xf32> to vector<16x8xf32>
      %178 = arith.mulf %176, %177 : vector<16x8xf32>
      %179 = arith.index_cast %arg26 : i32 to index
      %c0_69 = arith.constant 0 : index
      %c0_70 = arith.constant 0 : index
      %180 = vector.load %arg12[%179, %c0_69, %c0_70] : memref<2x24x8xbf16, #tpu.memory_space<vmem>>, vector<1x24x8xbf16>
      %181 = vector.shape_cast %180 : vector<1x24x8xbf16> to vector<24x8xbf16>
      %182 = arith.index_cast %arg26 : i32 to index
      %c0_71 = arith.constant 0 : index
      %c0_72 = arith.constant 0 : index
      %183 = vector.load %arg13[%182, %c0_71, %c0_72] : memref<2x1x8xf32, #tpu.memory_space<vmem>>, vector<1x1x8xf32>
      %184 = vector.shape_cast %183 : vector<1x1x8xf32> to vector<1x8xf32>
      %cst_73 = arith.constant 0.000000e+00 : f32
      %185 = vector.broadcast %cst_73 : f32 to vector<1x8xf32>
      %186 = vector.extract_strided_slice %178 {offsets = [0, 0], sizes = [15, 8], strides = [1, 1]} : vector<16x8xf32> to vector<15x8xf32>
      %187 = tpu.concatenate %185, %186 in 0 : vector<1x8xf32>, vector<15x8xf32> -> vector<16x8xf32>
      %cst_74 = arith.constant 0.000000e+00 : f32
      %188 = vector.broadcast %cst_74 : f32 to vector<1x8xf32>
      %189 = vector.extract_strided_slice %178 {offsets = [1, 0], sizes = [15, 8], strides = [1, 1]} : vector<16x8xf32> to vector<15x8xf32>
      %190 = tpu.concatenate %189, %188 in 0 : vector<15x8xf32>, vector<1x8xf32> -> vector<16x8xf32>
      %191 = tpu.concatenate %187, %178, %190 in 1 : vector<16x8xf32>, vector<16x8xf32>, vector<16x8xf32> -> vector<16x24xf32>
      %192 = arith.truncf %191 : vector<16x24xf32> to vector<16x24xbf16>
      %cst_75 = arith.constant dense<0.000000e+00> : vector<16x8xf32>
      %193 = tpu.matmul %192, %181, %cst_75 {dimension_numbers = #tpu.dot_dimension_numbers<[1], [0], [0], [1], [0, 0, 1, 1], [], []>} : vector<16x24xbf16>, vector<24x8xbf16>, vector<16x8xf32> -> vector<16x8xf32>
      %194 = vector.broadcast %184 : vector<1x8xf32> to vector<16x8xf32>
      %195 = arith.addf %193, %194 : vector<16x8xf32>
      %196 = vector.broadcast %3 : vector<16x1xf32> to vector<16x8xf32>
      %197 = arith.mulf %195, %196 : vector<16x8xf32>
      %198 = arith.addf %155, %197 : vector<16x8xf32>
      %199 = arith.index_cast %arg26 : i32 to index
      %c0_76 = arith.constant 0 : index
      %c0_77 = arith.constant 0 : index
      %200 = vector.load %arg14[%199, %c0_76, %c0_77] : memref<2x1x8xf32, #tpu.memory_space<vmem>>, vector<1x1x8xf32>
      %201 = vector.shape_cast %200 : vector<1x1x8xf32> to vector<1x8xf32>
      %202 = arith.index_cast %arg26 : i32 to index
      %c0_78 = arith.constant 0 : index
      %c0_79 = arith.constant 0 : index
      %203 = vector.load %arg15[%202, %c0_78, %c0_79] : memref<2x1x8xf32, #tpu.memory_space<vmem>>, vector<1x1x8xf32>
      %204 = vector.shape_cast %203 : vector<1x1x8xf32> to vector<1x8xf32>
      %cst_80 = arith.constant dense<0.000000e+00> : vector<16xf32>
      %205 = vector.multi_reduction <add>, %198, %cst_80 [1] : vector<16x8xf32> to vector<16xf32>
      %206 = vector.shape_cast %205 : vector<16xf32> to vector<16x1xf32>
      %cst_81 = arith.constant 8.000000e+00 : f32
      %207 = vector.broadcast %cst_81 : f32 to vector<16x1xf32>
      %208 = arith.divf %206, %207 : vector<16x1xf32>
      %209 = vector.broadcast %208 : vector<16x1xf32> to vector<16x8xf32>
      %210 = arith.subf %198, %209 : vector<16x8xf32>
      %211 = arith.mulf %210, %210 : vector<16x8xf32>
      %cst_82 = arith.constant dense<0.000000e+00> : vector<16xf32>
      %212 = vector.multi_reduction <add>, %211, %cst_82 [1] : vector<16x8xf32> to vector<16xf32>
      %213 = vector.shape_cast %212 : vector<16xf32> to vector<16x1xf32>
      %cst_83 = arith.constant 8.000000e+00 : f32
      %214 = vector.broadcast %cst_83 : f32 to vector<16x1xf32>
      %215 = arith.divf %213, %214 : vector<16x1xf32>
      %216 = vector.broadcast %208 : vector<16x1xf32> to vector<16x8xf32>
      %217 = arith.subf %198, %216 : vector<16x8xf32>
      %cst_84 = arith.constant 9.99999974E-6 : f32
      %218 = vector.broadcast %cst_84 : f32 to vector<16x1xf32>
      %219 = arith.addf %215, %218 : vector<16x1xf32>
      %220 = math.rsqrt %219 : vector<16x1xf32>
      %221 = vector.broadcast %220 : vector<16x1xf32> to vector<16x8xf32>
      %222 = arith.mulf %217, %221 : vector<16x8xf32>
      %223 = vector.broadcast %201 : vector<1x8xf32> to vector<16x8xf32>
      %224 = arith.mulf %222, %223 : vector<16x8xf32>
      %225 = vector.broadcast %204 : vector<1x8xf32> to vector<16x8xf32>
      %226 = arith.addf %224, %225 : vector<16x8xf32>
      scf.yield %226 : vector<16x8xf32>
    }
    %c2_i32_12 = arith.constant 2 : i32
    %36 = vector.broadcast %3 : vector<16x1xf32> to vector<16x8xf32>
    %37 = arith.mulf %35, %36 : vector<16x8xf32>
    %38 = arith.addf %37, %6 : vector<16x8xf32>
    %39 = arith.truncf %38 : vector<16x8xf32> to vector<16x8xbf16>
    %c0_13 = arith.constant 0 : index
    %c0_14 = arith.constant 0 : index
    %40 = vector.load %arg16[%c0_13, %c0_14] : memref<8x128xbf16, #tpu.memory_space<vmem>>, vector<8x128xbf16>
    %cst_15 = arith.constant dense<0.000000e+00> : vector<16x128xf32>
    %41 = tpu.matmul %39, %40, %cst_15 {dimension_numbers = #tpu.dot_dimension_numbers<[1], [0], [0], [1], [0, 0, 1, 1], [], []>} : vector<16x8xbf16>, vector<8x128xbf16>, vector<16x128xf32> -> vector<16x128xf32>
    %c0_16 = arith.constant 0 : index
    %c0_17 = arith.constant 0 : index
    %42 = vector.load %arg17[%c0_16, %c0_17] : memref<1x128xf32, #tpu.memory_space<vmem>>, vector<1x128xf32>
    %43 = vector.broadcast %42 : vector<1x128xf32> to vector<16x128xf32>
    %44 = arith.addf %41, %43 : vector<16x128xf32>
    %45 = vector.broadcast %3 : vector<16x1xf32> to vector<16x128xf32>
    %46 = arith.mulf %44, %45 : vector<16x128xf32>
    %cst_18 = arith.constant 0.000000e+00 : f32
    %47 = vector.broadcast %cst_18 : f32 to vector<16x128xf32>
    %c0_i32_19 = arith.constant 0 : i32
    %c4_i32_20 = arith.constant 4 : i32
    %48 = arith.addi %c0_i32_19, %c4_i32_20 : i32
    %c1_i32_21 = arith.constant 1 : i32
    %49:2 = scf.for %arg26 = %c0_i32_19 to %48 step %c1_i32_21 iter_args(%arg27 = %46, %arg28 = %47) -> (vector<16x128xf32>, vector<16x128xf32>)  : i32 {
      %78 = arith.index_cast %arg26 : i32 to index
      %c0_37 = arith.constant 0 : index
      %c0_38 = arith.constant 0 : index
      %79 = vector.load %arg18[%78, %c0_37, %c0_38] : memref<4x640x256xbf16, #tpu.memory_space<vmem>>, vector<1x640x256xbf16>
      %80 = vector.shape_cast %79 : vector<1x640x256xbf16> to vector<640x256xbf16>
      %81 = arith.index_cast %arg26 : i32 to index
      %c0_39 = arith.constant 0 : index
      %c0_40 = arith.constant 0 : index
      %82 = vector.load %arg19[%81, %c0_39, %c0_40] : memref<4x1x256xf32, #tpu.memory_space<vmem>>, vector<1x1x256xf32>
      %83 = vector.shape_cast %82 : vector<1x1x256xf32> to vector<1x256xf32>
      %cst_41 = arith.constant 0.000000e+00 : f32
      %84 = vector.broadcast %cst_41 : f32 to vector<2x128xf32>
      %85 = vector.extract_strided_slice %arg27 {offsets = [0, 0], sizes = [14, 128], strides = [1, 1]} : vector<16x128xf32> to vector<14x128xf32>
      %86 = tpu.concatenate %84, %85 in 0 : vector<2x128xf32>, vector<14x128xf32> -> vector<16x128xf32>
      %87 = arith.truncf %86 : vector<16x128xf32> to vector<16x128xbf16>
      %88 = vector.extract_strided_slice %80 {offsets = [0, 0], sizes = [128, 256], strides = [1, 1]} : vector<640x256xbf16> to vector<128x256xbf16>
      %cst_42 = arith.constant dense<0.000000e+00> : vector<16x256xf32>
      %89 = tpu.matmul %87, %88, %cst_42 {dimension_numbers = #tpu.dot_dimension_numbers<[1], [0], [0], [1], [0, 0, 1, 1], [], []>} : vector<16x128xbf16>, vector<128x256xbf16>, vector<16x256xf32> -> vector<16x256xf32>
      %cst_43 = arith.constant 0.000000e+00 : f32
      %90 = vector.broadcast %cst_43 : f32 to vector<1x128xf32>
      %91 = vector.extract_strided_slice %arg27 {offsets = [0, 0], sizes = [15, 128], strides = [1, 1]} : vector<16x128xf32> to vector<15x128xf32>
      %92 = tpu.concatenate %90, %91 in 0 : vector<1x128xf32>, vector<15x128xf32> -> vector<16x128xf32>
      %93 = arith.truncf %92 : vector<16x128xf32> to vector<16x128xbf16>
      %94 = vector.extract_strided_slice %80 {offsets = [128, 0], sizes = [128, 256], strides = [1, 1]} : vector<640x256xbf16> to vector<128x256xbf16>
      %cst_44 = arith.constant dense<0.000000e+00> : vector<16x256xf32>
      %95 = tpu.matmul %93, %94, %cst_44 {dimension_numbers = #tpu.dot_dimension_numbers<[1], [0], [0], [1], [0, 0, 1, 1], [], []>} : vector<16x128xbf16>, vector<128x256xbf16>, vector<16x256xf32> -> vector<16x256xf32>
      %96 = arith.addf %89, %95 : vector<16x256xf32>
      %97 = arith.truncf %arg27 : vector<16x128xf32> to vector<16x128xbf16>
      %98 = vector.extract_strided_slice %80 {offsets = [256, 0], sizes = [128, 256], strides = [1, 1]} : vector<640x256xbf16> to vector<128x256xbf16>
      %cst_45 = arith.constant dense<0.000000e+00> : vector<16x256xf32>
      %99 = tpu.matmul %97, %98, %cst_45 {dimension_numbers = #tpu.dot_dimension_numbers<[1], [0], [0], [1], [0, 0, 1, 1], [], []>} : vector<16x128xbf16>, vector<128x256xbf16>, vector<16x256xf32> -> vector<16x256xf32>
      %100 = arith.addf %96, %99 : vector<16x256xf32>
      %cst_46 = arith.constant 0.000000e+00 : f32
      %101 = vector.broadcast %cst_46 : f32 to vector<1x128xf32>
      %102 = vector.extract_strided_slice %arg27 {offsets = [1, 0], sizes = [15, 128], strides = [1, 1]} : vector<16x128xf32> to vector<15x128xf32>
      %103 = tpu.concatenate %102, %101 in 0 : vector<15x128xf32>, vector<1x128xf32> -> vector<16x128xf32>
      %104 = arith.truncf %103 : vector<16x128xf32> to vector<16x128xbf16>
      %105 = vector.extract_strided_slice %80 {offsets = [384, 0], sizes = [128, 256], strides = [1, 1]} : vector<640x256xbf16> to vector<128x256xbf16>
      %cst_47 = arith.constant dense<0.000000e+00> : vector<16x256xf32>
      %106 = tpu.matmul %104, %105, %cst_47 {dimension_numbers = #tpu.dot_dimension_numbers<[1], [0], [0], [1], [0, 0, 1, 1], [], []>} : vector<16x128xbf16>, vector<128x256xbf16>, vector<16x256xf32> -> vector<16x256xf32>
      %107 = arith.addf %100, %106 : vector<16x256xf32>
      %cst_48 = arith.constant 0.000000e+00 : f32
      %108 = vector.broadcast %cst_48 : f32 to vector<2x128xf32>
      %109 = vector.extract_strided_slice %arg27 {offsets = [2, 0], sizes = [14, 128], strides = [1, 1]} : vector<16x128xf32> to vector<14x128xf32>
      %110 = tpu.concatenate %109, %108 in 0 : vector<14x128xf32>, vector<2x128xf32> -> vector<16x128xf32>
      %111 = arith.truncf %110 : vector<16x128xf32> to vector<16x128xbf16>
      %112 = vector.extract_strided_slice %80 {offsets = [512, 0], sizes = [128, 256], strides = [1, 1]} : vector<640x256xbf16> to vector<128x256xbf16>
      %cst_49 = arith.constant dense<0.000000e+00> : vector<16x256xf32>
      %113 = tpu.matmul %111, %112, %cst_49 {dimension_numbers = #tpu.dot_dimension_numbers<[1], [0], [0], [1], [0, 0, 1, 1], [], []>} : vector<16x128xbf16>, vector<128x256xbf16>, vector<16x256xf32> -> vector<16x256xf32>
      %114 = arith.addf %107, %113 : vector<16x256xf32>
      %115 = vector.broadcast %83 : vector<1x256xf32> to vector<16x256xf32>
      %116 = arith.addf %114, %115 : vector<16x256xf32>
      %117 = vector.extract_strided_slice %116 {offsets = [0, 0], sizes = [16, 128], strides = [1, 1]} : vector<16x256xf32> to vector<16x128xf32>
      %118 = math.tanh %117 : vector<16x128xf32>
      %119 = vector.extract_strided_slice %116 {offsets = [0, 128], sizes = [16, 128], strides = [1, 1]} : vector<16x256xf32> to vector<16x128xf32>
      %120 = arith.negf %119 : vector<16x128xf32>
      %121 = math.exp %120 : vector<16x128xf32>
      %cst_50 = arith.constant 1.000000e+00 : f32
      %122 = vector.broadcast %cst_50 : f32 to vector<16x128xf32>
      %123 = arith.addf %122, %121 : vector<16x128xf32>
      %124 = arith.divf %122, %123 : vector<16x128xf32>
      %125 = arith.mulf %118, %124 : vector<16x128xf32>
      %126 = arith.truncf %125 : vector<16x128xf32> to vector<16x128xbf16>
      %127 = arith.index_cast %arg26 : i32 to index
      %c0_51 = arith.constant 0 : index
      %c0_52 = arith.constant 0 : index
      %128 = vector.load %arg20[%127, %c0_51, %c0_52] : memref<4x128x256xbf16, #tpu.memory_space<vmem>>, vector<1x128x256xbf16>
      %129 = vector.shape_cast %128 : vector<1x128x256xbf16> to vector<128x256xbf16>
      %cst_53 = arith.constant dense<0.000000e+00> : vector<16x256xf32>
      %130 = tpu.matmul %126, %129, %cst_53 {dimension_numbers = #tpu.dot_dimension_numbers<[1], [0], [0], [1], [0, 0, 1, 1], [], []>} : vector<16x128xbf16>, vector<128x256xbf16>, vector<16x256xf32> -> vector<16x256xf32>
      %131 = arith.index_cast %arg26 : i32 to index
      %c0_54 = arith.constant 0 : index
      %c0_55 = arith.constant 0 : index
      %132 = vector.load %arg21[%131, %c0_54, %c0_55] : memref<4x1x256xf32, #tpu.memory_space<vmem>>, vector<1x1x256xf32>
      %133 = vector.shape_cast %132 : vector<1x1x256xf32> to vector<1x256xf32>
      %134 = vector.broadcast %133 : vector<1x256xf32> to vector<16x256xf32>
      %135 = arith.addf %130, %134 : vector<16x256xf32>
      %136 = vector.extract_strided_slice %135 {offsets = [0, 0], sizes = [16, 128], strides = [1, 1]} : vector<16x256xf32> to vector<16x128xf32>
      %137 = arith.addf %arg27, %136 : vector<16x128xf32>
      %138 = vector.broadcast %3 : vector<16x1xf32> to vector<16x128xf32>
      %139 = arith.mulf %137, %138 : vector<16x128xf32>
      %140 = vector.extract_strided_slice %135 {offsets = [0, 128], sizes = [16, 128], strides = [1, 1]} : vector<16x256xf32> to vector<16x128xf32>
      %141 = arith.addf %arg28, %140 : vector<16x128xf32>
      scf.yield %139, %141 : vector<16x128xf32>, vector<16x128xf32>
    }
    %c4_i32_22 = arith.constant 4 : i32
    %50 = vector.broadcast %3 : vector<16x1xf32> to vector<16x128xf32>
    %51 = arith.mulf %49#1, %50 : vector<16x128xf32>
    %52 = arith.truncf %51 : vector<16x128xf32> to vector<16x128xbf16>
    %c0_23 = arith.constant 0 : index
    %c0_24 = arith.constant 0 : index
    %53 = vector.load %arg22[%c0_23, %c0_24] : memref<128x16xbf16, #tpu.memory_space<vmem>>, vector<128x16xbf16>
    %cst_25 = arith.constant dense<0.000000e+00> : vector<16x16xf32>
    %54 = tpu.matmul %52, %53, %cst_25 {dimension_numbers = #tpu.dot_dimension_numbers<[1], [0], [0], [1], [0, 0, 1, 1], [], []>} : vector<16x128xbf16>, vector<128x16xbf16>, vector<16x16xf32> -> vector<16x16xf32>
    %c0_26 = arith.constant 0 : index
    %c0_27 = arith.constant 0 : index
    %55 = vector.load %arg23[%c0_26, %c0_27] : memref<1x16xf32, #tpu.memory_space<vmem>>, vector<1x16xf32>
    %56 = vector.broadcast %55 : vector<1x16xf32> to vector<16x16xf32>
    %57 = arith.addf %54, %56 : vector<16x16xf32>
    %58 = vector.broadcast %3 : vector<16x1xf32> to vector<16x16xf32>
    %59 = arith.mulf %57, %58 : vector<16x16xf32>
    %60 = vector.extract_strided_slice %59 {offsets = [0, 0], sizes = [16, 8], strides = [1, 1]} : vector<16x16xf32> to vector<16x8xf32>
    %61 = vector.extract_strided_slice %59 {offsets = [0, 8], sizes = [16, 8], strides = [1, 1]} : vector<16x16xf32> to vector<16x8xf32>
    %62 = math.exp %61 : vector<16x8xf32>
    %63 = arith.mulf %7, %62 : vector<16x8xf32>
    %64 = vector.broadcast %3 : vector<16x1xf32> to vector<16x8xf32>
    %65 = arith.mulf %63, %64 : vector<16x8xf32>
    %66 = arith.addf %60, %65 : vector<16x8xf32>
    %c0_28 = arith.constant 0 : index
    %c0_29 = arith.constant 0 : index
    %c0_30 = arith.constant 0 : index
    %67 = vector.load %arg24[%c0_28, %c0_29, %c0_30] : memref<1x16x16xf32, #tpu.memory_space<vmem>>, vector<1x16x8xf32>
    %68 = vector.shape_cast %67 : vector<1x16x8xf32> to vector<16x8xf32>
    %69 = vector.shape_cast %6 : vector<16x8xf32> to vector<1x16x8xf32>
    tpu.vector_store %arg24[%c0_28, %c0_29, %c0_30], %69 {strides = array<i32>} : memref<1x16x16xf32, #tpu.memory_space<vmem>>, vector<1x16x8xf32>,
    %c0_31 = arith.constant 0 : index
    %c0_32 = arith.constant 0 : index
    %c8 = arith.constant 8 : index
    %70 = vector.load %arg24[%c0_31, %c0_32, %c8] : memref<1x16x16xf32, #tpu.memory_space<vmem>>, vector<1x16x8xf32>
    %71 = vector.shape_cast %70 : vector<1x16x8xf32> to vector<16x8xf32>
    %72 = vector.shape_cast %66 : vector<16x8xf32> to vector<1x16x8xf32>
    tpu.vector_store %arg24[%c0_31, %c0_32, %c8], %72 {strides = array<i32>} : memref<1x16x16xf32, #tpu.memory_space<vmem>>, vector<1x16x8xf32>,
    %cst_33 = arith.constant dense<0.000000e+00> : vector<8xf32>
    %73 = vector.multi_reduction <add>, %61, %cst_33 [0] : vector<16x8xf32> to vector<8xf32>
    %74 = vector.shape_cast %73 : vector<8xf32> to vector<1x8xf32>
    %c0_34 = arith.constant 0 : index
    %c0_35 = arith.constant 0 : index
    %c0_36 = arith.constant 0 : index
    %75 = vector.load %arg25[%c0_34, %c0_35, %c0_36] : memref<1x1x8xf32, #tpu.memory_space<vmem>>, vector<1x1x8xf32>
    %76 = vector.shape_cast %75 : vector<1x1x8xf32> to vector<1x8xf32>
    %77 = vector.shape_cast %74 : vector<1x8xf32> to vector<1x1x8xf32>
    tpu.vector_store %arg25[%c0_34, %c0_35, %c0_36], %77 {strides = array<i32>} : memref<1x1x8xf32, #tpu.memory_space<vmem>>, vector<1x1x8xf32>,
    return
  }
  func.func @transform_0(%arg0: i32) -> (i32, i32, i32) {
    %c0_i32 = arith.constant 0 : i32
    %c0_i32_0 = arith.constant 0 : i32
    %c0_i32_1 = arith.constant 0 : i32
    return %arg0, %c0_i32, %c0_i32_0 : i32, i32, i32
  }
  func.func @transform_1(%arg0: i32) -> (i32, i32, i32) {
    %c0_i32 = arith.constant 0 : i32
    %c0_i32_0 = arith.constant 0 : i32
    %c0_i32_1 = arith.constant 0 : i32
    return %arg0, %c0_i32, %c0_i32_0 : i32, i32, i32
  }
  func.func @transform_2(%arg0: i32) -> (i32, i32, i32) {
    %c0_i32 = arith.constant 0 : i32
    %c0_i32_0 = arith.constant 0 : i32
    %c0_i32_1 = arith.constant 0 : i32
    return %arg0, %c0_i32, %c0_i32_0 : i32, i32, i32
  }
  func.func @transform_3(%arg0: i32) -> (i32, i32, i32) {
    %c0_i32 = arith.constant 0 : i32
    %c0_i32_0 = arith.constant 0 : i32
    %c0_i32_1 = arith.constant 0 : i32
    %c0_i32_2 = arith.constant 0 : i32
    return %c0_i32, %c0_i32_0, %c0_i32_1 : i32, i32, i32
  }
  func.func @transform_4(%arg0: i32) -> (i32, i32, i32) {
    %c0_i32 = arith.constant 0 : i32
    %c0_i32_0 = arith.constant 0 : i32
    %c0_i32_1 = arith.constant 0 : i32
    %c0_i32_2 = arith.constant 0 : i32
    return %c0_i32, %c0_i32_0, %c0_i32_1 : i32, i32, i32
  }
  func.func @transform_5(%arg0: i32) -> (i32, i32, i32) {
    %c0_i32 = arith.constant 0 : i32
    %c0_i32_0 = arith.constant 0 : i32
    %c0_i32_1 = arith.constant 0 : i32
    %c0_i32_2 = arith.constant 0 : i32
    return %c0_i32, %c0_i32_0, %c0_i32_1 : i32, i32, i32
  }
  func.func @transform_6(%arg0: i32) -> (i32, i32, i32) {
    %c0_i32 = arith.constant 0 : i32
    %c0_i32_0 = arith.constant 0 : i32
    %c0_i32_1 = arith.constant 0 : i32
    %c0_i32_2 = arith.constant 0 : i32
    return %c0_i32, %c0_i32_0, %c0_i32_1 : i32, i32, i32
  }
  func.func @transform_7(%arg0: i32) -> (i32, i32, i32) {
    %c0_i32 = arith.constant 0 : i32
    %c0_i32_0 = arith.constant 0 : i32
    %c0_i32_1 = arith.constant 0 : i32
    %c0_i32_2 = arith.constant 0 : i32
    return %c0_i32, %c0_i32_0, %c0_i32_1 : i32, i32, i32
  }
  func.func @transform_8(%arg0: i32) -> (i32, i32, i32) {
    %c0_i32 = arith.constant 0 : i32
    %c0_i32_0 = arith.constant 0 : i32
    %c0_i32_1 = arith.constant 0 : i32
    %c0_i32_2 = arith.constant 0 : i32
    return %c0_i32, %c0_i32_0, %c0_i32_1 : i32, i32, i32
  }
  func.func @transform_9(%arg0: i32) -> (i32, i32, i32) {
    %c0_i32 = arith.constant 0 : i32
    %c0_i32_0 = arith.constant 0 : i32
    %c0_i32_1 = arith.constant 0 : i32
    %c0_i32_2 = arith.constant 0 : i32
    return %c0_i32, %c0_i32_0, %c0_i32_1 : i32, i32, i32
  }
  func.func @transform_10(%arg0: i32) -> (i32, i32, i32) {
    %c0_i32 = arith.constant 0 : i32
    %c0_i32_0 = arith.constant 0 : i32
    %c0_i32_1 = arith.constant 0 : i32
    %c0_i32_2 = arith.constant 0 : i32
    return %c0_i32, %c0_i32_0, %c0_i32_1 : i32, i32, i32
  }
  func.func @transform_11(%arg0: i32) -> (i32, i32, i32) {
    %c0_i32 = arith.constant 0 : i32
    %c0_i32_0 = arith.constant 0 : i32
    %c0_i32_1 = arith.constant 0 : i32
    %c0_i32_2 = arith.constant 0 : i32
    return %c0_i32, %c0_i32_0, %c0_i32_1 : i32, i32, i32
  }
  func.func @transform_12(%arg0: i32) -> (i32, i32, i32) {
    %c0_i32 = arith.constant 0 : i32
    %c0_i32_0 = arith.constant 0 : i32
    %c0_i32_1 = arith.constant 0 : i32
    %c0_i32_2 = arith.constant 0 : i32
    return %c0_i32, %c0_i32_0, %c0_i32_1 : i32, i32, i32
  }
  func.func @transform_13(%arg0: i32) -> (i32, i32, i32) {
    %c0_i32 = arith.constant 0 : i32
    %c0_i32_0 = arith.constant 0 : i32
    %c0_i32_1 = arith.constant 0 : i32
    %c0_i32_2 = arith.constant 0 : i32
    return %c0_i32, %c0_i32_0, %c0_i32_1 : i32, i32, i32
  }
  func.func @transform_14(%arg0: i32) -> (i32, i32, i32) {
    %c0_i32 = arith.constant 0 : i32
    %c0_i32_0 = arith.constant 0 : i32
    %c0_i32_1 = arith.constant 0 : i32
    %c0_i32_2 = arith.constant 0 : i32
    return %c0_i32, %c0_i32_0, %c0_i32_1 : i32, i32, i32
  }
  func.func @transform_15(%arg0: i32) -> (i32, i32) {
    %c0_i32 = arith.constant 0 : i32
    %c0_i32_0 = arith.constant 0 : i32
    %c0_i32_1 = arith.constant 0 : i32
    return %c0_i32, %c0_i32_0 : i32, i32
  }
  func.func @transform_16(%arg0: i32) -> (i32, i32) {
    %c0_i32 = arith.constant 0 : i32
    %c0_i32_0 = arith.constant 0 : i32
    %c0_i32_1 = arith.constant 0 : i32
    return %c0_i32, %c0_i32_0 : i32, i32
  }
  func.func @transform_17(%arg0: i32) -> (i32, i32, i32) {
    %c0_i32 = arith.constant 0 : i32
    %c0_i32_0 = arith.constant 0 : i32
    %c0_i32_1 = arith.constant 0 : i32
    %c0_i32_2 = arith.constant 0 : i32
    return %c0_i32, %c0_i32_0, %c0_i32_1 : i32, i32, i32
  }
  func.func @transform_18(%arg0: i32) -> (i32, i32, i32) {
    %c0_i32 = arith.constant 0 : i32
    %c0_i32_0 = arith.constant 0 : i32
    %c0_i32_1 = arith.constant 0 : i32
    %c0_i32_2 = arith.constant 0 : i32
    return %c0_i32, %c0_i32_0, %c0_i32_1 : i32, i32, i32
  }
  func.func @transform_19(%arg0: i32) -> (i32, i32, i32) {
    %c0_i32 = arith.constant 0 : i32
    %c0_i32_0 = arith.constant 0 : i32
    %c0_i32_1 = arith.constant 0 : i32
    %c0_i32_2 = arith.constant 0 : i32
    return %c0_i32, %c0_i32_0, %c0_i32_1 : i32, i32, i32
  }
  func.func @transform_20(%arg0: i32) -> (i32, i32, i32) {
    %c0_i32 = arith.constant 0 : i32
    %c0_i32_0 = arith.constant 0 : i32
    %c0_i32_1 = arith.constant 0 : i32
    %c0_i32_2 = arith.constant 0 : i32
    return %c0_i32, %c0_i32_0, %c0_i32_1 : i32, i32, i32
  }
  func.func @transform_21(%arg0: i32) -> (i32, i32) {
    %c0_i32 = arith.constant 0 : i32
    %c0_i32_0 = arith.constant 0 : i32
    %c0_i32_1 = arith.constant 0 : i32
    return %c0_i32, %c0_i32_0 : i32, i32
  }
  func.func @transform_22(%arg0: i32) -> (i32, i32) {
    %c0_i32 = arith.constant 0 : i32
    %c0_i32_0 = arith.constant 0 : i32
    %c0_i32_1 = arith.constant 0 : i32
    return %c0_i32, %c0_i32_0 : i32, i32
  }
  func.func @transform_23(%arg0: i32) -> (i32, i32, i32) {
    %c0_i32 = arith.constant 0 : i32
    %c0_i32_0 = arith.constant 0 : i32
    %c0_i32_1 = arith.constant 0 : i32
    return %arg0, %c0_i32, %c0_i32_0 : i32, i32, i32
  }
  func.func @transform_24(%arg0: i32) -> (i32, i32, i32) {
    %c0_i32 = arith.constant 0 : i32
    %c0_i32_0 = arith.constant 0 : i32
    %c0_i32_1 = arith.constant 0 : i32
    return %arg0, %c0_i32, %c0_i32_0 : i32, i32, i32
  }
}

</mosaic_0001>

<llo_original>
// kernel: tpu_custom_call.1
$region0: #{tpu_custom_call.1}
  #allocation0 [shape = 'u32[]', space=smem, size = 0x4, offset = 0x4, fixed_abs, tag = 'smem constant byte address 0x4 - core index']
  #allocation1 [shape = 'u32[144,128]{1,0:T(1,128)}', space=vmem, size = 0x12000, scoped, tag = 'internal scratch']
  %s0 = inlined_call_operand.hbm [shape: f32[8,128], index: 0, kind: input, shape index: {}]
  %s1 = inlined_call_operand.hbm [shape: f32[8,128], index: 1, kind: output, shape index: {}]
  %s2 = sld [smem:[#allocation0]]
  $region18: #{tpu_custom_call.1} parent=0
    _
  %s4 = ssub.s32 1, %s2
  %s5 = scalar_select 0, %s4, %s2
  $region1: #{tpu_custom_call.1} parent=0
    #allocation2 [shape = 'u8[4096]{0}', space=vmem, size = 0x1000, scoped, tag = 'input window, operand 0, single buffered']
    #allocation3 [shape = 's32[1]{0}', space=sflag, size = 0x4, scoped, tag = 'scoped memory for tpu_custom_call.1']
    #allocation4 [shape = 's32[1]{0}', space=sflag, size = 0x4, scoped, tag = 'scoped memory for tpu_custom_call.1']
    #allocation5 [shape = 'u8[4096]{0}', space=vmem, size = 0x1000, scoped, tag = 'output window, operand 0, single buffered']
    %6 = vsyncpa [#allocation3], 0
    %7 = vsyncpa [#allocation4], 0
    // Predicated region
    $region2: #{tpu_custom_call.1} parent=1 // pred_check
      _
    $region3: #{tpu_custom_call.1} parent=1 // pred_check_branch
      %9 = sbr.rel (0) target = $region5
    $region4: #{tpu_custom_call.1} parent=1 // pred_region
      %s11 = ssub.s32 128, 128
      %12 = vsyncadd [#allocation3], %s11
      %s14 = sshll.u32 [#allocation2], 4
      %s15 = int_to_ptr.vmem [resolvable:$true] %s14
      %17 = dma.hbm_to_vmem [thread:$0]  %s0, 128, %s15, [#allocation3]
    $region5: #{tpu_custom_call.1} parent=1 // pred_fallthru
      _
    // Predicated region
    $region6: #{tpu_custom_call.1} parent=1 // pred_check
      _
    $region7: #{tpu_custom_call.1} parent=1 // pred_check_branch
      %19 = sbr.rel (0) target = $region9
    $region8: #{tpu_custom_call.1} parent=1 // pred_region
      %20 = dma.done [#allocation3], 128
    $region9: #{tpu_custom_call.1} parent=1 // pred_fallthru
      _
    %v21 = vld [vmem:[#allocation2] sm:$0xff]
    %v22 = vrot.slane %v21, 7
    %23 = vst [vmem:[#allocation5] sm:$0xff] %v22
    // Predicated region
    $region10: #{tpu_custom_call.1} parent=1 // pred_check
      _
    $region11: #{tpu_custom_call.1} parent=1 // pred_check_branch
      %25 = sbr.rel (0) target = $region13
    $region12: #{tpu_custom_call.1} parent=1 // pred_region
      %s27 = ssub.s32 128, 128
      %28 = vsyncadd [#allocation4], %s27
      %s30 = sshll.u32 [#allocation5], 4
      %s31 = int_to_ptr.vmem [resolvable:$true] %s30
      %33 = dma.vmem_to_hbm [thread:$0]  %s31, 128, %s1, [#allocation4]
    $region13: #{tpu_custom_call.1} parent=1 // pred_fallthru
      _
    // Predicated region
    $region14: #{tpu_custom_call.1} parent=1 // pred_check
      _
    $region15: #{tpu_custom_call.1} parent=1 // pred_check_branch
      %35 = sbr.rel (0) target = $region17
    $region16: #{tpu_custom_call.1} parent=1 // pred_region
      %36 = dma.done [#allocation4], 128
    $region17: #{tpu_custom_call.1} parent=1 // pred_fallthru
      _
    %37 = vsyncpa [#allocation3], 1
    %38 = vsyncpa [#allocation4], 1

// kernel: tpu_custom_call.1
$region0: #{tpu_custom_call.1}
  #allocation0 [shape = 'u32[]', space=smem, size = 0x4, offset = 0x4, fixed_abs, tag = 'smem constant byte address 0x4 - core index']
  #allocation1 [shape = 'u32[144,128]{1,0:T(1,128)}', space=vmem, size = 0x12000, scoped, tag = 'internal scratch']
  %s0 = inlined_call_operand.hbm [shape: f32[2,16,16], index: 0, kind: input, shape index: {}, may-alias: {0,23}]
  %s1 = inlined_call_operand.hbm [shape: f32[2,16,1], index: 1, kind: input, shape index: {}]
  %s2 = inlined_call_operand.hbm [shape: f32[2,1,16], index: 2, kind: input, shape index: {}]
  %s3 = inlined_call_operand.hbm [shape: bf16[2,8,24], index: 3, kind: input, shape index: {}]
  %s4 = inlined_call_operand.hbm [shape: f32[2,1,24], index: 4, kind: input, shape index: {}]
  %s5 = inlined_call_operand.hbm [shape: bf16[2,8,8], index: 5, kind: input, shape index: {}]
  %s6 = inlined_call_operand.hbm [shape: f32[2,1,8], index: 6, kind: input, shape index: {}]
  %s7 = inlined_call_operand.hbm [shape: f32[2,1,8], index: 7, kind: input, shape index: {}]
  %s8 = inlined_call_operand.hbm [shape: f32[2,1,8], index: 8, kind: input, shape index: {}]
  %s9 = inlined_call_operand.hbm [shape: bf16[2,24,8], index: 9, kind: input, shape index: {}]
  %s10 = inlined_call_operand.hbm [shape: f32[2,1,8], index: 10, kind: input, shape index: {}]
  %s11 = inlined_call_operand.hbm [shape: bf16[2,24,8], index: 11, kind: input, shape index: {}]
  %s12 = inlined_call_operand.hbm [shape: f32[2,1,8], index: 12, kind: input, shape index: {}]
  %s13 = inlined_call_operand.hbm [shape: f32[2,1,8], index: 13, kind: input, shape index: {}]
  %s14 = inlined_call_operand.hbm [shape: f32[2,1,8], index: 14, kind: input, shape index: {}]
  %s15 = inlined_call_operand.hbm [shape: bf16[8,128], index: 15, kind: input, shape index: {}]
  %s16 = inlined_call_operand.hbm [shape: f32[1,128], index: 16, kind: input, shape index: {}]
  %s17 = inlined_call_operand.hbm [shape: bf16[4,640,256], index: 17, kind: input, shape index: {}]
  %s18 = inlined_call_operand.hbm [shape: f32[4,1,256], index: 18, kind: input, shape index: {}]
  %s19 = inlined_call_operand.hbm [shape: bf16[4,128,256], index: 19, kind: input, shape index: {}]
  %s20 = inlined_call_operand.hbm [shape: f32[4,1,256], index: 20, kind: input, shape index: {}]
  %s21 = inlined_call_operand.hbm [shape: bf16[128,16], index: 21, kind: input, shape index: {}]
  %s22 = inlined_call_operand.hbm [shape: f32[1,16], index: 22, kind: input, shape index: {}]
  %s23 = inlined_call_operand.hbm [shape: f32[2,16,16], index: 23, kind: output, shape index: {0}, may-alias: {0,23}]
  %s24 = inlined_call_operand.hbm [shape: f32[2,1,8], index: 24, kind: output, shape index: {1}]
  %25 = xla_tuple %s23, %s24
  %s26 = sld [smem:[#allocation0]]
  $region239: #{tpu_custom_call.1} parent=0
    _
  %s28 = ssub.s32 1, %s26
  %s29 = scalar_select 0, %s28, %s26
  $region1: #{tpu_custom_call.1} parent=0
    #allocation2 [shape = 'u8[16384]{0}', space=vmem, size = 0x4000, scoped, tag = 'input window, operand 0']
    #allocation3 [shape = 's32[2]{0}', space=sflag, size = 0x8, scoped, tag = 'scoped memory for tpu_custom_call.1']
    #allocation4 [shape = 's32[2]{0}', space=sflag, size = 0x8, scoped, tag = 'scoped memory for tpu_custom_call.1']
    #allocation5 [shape = 'u8[16384]{0}', space=vmem, size = 0x4000, scoped, tag = 'input window, operand 1']
    #allocation6 [shape = 's32[2]{0}', space=sflag, size = 0x8, scoped, tag = 'scoped memory for tpu_custom_call.1']
    #allocation7 [shape = 'u8[1024]{0}', space=vmem, size = 0x400, scoped, tag = 'input window, operand 2']
    #allocation8 [shape = 'u8[4096]{0}', space=vmem, size = 0x1000, scoped, tag = 'input window, operand 3, single buffered']
    #allocation9 [shape = 's32[1]{0}', space=sflag, size = 0x4, scoped, tag = 'scoped memory for tpu_custom_call.1']
    #allocation10 [shape = 'u8[1024]{0}', space=vmem, size = 0x400, scoped, tag = 'input window, operand 4, single buffered']
    #allocation11 [shape = 'u8[4096]{0}', space=vmem, size = 0x1000, scoped, tag = 'input window, operand 5, single buffered']
    #allocation12 [shape = 's32[1]{0}', space=sflag, size = 0x4, scoped, tag = 'scoped memory for tpu_custom_call.1']
    #allocation13 [shape = 'u8[1024]{0}', space=vmem, size = 0x400, scoped, tag = 'input window, operand 6, single buffered']
    #allocation14 [shape = 'u8[1024]{0}', space=vmem, size = 0x400, scoped, tag = 'input window, operand 7, single buffered']
    #allocation15 [shape = 's32[1]{0}', space=sflag, size = 0x4, scoped, tag = 'scoped memory for tpu_custom_call.1']
    #allocation16 [shape = 'u8[1024]{0}', space=vmem, size = 0x400, scoped, tag = 'input window, operand 8, single buffered']
    #allocation17 [shape = 'u8[12288]{0}', space=vmem, size = 0x3000, scoped, tag = 'input window, operand 9, single buffered']
    #allocation18 [shape = 's32[1]{0}', space=sflag, size = 0x4, scoped, tag = 'scoped memory for tpu_custom_call.1']
    #allocation19 [shape = 'u8[1024]{0}', space=vmem, size = 0x400, scoped, tag = 'input window, operand 10, single buffered']
    #allocation20 [shape = 'u8[12288]{0}', space=vmem, size = 0x3000, scoped, tag = 'input window, operand 11, single buffered']
    #allocation21 [shape = 's32[1]{0}', space=sflag, size = 0x4, scoped, tag = 'scoped memory for tpu_custom_call.1']
    #allocation22 [shape = 'u8[1024]{0}', space=vmem, size = 0x400, scoped, tag = 'input window, operand 12, single buffered']
    #allocation23 [shape = 'u8[1024]{0}', space=vmem, size = 0x400, scoped, tag = 'input window, operand 13, single buffered']
    #allocation24 [shape = 's32[1]{0}', space=sflag, size = 0x4, scoped, tag = 'scoped memory for tpu_custom_call.1']
    #allocation25 [shape = 'u8[1024]{0}', space=vmem, size = 0x400, scoped, tag = 'input window, operand 14, single buffered']
    #allocation26 [shape = 'u8[2048]{0}', space=vmem, size = 0x800, scoped, tag = 'input window, operand 15, single buffered']
    #allocation27 [shape = 's32[1]{0}', space=sflag, size = 0x4, scoped, tag = 'scoped memory for tpu_custom_call.1']
    #allocation28 [shape = 'u8[512]{0}', space=vmem, size = 0x400, scoped, tag = 'input window, operand 16, single buffered']
    #allocation29 [shape = 'u8[1310720]{0}', space=vmem, size = 0x140000, scoped, tag = 'input window, operand 17, single buffered']
    #allocation30 [shape = 's32[1]{0}', space=sflag, size = 0x4, scoped, tag = 'scoped memory for tpu_custom_call.1']
    #allocation31 [shape = 'u8[4096]{0}', space=vmem, size = 0x1000, scoped, tag = 'input window, operand 18, single buffered']
    #allocation32 [shape = 'u8[262144]{0}', space=vmem, size = 0x40000, scoped, tag = 'input window, operand 19, single buffered']
    #allocation33 [shape = 's32[1]{0}', space=sflag, size = 0x4, scoped, tag = 'scoped memory for tpu_custom_call.1']
    #allocation34 [shape = 'u8[4096]{0}', space=vmem, size = 0x1000, scoped, tag = 'input window, operand 20, single buffered']
    #allocation35 [shape = 'u8[32768]{0}', space=vmem, size = 0x8000, scoped, tag = 'input window, operand 21, single buffered']
    #allocation36 [shape = 's32[1]{0}', space=sflag, size = 0x4, scoped, tag = 'scoped memory for tpu_custom_call.1']
    #allocation37 [shape = 'u8[512]{0}', space=vmem, size = 0x400, scoped, tag = 'input window, operand 22, single buffered']
    #allocation38 [shape = 'u8[16384]{0}', space=vmem, size = 0x4000, scoped, tag = 'output window, operand 0']
    #allocation39 [shape = 'u8[1024]{0}', space=vmem, size = 0x400, scoped, tag = 'output window, operand 1']
    #allocation40 [shape = 's32[2]{0}', space=sflag, size = 0x8, scoped, tag = 'scoped memory for tpu_custom_call.1']
    %30 = vsyncpa [#allocation3], 0
    %s31 = scalar_lea.sflag [#allocation3], 1
    %32 = vsyncpa %s31, 0
    %33 = vsyncpa [#allocation6], 0
    %s34 = scalar_lea.sflag [#allocation6], 1
    %35 = vsyncpa %s34, 0
    %36 = vsyncpa [#allocation9], 0
    %37 = vsyncpa [#allocation12], 0
    %38 = vsyncpa [#allocation15], 0
    %39 = vsyncpa [#allocation18], 0
    %40 = vsyncpa [#allocation21], 0
    %41 = vsyncpa [#allocation24], 0
    %42 = vsyncpa [#allocation27], 0
    %43 = vsyncpa [#allocation30], 0
    %44 = vsyncpa [#allocation33], 0
    %45 = vsyncpa [#allocation36], 0
    %46 = vsyncpa [#allocation4], 0
    %s47 = scalar_lea.sflag [#allocation4], 1
    %48 = vsyncpa %s47, 0
    %49 = vsyncpa [#allocation40], 0
    %s50 = scalar_lea.sflag [#allocation40], 1
    %51 = vsyncpa %s50, 0
    loop: start=0, step=1, limit=4
    $region2: #{tpu_custom_call.1} parent=1 // loop_pre_header
      _
    $region3: #{tpu_custom_call.1} parent=1 // loop_header
      %s53 = sphi 0, %s57
      %p54 = scmp.ge.s32.totalorder %s53, 4
      %s63 = sphi 0, %s65
      %s66 = sphi 0, %s63
      %s67 = sphi 0, %s66
      %s83 = sphi 0, %s67
      %s89 = sphi 0, %s91
      %s92 = sphi 0, %s89
      %s93 = sphi 0, %s92
      %s109 = sphi 0, %s93
      %s115 = sphi 0, %s117
      %s118 = sphi 0, %s115
      %s119 = sphi 0, %s118
      %s135 = sphi 0, %s119
      %s139 = sphi 0, %s139
      %s141 = sphi 0, %s139
      %s142 = sphi 0, %s141
      %s156 = sphi 0, %s142
      %s160 = sphi 0, %s160
      %s162 = sphi 0, %s160
      %s163 = sphi 0, %s162
      %s177 = sphi 0, %s163
      %s181 = sphi 0, %s181
      %s183 = sphi 0, %s181
      %s184 = sphi 0, %s183
      %s198 = sphi 0, %s184
      %s202 = sphi 0, %s202
      %s204 = sphi 0, %s202
      %s205 = sphi 0, %s204
      %s219 = sphi 0, %s205
      %s223 = sphi 0, %s223
      %s225 = sphi 0, %s223
      %s226 = sphi 0, %s225
      %s240 = sphi 0, %s226
      %s244 = sphi 0, %s244
      %s246 = sphi 0, %s244
      %s247 = sphi 0, %s246
      %s261 = sphi 0, %s247
      %s265 = sphi 0, %s265
      %s267 = sphi 0, %s265
      %s268 = sphi 0, %s267
      %s282 = sphi 0, %s268
      %s286 = sphi 0, %s286
      %s288 = sphi 0, %s286
      %s289 = sphi 0, %s288
      %s303 = sphi 0, %s289
      %s307 = sphi 0, %s307
      %s309 = sphi 0, %s307
      %s310 = sphi 0, %s309
      %s324 = sphi 0, %s310
      %s328 = sphi 0, %s328
      %s330 = sphi 0, %s328
      %s331 = sphi 0, %s330
      %s345 = sphi 0, %s331
      %s349 = sphi 0, %s349
      %s351 = sphi 0, %s349
      %s352 = sphi 0, %s351
      %s366 = sphi 0, %s352
      %s370 = sphi 0, %s370
      %s372 = sphi 0, %s370
      %s373 = sphi 0, %s372
      %s387 = sphi 0, %s373
      %s391 = sphi 0, %s391
      %s393 = sphi 0, %s391
      %s394 = sphi 0, %s393
      %s408 = sphi 0, %s394
      %s412 = sphi 0, %s412
      %s414 = sphi 0, %s412
      %s415 = sphi 0, %s414
      %s429 = sphi 0, %s415
      %s433 = sphi 0, %s433
      %s435 = sphi 0, %s433
      %s436 = sphi 0, %s435
      %s450 = sphi 0, %s436
      %s454 = sphi 0, %s454
      %s456 = sphi 0, %s454
      %s457 = sphi 0, %s456
      %s471 = sphi 0, %s457
      %s475 = sphi 0, %s475
      %s477 = sphi 0, %s475
      %s478 = sphi 0, %s477
      %s492 = sphi 0, %s478
      %s496 = sphi 0, %s496
      %s498 = sphi 0, %s496
      %s499 = sphi 0, %s498
      %s513 = sphi 0, %s499
      %s517 = sphi 0, %s517
      %s519 = sphi 0, %s517
      %s520 = sphi 0, %s519
      %s534 = sphi 0, %s520
      %s538 = sphi 0, %s538
      %s540 = sphi 0, %s538
      %s541 = sphi 0, %s540
      %s555 = sphi 0, %s541
      %s561 = sphi 0, %s563
      %s564 = sphi 0, %s561
      %s565 = sphi 0, %s564
      %s581 = sphi 0, %s565
      %s587 = sphi 0, %s589
      %s590 = sphi 0, %s587
      %s591 = sphi 0, %s590
      %s607 = sphi 0, %s591
    $region4: #{tpu_custom_call.1} parent=1 // loop_header_branch
      %56 = sbr.rel (%p54) target = $region8
    $region5: #{tpu_custom_call.1} parent=1 // loop_body
      %s58 = ssub.s32 %s53, 1
      %s59 = ssub.s32 %s53, 2
      %s60 = sadd.s32 %s53, 1
      %s61 = ssub.s32 %s53, %s60
      %p62 = scmp.eq.s32.totalorder %s61, 0
      %s64 = sadd.s32 %s63, 1
      %s65 = scalar_select %p62, %s63, %s64
      %p68 = pneg %p62
      %p69 = scmp.eq.s32.totalorder %s53, 1
      %p70 = por %p68, %p69
      %p71 = scmp.ne.s32.totalorder %s63, %s66
      %p72 = scmp.eq.s32.totalorder %s53, 0
      %p73 = por %p71, %p72
      %p74 = scmp.ne.s32.totalorder %s63, %s66
      %p75 = scmp.eq.s32.totalorder %s58, 1
      %p76 = por %p74, %p75
      %p77 = scmp.ne.s32.totalorder %s66, %s67
      %p78 = scmp.eq.s32.totalorder %s58, 0
      %p79 = por %p77, %p78
      %p80 = scmp.ne.s32.totalorder %s66, %s67
      %p81 = scmp.eq.s32.totalorder %s59, 1
      %p82 = por %p80, %p81
      %p84 = scmp.ne.s32.totalorder %s67, %s83
      %p85 = scmp.eq.s32.totalorder %s59, 0
      %p86 = por %p84, %p85
      %s87 = ssub.s32 %s53, %s60
      %p88 = scmp.eq.s32.totalorder %s87, 0
      %s90 = sadd.s32 %s89, 1
      %s91 = scalar_select %p88, %s89, %s90
      %p94 = pneg %p88
      %p95 = scmp.eq.s32.totalorder %s53, 1
      %p96 = por %p94, %p95
      %p97 = scmp.ne.s32.totalorder %s89, %s92
      %p98 = scmp.eq.s32.totalorder %s53, 0
      %p99 = por %p97, %p98
      %p100 = scmp.ne.s32.totalorder %s89, %s92
      %p101 = scmp.eq.s32.totalorder %s58, 1
      %p102 = por %p100, %p101
      %p103 = scmp.ne.s32.totalorder %s92, %s93
      %p104 = scmp.eq.s32.totalorder %s58, 0
      %p105 = por %p103, %p104
      %p106 = scmp.ne.s32.totalorder %s92, %s93
      %p107 = scmp.eq.s32.totalorder %s59, 1
      %p108 = por %p106, %p107
      %p110 = scmp.ne.s32.totalorder %s93, %s109
      %p111 = scmp.eq.s32.totalorder %s59, 0
      %p112 = por %p110, %p111
      %s113 = ssub.s32 %s53, %s60
      %p114 = scmp.eq.s32.totalorder %s113, 0
      %s116 = sadd.s32 %s115, 1
      %s117 = scalar_select %p114, %s115, %s116
      %p120 = pneg %p114
      %p121 = scmp.eq.s32.totalorder %s53, 1
      %p122 = por %p120, %p121
      %p123 = scmp.ne.s32.totalorder %s115, %s118
      %p124 = scmp.eq.s32.totalorder %s53, 0
      %p125 = por %p123, %p124
      %p126 = scmp.ne.s32.totalorder %s115, %s118
      %p127 = scmp.eq.s32.totalorder %s58, 1
      %p128 = por %p126, %p127
      %p129 = scmp.ne.s32.totalorder %s118, %s119
      %p130 = scmp.eq.s32.totalorder %s58, 0
      %p131 = por %p129, %p130
      %p132 = scmp.ne.s32.totalorder %s118, %s119
      %p133 = scmp.eq.s32.totalorder %s59, 1
      %p134 = por %p132, %p133
      %p136 = scmp.ne.s32.totalorder %s119, %s135
      %p137 = scmp.eq.s32.totalorder %s59, 0
      %p138 = por %p136, %p137
      %s140 = sadd.s32 %s139, 1
      %p143 = scmp.eq.s32.totalorder %s53, 1
      %p144 = scmp.ne.s32.totalorder %s139, %s141
      %p145 = scmp.eq.s32.totalorder %s53, 0
      %p146 = por %p144, %p145
      %p147 = scmp.ne.s32.totalorder %s139, %s141
      %p148 = scmp.eq.s32.totalorder %s58, 1
      %p149 = por %p147, %p148
      %p150 = scmp.ne.s32.totalorder %s141, %s142
      %p151 = scmp.eq.s32.totalorder %s58, 0
      %p152 = por %p150, %p151
      %p153 = scmp.ne.s32.totalorder %s141, %s142
      %p154 = scmp.eq.s32.totalorder %s59, 1
      %p155 = por %p153, %p154
      %p157 = scmp.ne.s32.totalorder %s142, %s156
      %p158 = scmp.eq.s32.totalorder %s59, 0
      %p159 = por %p157, %p158
      %s161 = sadd.s32 %s160, 1
      %p164 = scmp.eq.s32.totalorder %s53, 1
      %p165 = scmp.ne.s32.totalorder %s160, %s162
      %p166 = scmp.eq.s32.totalorder %s53, 0
      %p167 = por %p165, %p166
      %p168 = scmp.ne.s32.totalorder %s160, %s162
      %p169 = scmp.eq.s32.totalorder %s58, 1
      %p170 = por %p168, %p169
      %p171 = scmp.ne.s32.totalorder %s162, %s163
      %p172 = scmp.eq.s32.totalorder %s58, 0
      %p173 = por %p171, %p172
      %p174 = scmp.ne.s32.totalorder %s162, %s163
      %p175 = scmp.eq.s32.totalorder %s59, 1
      %p176 = por %p174, %p175
      %p178 = scmp.ne.s32.totalorder %s163, %s177
      %p179 = scmp.eq.s32.totalorder %s59, 0
      %p180 = por %p178, %p179
      %s182 = sadd.s32 %s181, 1
      %p185 = scmp.eq.s32.totalorder %s53, 1
      %p186 = scmp.ne.s32.totalorder %s181, %s183
      %p187 = scmp.eq.s32.totalorder %s53, 0
      %p188 = por %p186, %p187
      %p189 = scmp.ne.s32.totalorder %s181, %s183
      %p190 = scmp.eq.s32.totalorder %s58, 1
      %p191 = por %p189, %p190
      %p192 = scmp.ne.s32.totalorder %s183, %s184
      %p193 = scmp.eq.s32.totalorder %s58, 0
      %p194 = por %p192, %p193
      %p195 = scmp.ne.s32.totalorder %s183, %s184
      %p196 = scmp.eq.s32.totalorder %s59, 1
      %p197 = por %p195, %p196
      %p199 = scmp.ne.s32.totalorder %s184, %s198
      %p200 = scmp.eq.s32.totalorder %s59, 0
      %p201 = por %p199, %p200
      %s203 = sadd.s32 %s202, 1
      %p206 = scmp.eq.s32.totalorder %s53, 1
      %p207 = scmp.ne.s32.totalorder %s202, %s204
      %p208 = scmp.eq.s32.totalorder %s53, 0
      %p209 = por %p207, %p208
      %p210 = scmp.ne.s32.totalorder %s202, %s204
      %p211 = scmp.eq.s32.totalorder %s58, 1
      %p212 = por %p210, %p211
      %p213 = scmp.ne.s32.totalorder %s204, %s205
      %p214 = scmp.eq.s32.totalorder %s58, 0
      %p215 = por %p213, %p214
      %p216 = scmp.ne.s32.totalorder %s204, %s205
      %p217 = scmp.eq.s32.totalorder %s59, 1
      %p218 = por %p216, %p217
      %p220 = scmp.ne.s32.totalorder %s205, %s219
      %p221 = scmp.eq.s32.totalorder %s59, 0
      %p222 = por %p220, %p221
      %s224 = sadd.s32 %s223, 1
      %p227 = scmp.eq.s32.totalorder %s53, 1
      %p228 = scmp.ne.s32.totalorder %s223, %s225
      %p229 = scmp.eq.s32.totalorder %s53, 0
      %p230 = por %p228, %p229
      %p231 = scmp.ne.s32.totalorder %s223, %s225
      %p232 = scmp.eq.s32.totalorder %s58, 1
      %p233 = por %p231, %p232
      %p234 = scmp.ne.s32.totalorder %s225, %s226
      %p235 = scmp.eq.s32.totalorder %s58, 0
      %p236 = por %p234, %p235
      %p237 = scmp.ne.s32.totalorder %s225, %s226
      %p238 = scmp.eq.s32.totalorder %s59, 1
      %p239 = por %p237, %p238
      %p241 = scmp.ne.s32.totalorder %s226, %s240
      %p242 = scmp.eq.s32.totalorder %s59, 0
      %p243 = por %p241, %p242
      %s245 = sadd.s32 %s244, 1
      %p248 = scmp.eq.s32.totalorder %s53, 1
      %p249 = scmp.ne.s32.totalorder %s244, %s246
      %p250 = scmp.eq.s32.totalorder %s53, 0
      %p251 = por %p249, %p250
      %p252 = scmp.ne.s32.totalorder %s244, %s246
      %p253 = scmp.eq.s32.totalorder %s58, 1
      %p254 = por %p252, %p253
      %p255 = scmp.ne.s32.totalorder %s246, %s247
      %p256 = scmp.eq.s32.totalorder %s58, 0
      %p257 = por %p255, %p256
      %p258 = scmp.ne.s32.totalorder %s246, %s247
      %p259 = scmp.eq.s32.totalorder %s59, 1
      %p260 = por %p258, %p259
      %p262 = scmp.ne.s32.totalorder %s247, %s261
      %p263 = scmp.eq.s32.totalorder %s59, 0
      %p264 = por %p262, %p263
      %s266 = sadd.s32 %s265, 1
      %p269 = scmp.eq.s32.totalorder %s53, 1
      %p270 = scmp.ne.s32.totalorder %s265, %s267
      %p271 = scmp.eq.s32.totalorder %s53, 0
      %p272 = por %p270, %p271
      %p273 = scmp.ne.s32.totalorder %s265, %s267
      %p274 = scmp.eq.s32.totalorder %s58, 1
      %p275 = por %p273, %p274
      %p276 = scmp.ne.s32.totalorder %s267, %s268
      %p277 = scmp.eq.s32.totalorder %s58, 0
      %p278 = por %p276, %p277
      %p279 = scmp.ne.s32.totalorder %s267, %s268
      %p280 = scmp.eq.s32.totalorder %s59, 1
      %p281 = por %p279, %p280
      %p283 = scmp.ne.s32.totalorder %s268, %s282
      %p284 = scmp.eq.s32.totalorder %s59, 0
      %p285 = por %p283, %p284
      %s287 = sadd.s32 %s286, 1
      %p290 = scmp.eq.s32.totalorder %s53, 1
      %p291 = scmp.ne.s32.totalorder %s286, %s288
      %p292 = scmp.eq.s32.totalorder %s53, 0
      %p293 = por %p291, %p292
      %p294 = scmp.ne.s32.totalorder %s286, %s288
      %p295 = scmp.eq.s32.totalorder %s58, 1
      %p296 = por %p294, %p295
      %p297 = scmp.ne.s32.totalorder %s288, %s289
      %p298 = scmp.eq.s32.totalorder %s58, 0
      %p299 = por %p297, %p298
      %p300 = scmp.ne.s32.totalorder %s288, %s289
      %p301 = scmp.eq.s32.totalorder %s59, 1
      %p302 = por %p300, %p301
      %p304 = scmp.ne.s32.totalorder %s289, %s303
      %p305 = scmp.eq.s32.totalorder %s59, 0
      %p306 = por %p304, %p305
      %s308 = sadd.s32 %s307, 1
      %p311 = scmp.eq.s32.totalorder %s53, 1
      %p312 = scmp.ne.s32.totalorder %s307, %s309
      %p313 = scmp.eq.s32.totalorder %s53, 0
      %p314 = por %p312, %p313
      %p315 = scmp.ne.s32.totalorder %s307, %s309
      %p316 = scmp.eq.s32.totalorder %s58, 1
      %p317 = por %p315, %p316
      %p318 = scmp.ne.s32.totalorder %s309, %s310
      %p319 = scmp.eq.s32.totalorder %s58, 0
      %p320 = por %p318, %p319
      %p321 = scmp.ne.s32.totalorder %s309, %s310
      %p322 = scmp.eq.s32.totalorder %s59, 1
      %p323 = por %p321, %p322
      %p325 = scmp.ne.s32.totalorder %s310, %s324
      %p326 = scmp.eq.s32.totalorder %s59, 0
      %p327 = por %p325, %p326
      %s329 = sadd.s32 %s328, 1
      %p332 = scmp.eq.s32.totalorder %s53, 1
      %p333 = scmp.ne.s32.totalorder %s328, %s330
      %p334 = scmp.eq.s32.totalorder %s53, 0
      %p335 = por %p333, %p334
      %p336 = scmp.ne.s32.totalorder %s328, %s330
      %p337 = scmp.eq.s32.totalorder %s58, 1
      %p338 = por %p336, %p337
      %p339 = scmp.ne.s32.totalorder %s330, %s331
      %p340 = scmp.eq.s32.totalorder %s58, 0
      %p341 = por %p339, %p340
      %p342 = scmp.ne.s32.totalorder %s330, %s331
      %p343 = scmp.eq.s32.totalorder %s59, 1
      %p344 = por %p342, %p343
      %p346 = scmp.ne.s32.totalorder %s331, %s345
      %p347 = scmp.eq.s32.totalorder %s59, 0
      %p348 = por %p346, %p347
      %s350 = sadd.s32 %s349, 1
      %p353 = scmp.eq.s32.totalorder %s53, 1
      %p354 = scmp.ne.s32.totalorder %s349, %s351
      %p355 = scmp.eq.s32.totalorder %s53, 0
      %p356 = por %p354, %p355
      %p357 = scmp.ne.s32.totalorder %s349, %s351
      %p358 = scmp.eq.s32.totalorder %s58, 1
      %p359 = por %p357, %p358
      %p360 = scmp.ne.s32.totalorder %s351, %s352
      %p361 = scmp.eq.s32.totalorder %s58, 0
      %p362 = por %p360, %p361
      %p363 = scmp.ne.s32.totalorder %s351, %s352
      %p364 = scmp.eq.s32.totalorder %s59, 1
      %p365 = por %p363, %p364
      %p367 = scmp.ne.s32.totalorder %s352, %s366
      %p368 = scmp.eq.s32.totalorder %s59, 0
      %p369 = por %p367, %p368
      %s371 = sadd.s32 %s370, 1
      %p374 = scmp.eq.s32.totalorder %s53, 1
      %p375 = scmp.ne.s32.totalorder %s370, %s372
      %p376 = scmp.eq.s32.totalorder %s53, 0
      %p377 = por %p375, %p376
      %p378 = scmp.ne.s32.totalorder %s370, %s372
      %p379 = scmp.eq.s32.totalorder %s58, 1
      %p380 = por %p378, %p379
      %p381 = scmp.ne.s32.totalorder %s372, %s373
      %p382 = scmp.eq.s32.totalorder %s58, 0
      %p383 = por %p381, %p382
      %p384 = scmp.ne.s32.totalorder %s372, %s373
      %p385 = scmp.eq.s32.totalorder %s59, 1
      %p386 = por %p384, %p385
      %p388 = scmp.ne.s32.totalorder %s373, %s387
      %p389 = scmp.eq.s32.totalorder %s59, 0
      %p390 = por %p388, %p389
      %s392 = sadd.s32 %s391, 1
      %p395 = scmp.eq.s32.totalorder %s53, 1
      %p396 = scmp.ne.s32.totalorder %s391, %s393
      %p397 = scmp.eq.s32.totalorder %s53, 0
      %p398 = por %p396, %p397
      %p399 = scmp.ne.s32.totalorder %s391, %s393
      %p400 = scmp.eq.s32.totalorder %s58, 1
      %p401 = por %p399, %p400
      %p402 = scmp.ne.s32.totalorder %s393, %s394
      %p403 = scmp.eq.s32.totalorder %s58, 0
      %p404 = por %p402, %p403
      %p405 = scmp.ne.s32.totalorder %s393, %s394
      %p406 = scmp.eq.s32.totalorder %s59, 1
      %p407 = por %p405, %p406
      %p409 = scmp.ne.s32.totalorder %s394, %s408
      %p410 = scmp.eq.s32.totalorder %s59, 0
      %p411 = por %p409, %p410
      %s413 = sadd.s32 %s412, 1
      %p416 = scmp.eq.s32.totalorder %s53, 1
      %p417 = scmp.ne.s32.totalorder %s412, %s414
      %p418 = scmp.eq.s32.totalorder %s53, 0
      %p419 = por %p417, %p418
      %p420 = scmp.ne.s32.totalorder %s412, %s414
      %p421 = scmp.eq.s32.totalorder %s58, 1
      %p422 = por %p420, %p421
      %p423 = scmp.ne.s32.totalorder %s414, %s415
      %p424 = scmp.eq.s32.totalorder %s58, 0
      %p425 = por %p423, %p424
      %p426 = scmp.ne.s32.totalorder %s414, %s415
      %p427 = scmp.eq.s32.totalorder %s59, 1
      %p428 = por %p426, %p427
      %p430 = scmp.ne.s32.totalorder %s415, %s429
      %p431 = scmp.eq.s32.totalorder %s59, 0
      %p432 = por %p430, %p431
      %s434 = sadd.s32 %s433, 1
      %p437 = scmp.eq.s32.totalorder %s53, 1
      %p438 = scmp.ne.s32.totalorder %s433, %s435
      %p439 = scmp.eq.s32.totalorder %s53, 0
      %p440 = por %p438, %p439
      %p441 = scmp.ne.s32.totalorder %s433, %s435
      %p442 = scmp.eq.s32.totalorder %s58, 1
      %p443 = por %p441, %p442
      %p444 = scmp.ne.s32.totalorder %s435, %s436
      %p445 = scmp.eq.s32.totalorder %s58, 0
      %p446 = por %p444, %p445
      %p447 = scmp.ne.s32.totalorder %s435, %s436
      %p448 = scmp.eq.s32.totalorder %s59, 1
      %p449 = por %p447, %p448
      %p451 = scmp.ne.s32.totalorder %s436, %s450
      %p452 = scmp.eq.s32.totalorder %s59, 0
      %p453 = por %p451, %p452
      %s455 = sadd.s32 %s454, 1
      %p458 = scmp.eq.s32.totalorder %s53, 1
      %p459 = scmp.ne.s32.totalorder %s454, %s456
      %p460 = scmp.eq.s32.totalorder %s53, 0
      %p461 = por %p459, %p460
      %p462 = scmp.ne.s32.totalorder %s454, %s456
      %p463 = scmp.eq.s32.totalorder %s58, 1
      %p464 = por %p462, %p463
      %p465 = scmp.ne.s32.totalorder %s456, %s457
      %p466 = scmp.eq.s32.totalorder %s58, 0
      %p467 = por %p465, %p466
      %p468 = scmp.ne.s32.totalorder %s456, %s457
      %p469 = scmp.eq.s32.totalorder %s59, 1
      %p470 = por %p468, %p469
      %p472 = scmp.ne.s32.totalorder %s457, %s471
      %p473 = scmp.eq.s32.totalorder %s59, 0
      %p474 = por %p472, %p473
      %s476 = sadd.s32 %s475, 1
      %p479 = scmp.eq.s32.totalorder %s53, 1
      %p480 = scmp.ne.s32.totalorder %s475, %s477
      %p481 = scmp.eq.s32.totalorder %s53, 0
      %p482 = por %p480, %p481
      %p483 = scmp.ne.s32.totalorder %s475, %s477
      %p484 = scmp.eq.s32.totalorder %s58, 1
      %p485 = por %p483, %p484
      %p486 = scmp.ne.s32.totalorder %s477, %s478
      %p487 = scmp.eq.s32.totalorder %s58, 0
      %p488 = por %p486, %p487
      %p489 = scmp.ne.s32.totalorder %s477, %s478
      %p490 = scmp.eq.s32.totalorder %s59, 1
      %p491 = por %p489, %p490
      %p493 = scmp.ne.s32.totalorder %s478, %s492
      %p494 = scmp.eq.s32.totalorder %s59, 0
      %p495 = por %p493, %p494
      %s497 = sadd.s32 %s496, 1
      %p500 = scmp.eq.s32.totalorder %s53, 1
      %p501 = scmp.ne.s32.totalorder %s496, %s498
      %p502 = scmp.eq.s32.totalorder %s53, 0
      %p503 = por %p501, %p502
      %p504 = scmp.ne.s32.totalorder %s496, %s498
      %p505 = scmp.eq.s32.totalorder %s58, 1
      %p506 = por %p504, %p505
      %p507 = scmp.ne.s32.totalorder %s498, %s499
      %p508 = scmp.eq.s32.totalorder %s58, 0
      %p509 = por %p507, %p508
      %p510 = scmp.ne.s32.totalorder %s498, %s499
      %p511 = scmp.eq.s32.totalorder %s59, 1
      %p512 = por %p510, %p511
      %p514 = scmp.ne.s32.totalorder %s499, %s513
      %p515 = scmp.eq.s32.totalorder %s59, 0
      %p516 = por %p514, %p515
      %s518 = sadd.s32 %s517, 1
      %p521 = scmp.eq.s32.totalorder %s53, 1
      %p522 = scmp.ne.s32.totalorder %s517, %s519
      %p523 = scmp.eq.s32.totalorder %s53, 0
      %p524 = por %p522, %p523
      %p525 = scmp.ne.s32.totalorder %s517, %s519
      %p526 = scmp.eq.s32.totalorder %s58, 1
      %p527 = por %p525, %p526
      %p528 = scmp.ne.s32.totalorder %s519, %s520
      %p529 = scmp.eq.s32.totalorder %s58, 0
      %p530 = por %p528, %p529
      %p531 = scmp.ne.s32.totalorder %s519, %s520
      %p532 = scmp.eq.s32.totalorder %s59, 1
      %p533 = por %p531, %p532
      %p535 = scmp.ne.s32.totalorder %s520, %s534
      %p536 = scmp.eq.s32.totalorder %s59, 0
      %p537 = por %p535, %p536
      %s539 = sadd.s32 %s538, 1
      %p542 = scmp.eq.s32.totalorder %s53, 1
      %p543 = scmp.ne.s32.totalorder %s538, %s540
      %p544 = scmp.eq.s32.totalorder %s53, 0
      %p545 = por %p543, %p544
      %p546 = scmp.ne.s32.totalorder %s538, %s540
      %p547 = scmp.eq.s32.totalorder %s58, 1
      %p548 = por %p546, %p547
      %p549 = scmp.ne.s32.totalorder %s540, %s541
      %p550 = scmp.eq.s32.totalorder %s58, 0
      %p551 = por %p549, %p550
      %p552 = scmp.ne.s32.totalorder %s540, %s541
      %p553 = scmp.eq.s32.totalorder %s59, 1
      %p554 = por %p552, %p553
      %p556 = scmp.ne.s32.totalorder %s541, %s555
      %p557 = scmp.eq.s32.totalorder %s59, 0
      %p558 = por %p556, %p557
      %s559 = ssub.s32 %s53, %s60
      %p560 = scmp.eq.s32.totalorder %s559, 0
      %s562 = sadd.s32 %s561, 1
      %s563 = scalar_select %p560, %s561, %s562
      %p566 = pneg %p560
      %p567 = scmp.eq.s32.totalorder %s53, 1
      %p568 = por %p566, %p567
      %p569 = scmp.ne.s32.totalorder %s561, %s564
      %p570 = scmp.eq.s32.totalorder %s53, 0
      %p571 = por %p569, %p570
      %p572 = scmp.ne.s32.totalorder %s561, %s564
      %p573 = scmp.eq.s32.totalorder %s58, 1
      %p574 = por %p572, %p573
      %p575 = scmp.ne.s32.totalorder %s564, %s565
      %p576 = scmp.eq.s32.totalorder %s58, 0
      %p577 = por %p575, %p576
      %p578 = scmp.ne.s32.totalorder %s564, %s565
      %p579 = scmp.eq.s32.totalorder %s59, 1
      %p580 = por %p578, %p579
      %p582 = scmp.ne.s32.totalorder %s565, %s581
      %p583 = scmp.eq.s32.totalorder %s59, 0
      %p584 = por %p582, %p583
      %s585 = ssub.s32 %s53, %s60
      %p586 = scmp.eq.s32.totalorder %s585, 0
      %s588 = sadd.s32 %s587, 1
      %s589 = scalar_select %p586, %s587, %s588
      %p592 = pneg %p586
      %p593 = scmp.eq.s32.totalorder %s53, 1
      %p594 = por %p592, %p593
      %p595 = scmp.ne.s32.totalorder %s587, %s590
      %p596 = scmp.eq.s32.totalorder %s53, 0
      %p597 = por %p595, %p596
      %p598 = scmp.ne.s32.totalorder %s587, %s590
      %p599 = scmp.eq.s32.totalorder %s58, 1
      %p600 = por %p598, %p599
      %p601 = scmp.ne.s32.totalorder %s590, %s591
      %p602 = scmp.eq.s32.totalorder %s58, 0
      %p603 = por %p601, %p602
      %p604 = scmp.ne.s32.totalorder %s590, %s591
      %p605 = scmp.eq.s32.totalorder %s59, 1
      %p606 = por %p604, %p605
      %p608 = scmp.ne.s32.totalorder %s591, %s607
      %p609 = scmp.eq.s32.totalorder %s59, 0
      %p610 = por %p608, %p609
      %p611 = scmp.le.s32.totalorder 1, %s53
      %p612 = scmp.lt.s32.totalorder %s53, 3
      %p613 = pnand %p611, %p612
      %p614 = pneg %p613
      // Predicated region
      $region9: #{tpu_custom_call.1} parent=5 // pred_check
        _
      $region10: #{tpu_custom_call.1} parent=5 // pred_check_branch
        %616 = sbr.rel (%p613) target = $region12
      $region11: #{tpu_custom_call.1} parent=5 // pred_region
        %s617 = ssub.s32 %s53, 1
        // Predicated region
        $region13: #{tpu_custom_call.1} parent=11 // pred_check
          %p618 = pneg %p152
        $region14: #{tpu_custom_call.1} parent=11 // pred_check_branch
          %620 = sbr.rel (%p618) target = $region16
        $region15: #{tpu_custom_call.1} parent=11 // pred_region
          %s622 = ssub.s32 128, 128
          %623 = vsyncadd [#allocation9], %s622
          %s624 = sshll.u32 [#allocation8], 4
          %s625 = int_to_ptr.vmem [resolvable:$true] %s624
          %630 = dma.hbm_to_vmem [thread:$0]  %s3, 128, %s625, [#allocation9], 64, 64, 4
        $region16: #{tpu_custom_call.1} parent=11 // pred_fallthru
          _
        // Predicated region
        $region17: #{tpu_custom_call.1} parent=11 // pred_check
          %p631 = pneg %p173
        $region18: #{tpu_custom_call.1} parent=11 // pred_check_branch
          %633 = sbr.rel (%p631) target = $region20
        $region19: #{tpu_custom_call.1} parent=11 // pred_region
          %s635 = ssub.s32 32, 32
          %636 = vsyncadd [#allocation9], %s635
          %s637 = sshll.u32 [#allocation10], 4
          %s638 = int_to_ptr.vmem [resolvable:$true] %s637
          %643 = dma.hbm_to_vmem [thread:$0]  %s4, 32, %s638, [#allocation9], 16, 16, 1
        $region20: #{tpu_custom_call.1} parent=11 // pred_fallthru
          _
        // Predicated region
        $region21: #{tpu_custom_call.1} parent=11 // pred_check
          %p644 = pneg %p194
        $region22: #{tpu_custom_call.1} parent=11 // pred_check_branch
          %646 = sbr.rel (%p644) target = $region24
        $region23: #{tpu_custom_call.1} parent=11 // pred_region
          %s648 = ssub.s32 128, 128
          %649 = vsyncadd [#allocation12], %s648
          %s650 = sshll.u32 [#allocation11], 4
          %s651 = int_to_ptr.vmem [resolvable:$true] %s650
          %656 = dma.hbm_to_vmem [thread:$0]  %s5, 128, %s651, [#allocation12], 64, 64, 4
        $region24: #{tpu_custom_call.1} parent=11 // pred_fallthru
          _
        // Predicated region
        $region25: #{tpu_custom_call.1} parent=11 // pred_check
          %p657 = pneg %p215
        $region26: #{tpu_custom_call.1} parent=11 // pred_check_branch
          %659 = sbr.rel (%p657) target = $region28
        $region27: #{tpu_custom_call.1} parent=11 // pred_region
          %s661 = ssub.s32 32, 32
          %662 = vsyncadd [#allocation12], %s661
          %s663 = sshll.u32 [#allocation13], 4
          %s664 = int_to_ptr.vmem [resolvable:$true] %s663
          %669 = dma.hbm_to_vmem [thread:$0]  %s6, 32, %s664, [#allocation12], 16, 16, 1
        $region28: #{tpu_custom_call.1} parent=11 // pred_fallthru
          _
        // Predicated region
        $region29: #{tpu_custom_call.1} parent=11 // pred_check
          %p670 = pneg %p236
        $region30: #{tpu_custom_call.1} parent=11 // pred_check_branch
          %672 = sbr.rel (%p670) target = $region32
        $region31: #{tpu_custom_call.1} parent=11 // pred_region
          %s674 = ssub.s32 32, 32
          %675 = vsyncadd [#allocation15], %s674
          %s676 = sshll.u32 [#allocation14], 4
          %s677 = int_to_ptr.vmem [resolvable:$true] %s676
          %682 = dma.hbm_to_vmem [thread:$0]  %s7, 32, %s677, [#allocation15], 16, 16, 1
        $region32: #{tpu_custom_call.1} parent=11 // pred_fallthru
          _
        // Predicated region
        $region33: #{tpu_custom_call.1} parent=11 // pred_check
          %p683 = pneg %p257
        $region34: #{tpu_custom_call.1} parent=11 // pred_check_branch
          %685 = sbr.rel (%p683) target = $region36
        $region35: #{tpu_custom_call.1} parent=11 // pred_region
          %s687 = ssub.s32 32, 32
          %688 = vsyncadd [#allocation15], %s687
          %s689 = sshll.u32 [#allocation16], 4
          %s690 = int_to_ptr.vmem [resolvable:$true] %s689
          %695 = dma.hbm_to_vmem [thread:$0]  %s8, 32, %s690, [#allocation15], 16, 16, 1
        $region36: #{tpu_custom_call.1} parent=11 // pred_fallthru
          _
        // Predicated region
        $region37: #{tpu_custom_call.1} parent=11 // pred_check
          %p696 = pneg %p278
        $region38: #{tpu_custom_call.1} parent=11 // pred_check_branch
          %698 = sbr.rel (%p696) target = $region40
        $region39: #{tpu_custom_call.1} parent=11 // pred_region
          %s700 = ssub.s32 384, 384
          %701 = vsyncadd [#allocation18], %s700
          %s702 = sshll.u32 [#allocation17], 4
          %s703 = int_to_ptr.vmem [resolvable:$true] %s702
          %708 = dma.hbm_to_vmem [thread:$0]  %s9, 384, %s703, [#allocation18], 64, 64, 4
        $region40: #{tpu_custom_call.1} parent=11 // pred_fallthru
          _
        // Predicated region
        $region41: #{tpu_custom_call.1} parent=11 // pred_check
          %p709 = pneg %p299
        $region42: #{tpu_custom_call.1} parent=11 // pred_check_branch
          %711 = sbr.rel (%p709) target = $region44
        $region43: #{tpu_custom_call.1} parent=11 // pred_region
          %s713 = ssub.s32 32, 32
          %714 = vsyncadd [#allocation18], %s713
          %s715 = sshll.u32 [#allocation19], 4
          %s716 = int_to_ptr.vmem [resolvable:$true] %s715
          %721 = dma.hbm_to_vmem [thread:$0]  %s10, 32, %s716, [#allocation18], 16, 16, 1
        $region44: #{tpu_custom_call.1} parent=11 // pred_fallthru
          _
        // Predicated region
        $region45: #{tpu_custom_call.1} parent=11 // pred_check
          %p722 = pneg %p320
        $region46: #{tpu_custom_call.1} parent=11 // pred_check_branch
          %724 = sbr.rel (%p722) target = $region48
        $region47: #{tpu_custom_call.1} parent=11 // pred_region
          %s726 = ssub.s32 384, 384
          %727 = vsyncadd [#allocation21], %s726
          %s728 = sshll.u32 [#allocation20], 4
          %s729 = int_to_ptr.vmem [resolvable:$true] %s728
          %734 = dma.hbm_to_vmem [thread:$0]  %s11, 384, %s729, [#allocation21], 64, 64, 4
        $region48: #{tpu_custom_call.1} parent=11 // pred_fallthru
          _
        // Predicated region
        $region49: #{tpu_custom_call.1} parent=11 // pred_check
          %p735 = pneg %p341
        $region50: #{tpu_custom_call.1} parent=11 // pred_check_branch
          %737 = sbr.rel (%p735) target = $region52
        $region51: #{tpu_custom_call.1} parent=11 // pred_region
          %s739 = ssub.s32 32, 32
          %740 = vsyncadd [#allocation21], %s739
          %s741 = sshll.u32 [#allocation22], 4
          %s742 = int_to_ptr.vmem [resolvable:$true] %s741
          %747 = dma.hbm_to_vmem [thread:$0]  %s12, 32, %s742, [#allocation21], 16, 16, 1
        $region52: #{tpu_custom_call.1} parent=11 // pred_fallthru
          _
        // Predicated region
        $region53: #{tpu_custom_call.1} parent=11 // pred_check
          %p748 = pneg %p362
        $region54: #{tpu_custom_call.1} parent=11 // pred_check_branch
          %750 = sbr.rel (%p748) target = $region56
        $region55: #{tpu_custom_call.1} parent=11 // pred_region
          %s752 = ssub.s32 32, 32
          %753 = vsyncadd [#allocation24], %s752
          %s754 = sshll.u32 [#allocation23], 4
          %s755 = int_to_ptr.vmem [resolvable:$true] %s754
          %760 = dma.hbm_to_vmem [thread:$0]  %s13, 32, %s755, [#allocation24], 16, 16, 1
        $region56: #{tpu_custom_call.1} parent=11 // pred_fallthru
          _
        // Predicated region
        $region57: #{tpu_custom_call.1} parent=11 // pred_check
          %p761 = pneg %p383
        $region58: #{tpu_custom_call.1} parent=11 // pred_check_branch
          %763 = sbr.rel (%p761) target = $region60
        $region59: #{tpu_custom_call.1} parent=11 // pred_region
          %s765 = ssub.s32 32, 32
          %766 = vsyncadd [#allocation24], %s765
          %s767 = sshll.u32 [#allocation25], 4
          %s768 = int_to_ptr.vmem [resolvable:$true] %s767
          %773 = dma.hbm_to_vmem [thread:$0]  %s14, 32, %s768, [#allocation24], 16, 16, 1
        $region60: #{tpu_custom_call.1} parent=11 // pred_fallthru
          _
        // Predicated region
        $region61: #{tpu_custom_call.1} parent=11 // pred_check
          %p774 = pneg %p404
        $region62: #{tpu_custom_call.1} parent=11 // pred_check_branch
          %776 = sbr.rel (%p774) target = $region64
        $region63: #{tpu_custom_call.1} parent=11 // pred_region
          %s778 = ssub.s32 64, 64
          %779 = vsyncadd [#allocation27], %s778
          %s781 = sshll.u32 [#allocation26], 4
          %s782 = int_to_ptr.vmem [resolvable:$true] %s781
          %784 = dma.hbm_to_vmem [thread:$0]  %s15, 64, %s782, [#allocation27]
        $region64: #{tpu_custom_call.1} parent=11 // pred_fallthru
          _
        // Predicated region
        $region65: #{tpu_custom_call.1} parent=11 // pred_check
          %p785 = pneg %p425
        $region66: #{tpu_custom_call.1} parent=11 // pred_check_branch
          %787 = sbr.rel (%p785) target = $region68
        $region67: #{tpu_custom_call.1} parent=11 // pred_region
          %s789 = ssub.s32 16, 16
          %790 = vsyncadd [#allocation27], %s789
          %s792 = sshll.u32 [#allocation28], 4
          %s793 = int_to_ptr.vmem [resolvable:$true] %s792
          %795 = dma.hbm_to_vmem [thread:$0]  %s16, 16, %s793, [#allocation27]
        $region68: #{tpu_custom_call.1} parent=11 // pred_fallthru
          _
        // Predicated region
        $region69: #{tpu_custom_call.1} parent=11 // pred_check
          %p796 = pneg %p446
        $region70: #{tpu_custom_call.1} parent=11 // pred_check_branch
          %798 = sbr.rel (%p796) target = $region72
        $region71: #{tpu_custom_call.1} parent=11 // pred_region
          %s800 = ssub.s32 40960, 40960
          %801 = vsyncadd [#allocation30], %s800
          %s802 = sshll.u32 [#allocation29], 4
          %s803 = int_to_ptr.vmem [resolvable:$true] %s802
          %808 = dma.hbm_to_vmem [thread:$0]  %s17, 40960, %s803, [#allocation30], 128, 128, 8
        $region72: #{tpu_custom_call.1} parent=11 // pred_fallthru
          _
        // Predicated region
        $region73: #{tpu_custom_call.1} parent=11 // pred_check
          %p809 = pneg %p467
        $region74: #{tpu_custom_call.1} parent=11 // pred_check_branch
          %811 = sbr.rel (%p809) target = $region76
        $region75: #{tpu_custom_call.1} parent=11 // pred_region
          %s813 = ssub.s32 128, 128
          %814 = vsyncadd [#allocation30], %s813
          %s815 = sshll.u32 [#allocation31], 4
          %s816 = int_to_ptr.vmem [resolvable:$true] %s815
          %821 = dma.hbm_to_vmem [thread:$0]  %s18, 128, %s816, [#allocation30], 32, 32, 2
        $region76: #{tpu_custom_call.1} parent=11 // pred_fallthru
          _
        // Predicated region
        $region77: #{tpu_custom_call.1} parent=11 // pred_check
          %p822 = pneg %p488
        $region78: #{tpu_custom_call.1} parent=11 // pred_check_branch
          %824 = sbr.rel (%p822) target = $region80
        $region79: #{tpu_custom_call.1} parent=11 // pred_region
          %s826 = ssub.s32 8192, 8192
          %827 = vsyncadd [#allocation33], %s826
          %s828 = sshll.u32 [#allocation32], 4
          %s829 = int_to_ptr.vmem [resolvable:$true] %s828
          %834 = dma.hbm_to_vmem [thread:$0]  %s19, 8192, %s829, [#allocation33], 128, 128, 8
        $region80: #{tpu_custom_call.1} parent=11 // pred_fallthru
          _
        // Predicated region
        $region81: #{tpu_custom_call.1} parent=11 // pred_check
          %p835 = pneg %p509
        $region82: #{tpu_custom_call.1} parent=11 // pred_check_branch
          %837 = sbr.rel (%p835) target = $region84
        $region83: #{tpu_custom_call.1} parent=11 // pred_region
          %s839 = ssub.s32 128, 128
          %840 = vsyncadd [#allocation33], %s839
          %s841 = sshll.u32 [#allocation34], 4
          %s842 = int_to_ptr.vmem [resolvable:$true] %s841
          %847 = dma.hbm_to_vmem [thread:$0]  %s20, 128, %s842, [#allocation33], 32, 32, 2
        $region84: #{tpu_custom_call.1} parent=11 // pred_fallthru
          _
        // Predicated region
        $region85: #{tpu_custom_call.1} parent=11 // pred_check
          %p848 = pneg %p530
        $region86: #{tpu_custom_call.1} parent=11 // pred_check_branch
          %850 = sbr.rel (%p848) target = $region88
        $region87: #{tpu_custom_call.1} parent=11 // pred_region
          %s852 = ssub.s32 1024, 1024
          %853 = vsyncadd [#allocation36], %s852
          %s854 = sshll.u32 [#allocation35], 4
          %s855 = int_to_ptr.vmem [resolvable:$true] %s854
          %860 = dma.hbm_to_vmem [thread:$0]  %s21, 1024, %s855, [#allocation36], 64, 64, 4
        $region88: #{tpu_custom_call.1} parent=11 // pred_fallthru
          _
        // Predicated region
        $region89: #{tpu_custom_call.1} parent=11 // pred_check
          %p861 = pneg %p551
        $region90: #{tpu_custom_call.1} parent=11 // pred_check_branch
          %863 = sbr.rel (%p861) target = $region92
        $region91: #{tpu_custom_call.1} parent=11 // pred_region
          %s865 = ssub.s32 16, 16
          %866 = vsyncadd [#allocation36], %s865
          %s868 = sshll.u32 [#allocation37], 4
          %s869 = int_to_ptr.vmem [resolvable:$true] %s868
          %871 = dma.hbm_to_vmem [thread:$0]  %s22, 16, %s869, [#allocation36]
        $region92: #{tpu_custom_call.1} parent=11 // pred_fallthru
          _
      $region12: #{tpu_custom_call.1} parent=5 // pred_fallthru
        _
      %p872 = scmp.lt.s32.totalorder %s53, 2
      // Predicated region
      $region93: #{tpu_custom_call.1} parent=5 // pred_check
        %p873 = pneg %p872
      $region94: #{tpu_custom_call.1} parent=5 // pred_check_branch
        %875 = sbr.rel (%p873) target = $region96
      $region95: #{tpu_custom_call.1} parent=5 // pred_region
        // Predicated region
        $region97: #{tpu_custom_call.1} parent=95 // pred_check
          %p876 = pneg %p73
        $region98: #{tpu_custom_call.1} parent=95 // pred_check_branch
          %878 = sbr.rel (%p876) target = $region100
        $region99: #{tpu_custom_call.1} parent=95 // pred_region
          %s879 = sand.u32 %s63, 1
          %s880 = scalar_lea.sflag [#allocation3], %s879
          %s881 = sand.u32 %s63, 1
          %s882 = smul.addr %s881, 16
          %s883 = scalar_lea.vmem [#allocation2], %s882
          %s885 = ssub.s32 256, 256
          %886 = vsyncadd %s880, %s885
          %s887 = smul.addr %s53, 2
          %s888 = smul.addr %s887, 128
          %s889 = scalar_lea.hbm %s0, %s888
          %s890 = sshll.u32 %s883, 4
          %s891 = int_to_ptr.vmem [resolvable:$true] %s890
          %896 = dma.hbm_to_vmem [thread:$0]  %s889, 256, %s891, %s880, 128, 128, 8
        $region100: #{tpu_custom_call.1} parent=95 // pred_fallthru
          _
        // Predicated region
        $region101: #{tpu_custom_call.1} parent=95 // pred_check
          %p897 = pneg %p99
        $region102: #{tpu_custom_call.1} parent=95 // pred_check_branch
          %899 = sbr.rel (%p897) target = $region104
        $region103: #{tpu_custom_call.1} parent=95 // pred_region
          %s900 = sand.u32 %s53, 1
          %s901 = scalar_lea.sflag [#allocation6], %s900
          %s902 = sand.u32 %s89, 1
          %s903 = smul.addr %s902, 16
          %s904 = scalar_lea.vmem [#allocation5], %s903
          %s906 = ssub.s32 256, 256
          %907 = vsyncadd %s901, %s906
          %s908 = smul.addr %s53, 2
          %s909 = smul.addr %s908, 128
          %s910 = scalar_lea.hbm %s1, %s909
          %s911 = sshll.u32 %s904, 4
          %s912 = int_to_ptr.vmem [resolvable:$true] %s911
          %917 = dma.hbm_to_vmem [thread:$0]  %s910, 256, %s912, %s901, 128, 128, 8
        $region104: #{tpu_custom_call.1} parent=95 // pred_fallthru
          _
        // Predicated region
        $region105: #{tpu_custom_call.1} parent=95 // pred_check
          %p918 = pneg %p125
        $region106: #{tpu_custom_call.1} parent=95 // pred_check_branch
          %920 = sbr.rel (%p918) target = $region108
        $region107: #{tpu_custom_call.1} parent=95 // pred_region
          %s921 = sand.u32 %s53, 1
          %s922 = scalar_lea.sflag [#allocation6], %s921
          %s923 = sand.u32 %s115, 1
          %s924 = scalar_lea.vmem [#allocation7], %s923
          %s926 = ssub.s32 16, 16
          %927 = vsyncadd %s922, %s926
          %s928 = smul.addr %s53, 16
          %s929 = scalar_lea.hbm %s2, %s928
          %s931 = sshll.u32 %s924, 4
          %s932 = int_to_ptr.vmem [resolvable:$true] %s931
          %934 = dma.hbm_to_vmem [thread:$0]  %s929, 16, %s932, %s922
        $region108: #{tpu_custom_call.1} parent=95 // pred_fallthru
          _
      $region96: #{tpu_custom_call.1} parent=5 // pred_fallthru
        _
      %p935 = scmp.le.s32.totalorder 1, %s53
      %p936 = scmp.lt.s32.totalorder %s53, 3
      %p937 = pnand %p935, %p936
      %p938 = pneg %p937
      // Predicated region
      $region109: #{tpu_custom_call.1} parent=5 // pred_check
        _
      $region110: #{tpu_custom_call.1} parent=5 // pred_check_branch
        %940 = sbr.rel (%p937) target = $region112
      $region111: #{tpu_custom_call.1} parent=5 // pred_region
        %s941 = ssub.s32 %s53, 1
        %s942 = sand.u32 %s66, 1
        %s943 = scalar_lea.sflag [#allocation3], %s942
        %s944 = sand.u32 %s66, 1
        %s945 = smul.addr %s944, 16
        %s946 = scalar_lea.vmem [#allocation2], %s945
        // Predicated region
        $region113: #{tpu_custom_call.1} parent=111 // pred_check
          %p947 = pneg %p79
        $region114: #{tpu_custom_call.1} parent=111 // pred_check_branch
          %949 = sbr.rel (%p947) target = $region116
        $region115: #{tpu_custom_call.1} parent=111 // pred_region
          %950 = dma.done %s943, 256
        $region116: #{tpu_custom_call.1} parent=111 // pred_fallthru
          _
        %s951 = sand.u32 %s58, 1
        %s952 = scalar_lea.sflag [#allocation6], %s951
        %s953 = sand.u32 %s92, 1
        %s954 = smul.addr %s953, 16
        %s955 = scalar_lea.vmem [#allocation5], %s954
        // Predicated region
        $region117: #{tpu_custom_call.1} parent=111 // pred_check
          %p956 = pneg %p105
        $region118: #{tpu_custom_call.1} parent=111 // pred_check_branch
          %958 = sbr.rel (%p956) target = $region120
        $region119: #{tpu_custom_call.1} parent=111 // pred_region
          %959 = dma.done %s952, 256
        $region120: #{tpu_custom_call.1} parent=111 // pred_fallthru
          _
        %s960 = sand.u32 %s58, 1
        %s961 = scalar_lea.sflag [#allocation6], %s960
        %s962 = sand.u32 %s118, 1
        %s963 = scalar_lea.vmem [#allocation7], %s962
        // Predicated region
        $region121: #{tpu_custom_call.1} parent=111 // pred_check
          %p964 = pneg %p131
        $region122: #{tpu_custom_call.1} parent=111 // pred_check_branch
          %966 = sbr.rel (%p964) target = $region124
        $region123: #{tpu_custom_call.1} parent=111 // pred_region
          %967 = dma.done %s961, 16
        $region124: #{tpu_custom_call.1} parent=111 // pred_fallthru
          _
        // Predicated region
        $region125: #{tpu_custom_call.1} parent=111 // pred_check
          %p968 = pneg %p152
        $region126: #{tpu_custom_call.1} parent=111 // pred_check_branch
          %970 = sbr.rel (%p968) target = $region128
        $region127: #{tpu_custom_call.1} parent=111 // pred_region
          %971 = dma.done [#allocation9], 128
        $region128: #{tpu_custom_call.1} parent=111 // pred_fallthru
          _
        // Predicated region
        $region129: #{tpu_custom_call.1} parent=111 // pred_check
          %p972 = pneg %p173
        $region130: #{tpu_custom_call.1} parent=111 // pred_check_branch
          %974 = sbr.rel (%p972) target = $region132
        $region131: #{tpu_custom_call.1} parent=111 // pred_region
          %975 = dma.done [#allocation9], 32
        $region132: #{tpu_custom_call.1} parent=111 // pred_fallthru
          _
        // Predicated region
        $region133: #{tpu_custom_call.1} parent=111 // pred_check
          %p976 = pneg %p194
        $region134: #{tpu_custom_call.1} parent=111 // pred_check_branch
          %978 = sbr.rel (%p976) target = $region136
        $region135: #{tpu_custom_call.1} parent=111 // pred_region
          %979 = dma.done [#allocation12], 128
        $region136: #{tpu_custom_call.1} parent=111 // pred_fallthru
          _
        // Predicated region
        $region137: #{tpu_custom_call.1} parent=111 // pred_check
          %p980 = pneg %p215
        $region138: #{tpu_custom_call.1} parent=111 // pred_check_branch
          %982 = sbr.rel (%p980) target = $region140
        $region139: #{tpu_custom_call.1} parent=111 // pred_region
          %983 = dma.done [#allocation12], 32
        $region140: #{tpu_custom_call.1} parent=111 // pred_fallthru
          _
        // Predicated region
        $region141: #{tpu_custom_call.1} parent=111 // pred_check
          %p984 = pneg %p236
        $region142: #{tpu_custom_call.1} parent=111 // pred_check_branch
          %986 = sbr.rel (%p984) target = $region144
        $region143: #{tpu_custom_call.1} parent=111 // pred_region
          %987 = dma.done [#allocation15], 32
        $region144: #{tpu_custom_call.1} parent=111 // pred_fallthru
          _
        // Predicated region
        $region145: #{tpu_custom_call.1} parent=111 // pred_check
          %p988 = pneg %p257
        $region146: #{tpu_custom_call.1} parent=111 // pred_check_branch
          %990 = sbr.rel (%p988) target = $region148
        $region147: #{tpu_custom_call.1} parent=111 // pred_region
          %991 = dma.done [#allocation15], 32
        $region148: #{tpu_custom_call.1} parent=111 // pred_fallthru
          _
        // Predicated region
        $region149: #{tpu_custom_call.1} parent=111 // pred_check
          %p992 = pneg %p278
        $region150: #{tpu_custom_call.1} parent=111 // pred_check_branch
          %994 = sbr.rel (%p992) target = $region152
        $region151: #{tpu_custom_call.1} parent=111 // pred_region
          %995 = dma.done [#allocation18], 384
        $region152: #{tpu_custom_call.1} parent=111 // pred_fallthru
          _
        // Predicated region
        $region153: #{tpu_custom_call.1} parent=111 // pred_check
          %p996 = pneg %p299
        $region154: #{tpu_custom_call.1} parent=111 // pred_check_branch
          %998 = sbr.rel (%p996) target = $region156
        $region155: #{tpu_custom_call.1} parent=111 // pred_region
          %999 = dma.done [#allocation18], 32
        $region156: #{tpu_custom_call.1} parent=111 // pred_fallthru
          _
        // Predicated region
        $region157: #{tpu_custom_call.1} parent=111 // pred_check
          %p1000 = pneg %p320
        $region158: #{tpu_custom_call.1} parent=111 // pred_check_branch
          %1002 = sbr.rel (%p1000) target = $region160
        $region159: #{tpu_custom_call.1} parent=111 // pred_region
          %1003 = dma.done [#allocation21], 384
        $region160: #{tpu_custom_call.1} parent=111 // pred_fallthru
          _
        // Predicated region
        $region161: #{tpu_custom_call.1} parent=111 // pred_check
          %p1004 = pneg %p341
        $region162: #{tpu_custom_call.1} parent=111 // pred_check_branch
          %1006 = sbr.rel (%p1004) target = $region164
        $region163: #{tpu_custom_call.1} parent=111 // pred_region
          %1007 = dma.done [#allocation21], 32
        $region164: #{tpu_custom_call.1} parent=111 // pred_fallthru
          _
        // Predicated region
        $region165: #{tpu_custom_call.1} parent=111 // pred_check
          %p1008 = pneg %p362
        $region166: #{tpu_custom_call.1} parent=111 // pred_check_branch
          %1010 = sbr.rel (%p1008) target = $region168
        $region167: #{tpu_custom_call.1} parent=111 // pred_region
          %1011 = dma.done [#allocation24], 32
        $region168: #{tpu_custom_call.1} parent=111 // pred_fallthru
          _
        // Predicated region
        $region169: #{tpu_custom_call.1} parent=111 // pred_check
          %p1012 = pneg %p383
        $region170: #{tpu_custom_call.1} parent=111 // pred_check_branch
          %1014 = sbr.rel (%p1012) target = $region172
        $region171: #{tpu_custom_call.1} parent=111 // pred_region
          %1015 = dma.done [#allocation24], 32
        $region172: #{tpu_custom_call.1} parent=111 // pred_fallthru
          _
        // Predicated region
        $region173: #{tpu_custom_call.1} parent=111 // pred_check
          %p1016 = pneg %p404
        $region174: #{tpu_custom_call.1} parent=111 // pred_check_branch
          %1018 = sbr.rel (%p1016) target = $region176
        $region175: #{tpu_custom_call.1} parent=111 // pred_region
          %1019 = dma.done [#allocation27], 64
        $region176: #{tpu_custom_call.1} parent=111 // pred_fallthru
          _
        // Predicated region
        $region177: #{tpu_custom_call.1} parent=111 // pred_check
          %p1020 = pneg %p425
        $region178: #{tpu_custom_call.1} parent=111 // pred_check_branch
          %1022 = sbr.rel (%p1020) target = $region180
        $region179: #{tpu_custom_call.1} parent=111 // pred_region
          %1023 = dma.done [#allocation27], 16
        $region180: #{tpu_custom_call.1} parent=111 // pred_fallthru
          _
        // Predicated region
        $region181: #{tpu_custom_call.1} parent=111 // pred_check
          %p1024 = pneg %p446
        $region182: #{tpu_custom_call.1} parent=111 // pred_check_branch
          %1026 = sbr.rel (%p1024) target = $region184
        $region183: #{tpu_custom_call.1} parent=111 // pred_region
          %1027 = dma.done [#allocation30], 40960
        $region184: #{tpu_custom_call.1} parent=111 // pred_fallthru
          _
        // Predicated region
        $region185: #{tpu_custom_call.1} parent=111 // pred_check
          %p1028 = pneg %p467
        $region186: #{tpu_custom_call.1} parent=111 // pred_check_branch
          %1030 = sbr.rel (%p1028) target = $region188
        $region187: #{tpu_custom_call.1} parent=111 // pred_region
          %1031 = dma.done [#allocation30], 128
        $region188: #{tpu_custom_call.1} parent=111 // pred_fallthru
          _
        // Predicated region
        $region189: #{tpu_custom_call.1} parent=111 // pred_check
          %p1032 = pneg %p488
        $region190: #{tpu_custom_call.1} parent=111 // pred_check_branch
          %1034 = sbr.rel (%p1032) target = $region192
        $region191: #{tpu_custom_call.1} parent=111 // pred_region
          %1035 = dma.done [#allocation33], 8192
        $region192: #{tpu_custom_call.1} parent=111 // pred_fallthru
          _
        // Predicated region
        $region193: #{tpu_custom_call.1} parent=111 // pred_check
          %p1036 = pneg %p509
        $region194: #{tpu_custom_call.1} parent=111 // pred_check_branch
          %1038 = sbr.rel (%p1036) target = $region196
        $region195: #{tpu_custom_call.1} parent=111 // pred_region
          %1039 = dma.done [#allocation33], 128
        $region196: #{tpu_custom_call.1} parent=111 // pred_fallthru
          _
        // Predicated region
        $region197: #{tpu_custom_call.1} parent=111 // pred_check
          %p1040 = pneg %p530
        $region198: #{tpu_custom_call.1} parent=111 // pred_check_branch
          %1042 = sbr.rel (%p1040) target = $region200
        $region199: #{tpu_custom_call.1} parent=111 // pred_region
          %1043 = dma.done [#allocation36], 1024
        $region200: #{tpu_custom_call.1} parent=111 // pred_fallthru
          _
        // Predicated region
        $region201: #{tpu_custom_call.1} parent=111 // pred_check
          %p1044 = pneg %p551
        $region202: #{tpu_custom_call.1} parent=111 // pred_check_branch
          %1046 = sbr.rel (%p1044) target = $region204
        $region203: #{tpu_custom_call.1} parent=111 // pred_region
          %1047 = dma.done [#allocation36], 16
        $region204: #{tpu_custom_call.1} parent=111 // pred_fallthru
          _
        %s1048 = sand.u32 %s66, 1
        %s1049 = scalar_lea.sflag [#allocation3], %s1048
        %s1050 = sand.u32 %s66, 1
        %s1051 = smul.addr %s1050, 16
        %s1052 = scalar_lea.vmem [#allocation2], %s1051
        %p1053 = pneg %p79
        %p1054 = pneg %p76
        %s1055 = sand.u32 %s58, 1
        %s1056 = scalar_lea.sflag [#allocation6], %s1055
        %s1057 = sand.u32 %s92, 1
        %s1058 = smul.addr %s1057, 16
        %s1059 = scalar_lea.vmem [#allocation5], %s1058
        %p1060 = pneg %p105
        %p1061 = pneg %p102
        %s1062 = sand.u32 %s58, 1
        %s1063 = scalar_lea.sflag [#allocation6], %s1062
        %s1064 = sand.u32 %s118, 1
        %s1065 = scalar_lea.vmem [#allocation7], %s1064
        %p1066 = pneg %p131
        %p1067 = pneg %p128
        %p1068 = pneg %p152
        %p1069 = pneg %p149
        %p1070 = pneg %p173
        %p1071 = pneg %p170
        %p1072 = pneg %p194
        %p1073 = pneg %p191
        %p1074 = pneg %p215
        %p1075 = pneg %p212
        %p1076 = pneg %p236
        %p1077 = pneg %p233
        %p1078 = pneg %p257
        %p1079 = pneg %p254
        %p1080 = pneg %p278
        %p1081 = pneg %p275
        %p1082 = pneg %p299
        %p1083 = pneg %p296
        %p1084 = pneg %p320
        %p1085 = pneg %p317
        %p1086 = pneg %p341
        %p1087 = pneg %p338
        %p1088 = pneg %p362
        %p1089 = pneg %p359
        %p1090 = pneg %p383
        %p1091 = pneg %p380
        %p1092 = pneg %p404
        %p1093 = pneg %p401
        %p1094 = pneg %p425
        %p1095 = pneg %p422
        %p1096 = pneg %p446
        %p1097 = pneg %p443
        %p1098 = pneg %p467
        %p1099 = pneg %p464
        %p1100 = pneg %p488
        %p1101 = pneg %p485
        %p1102 = pneg %p509
        %p1103 = pneg %p506
        %p1104 = pneg %p530
        %p1105 = pneg %p527
        %p1106 = pneg %p551
        %p1107 = pneg %p548
        %p1108 = pneg %p577
        %p1109 = pneg %p574
        %s1110 = sand.u32 %s564, 1
        %s1111 = scalar_lea.sflag [#allocation4], %s1110
        %s1112 = sand.u32 %s564, 1
        %s1113 = smul.addr %s1112, 16
        %s1114 = scalar_lea.vmem [#allocation38], %s1113
        %p1115 = pneg %p603
        %p1116 = pneg %p600
        %s1117 = sand.u32 %s590, 1
        %s1118 = scalar_lea.sflag [#allocation40], %s1117
        %s1119 = sand.u32 %s590, 1
        %s1120 = scalar_lea.vmem [#allocation39], %s1119
        %v1122 = vld [vmem:[%s946] sm:$0xff]
        %v1123 = vld [vmem:[%s946 + $0x8] sm:$0xff]
        %v1124 = vld [vmem:[%s955] sm:$0xff]
        %v1125 = vld [vmem:[%s955 + $0x8] sm:$0xff]
        %v1126 = vld [vmem:[%s963] sm:$0x1]
        %1128 = vset.pattern.permute.xlu0 0
        %1129 = vperm.xlu0 %1128, %v1124
        %v1130 = vpop.permute.xlu0 %1129
        %1133 = vset.pattern.permute.xlu0 0
        %1134 = vperm.xlu0 %1133, %v1125
        %v1135 = vpop.permute.xlu0 %1134
        %v1138 = vlaneseq
        %v1139 = vshrl.u32 %v1138, 7
        %v1140 = vsub.s32 0, %v1139
        %v1141 = vrot.slane %v1126, %v1140
        %v1143 = vmul.f32 %v1130, %v1141
        %v1144 = vmul.f32 %v1135, %v1141
        %vm1145 = vcmp.eq.f32.partialorder %v1143, 0.0
        %vm1146 = vcmp.eq.f32.partialorder %v1144, 0.0
        %v1147 = vsel %vm1145, -10000.0, 0.0
        %v1148 = vsel %vm1146, -10000.0, 0.0
        %v1149 = vlaneseq
        %v1150 = vand.u32 %v1149, 127
        %vm1151 = vcmp.ge.s32.totalorder %v1150, 0
        %vm1152 = vcmp.lt.s32.totalorder %v1150, 4
        %vm1153 = vmand %vm1151, %vm1152
        %v1154 = vsel %vm1153, 1, 0
        %v1155 = vcvt.s32.f32 %v1154
        %vm1156 = vcmp.ge.s32.totalorder %v1150, 4
        %vm1157 = vcmp.lt.s32.totalorder %v1150, 8
        %vm1158 = vmand %vm1156, %vm1157
        %v1159 = vsel %vm1158, 1, 0
        %v1160 = vcvt.s32.f32 %v1159
        %v1161 = vmul.f32 %v1122, %v1130
        %v1162 = vmul.f32 %v1123, %v1135
        loop: start=0, step=1, limit=2
        $region205: #{tpu_custom_call.1} parent=111 // loop_pre_header
          _
        $region206: #{tpu_custom_call.1} parent=111 // loop_header
          %s1164 = sphi 0, %s1168
          %p1165 = scmp.ge.s32.totalorder %s1164, 2
          %v1169 = vphi %v1161, %v1774
          %v1170 = vphi %v1162, %v1775
        $region207: #{tpu_custom_call.1} parent=111 // loop_header_branch
          %1167 = sbr.rel (%p1165) target = $region211
        $region208: #{tpu_custom_call.1} parent=111 // loop_body
          %v1171 = vpack.c.bf16 %v1170, %v1169
          %s1172 = smul.addr %s1164, 4
          %s1173 = scalar_lea.vmem [#allocation8], %s1172
          %v1174 = vld [vmem:[%s1173] sm:$0xf]
          %s1175 = scalar_lea.vmem [#allocation10], %s1164
          %v1176 = vld [vmem:[%s1175] sm:$0x1]
          %v1178 = vlaneseq
          %v1179 = vshrl.u32 %v1178, 7
          %v1180 = vsub.s32 0, %v1179
          %v1181 = vrot.slane %v1176, %v1180
          %vm1183 = vcmask 64512
          %v1185 = vsel %vm1183, %v1171, 0
          %vm1187 = vcmask 1043456
          %v1189 = vsel %vm1187, %v1174, 0
          %1191 = vmatprep.subr.bf16.mxu0 0
          %1192 = vmatpush1.bf16.msra.mxu0 %v1189
          %1193 = vmatprep.subr.bf16.mxu0 0
          %1194 = vmatpush1.bf16.msra.mxu0 0
          %1195 = vmatprep.subr.bf16.mxu0 0
          %1196 = vmatpush1.bf16.msra.mxu0 0
          %1197 = vmatprep.subr.bf16.mxu0 0
          %1198 = vmatpush1.bf16.msra.mxu0 0
          %1199 = vmatprep.subr.bf16.mxu0 0
          %1200 = vmatpush1.bf16.msra.mxu0 0
          %1201 = vmatprep.subr.bf16.mxu0 0
          %1202 = vmatpush1.bf16.msra.mxu0 0
          %1203 = vmatprep.subr.bf16.mxu0 0
          %1204 = vmatpush1.bf16.msra.mxu0 0
          %1205 = vmatprep.subr.bf16.mxu0 0
          %1206 = vmatpush1.bf16.msra.mxu0 0
          %1207 = vmatprep.subr.bf16.mxu0 0
          %1208 = vmatpush1.bf16.msra.mxu0 0
          %1209 = vmatprep.subr.bf16.mxu0 0
          %1210 = vmatpush1.bf16.msra.mxu0 0
          %1211 = vmatprep.subr.bf16.mxu0 0
          %1212 = vmatpush1.bf16.msra.mxu0 0
          %1213 = vmatprep.subr.bf16.mxu0 0
          %1214 = vmatpush1.bf16.msra.mxu0 0
          %1215 = vmatprep.subr.bf16.mxu0 0
          %1216 = vmatpush1.bf16.msra.mxu0 0
          %1217 = vmatprep.subr.bf16.mxu0 0
          %1218 = vmatpush1.bf16.msra.mxu0 0
          %1219 = vmatprep.subr.bf16.mxu0 0
          %1220 = vmatpush1.bf16.msra.mxu0 0
          %1221 = vmatprep.subr.bf16.mxu0 0
          %1222 = vmatpush1.bf16.msra.mxu0 0
          %1223 = vmatprep.mubr.bf16.mxu0 0
          %1224 = vmatmul.mubr.bf16.gmra.mrb[0].mxu0 %v1185
          %v1225 = vpop.f32.mrb[0].mxu0
          %v1226 = vadd.f32 %v1181, %v1225
          %v1227 = vpop.f32.mrb[0].mxu0
          %v1228 = vpop.f32.mrb[0].mxu0
          %v1229 = vadd.f32 %v1181, %v1228
          %v1230 = vpop.f32.mrb[0].mxu0
          %1231 = vdwg.mxu0
          %v1232 = vpack.c.bf16 %v1229, %v1226
          %v1233 = vmul.f32 %v1226, %v1155
          %v1234 = vmul.f32 %v1229, %v1155
          %v1235 = vmul.f32 %v1226, %v1160
          %v1236 = vmul.f32 %v1229, %v1160
          %v1237 = vpack.c.bf16 %v1234, %v1233
          %v1238 = vpack.c.bf16 %v1236, %v1235
          %1240 = vrot.lane.b32.xlu0 %v1232, 120
          %v1241 = vpop.permute.xlu0 %1240
          %v1243 = vsel %vm1183, %v1237, 0
          %v1246 = vsel %vm1183, %v1238, 0
          %v1249 = vsel %vm1183, %v1241, 0
          %1251 = vmatprep.subr.bf16.mxu0 0
          %1252 = vmatpush1.bf16.xpose.msra.mxu0 %v1249
          %1253 = vmatprep.subr.bf16.mxu0 0
          %1254 = vmatpush1.bf16.xpose.msra.mxu0 0
          %1255 = vmatprep.subr.bf16.mxu0 0
          %1256 = vmatpush1.bf16.xpose.msra.mxu0 0
          %1257 = vmatprep.subr.bf16.mxu0 0
          %1258 = vmatpush1.bf16.xpose.msra.mxu0 0
          %1259 = vmatprep.subr.bf16.mxu0 0
          %1260 = vmatpush1.bf16.xpose.msra.mxu0 0
          %1261 = vmatprep.subr.bf16.mxu0 0
          %1262 = vmatpush1.bf16.xpose.msra.mxu0 0
          %1263 = vmatprep.subr.bf16.mxu0 0
          %1264 = vmatpush1.bf16.xpose.msra.mxu0 0
          %1265 = vmatprep.subr.bf16.mxu0 0
          %1266 = vmatpush1.bf16.xpose.msra.mxu0 0
          %1267 = vmatprep.subr.bf16.mxu0 0
          %1268 = vmatpush1.bf16.xpose.msra.mxu0 0
          %1269 = vmatprep.subr.bf16.mxu0 0
          %1270 = vmatpush1.bf16.xpose.msra.mxu0 0
          %1271 = vmatprep.subr.bf16.mxu0 0
          %1272 = vmatpush1.bf16.xpose.msra.mxu0 0
          %1273 = vmatprep.subr.bf16.mxu0 0
          %1274 = vmatpush1.bf16.xpose.msra.mxu0 0
          %1275 = vmatprep.subr.bf16.mxu0 0
          %1276 = vmatpush1.bf16.xpose.msra.mxu0 0
          %1277 = vmatprep.subr.bf16.mxu0 0
          %1278 = vmatpush1.bf16.xpose.msra.mxu0 0
          %1279 = vmatprep.subr.bf16.mxu0 0
          %1280 = vmatpush1.bf16.xpose.msra.mxu0 0
          %1281 = vmatprep.subr.bf16.mxu0 0
          %1282 = vmatpush1.bf16.xpose.msra.mxu0 0
          %1283 = vmatprep.mubr.bf16.mxu0 0
          %1284 = vmatmul.mubr.bf16.gmra.mrb[0].mxu0 %v1243
          %v1285 = vpop.f32.mrb[0].mxu0
          %v1286 = vadd.f32 %v1147, %v1285
          %v1287 = vpop.f32.mrb[0].mxu0
          %v1288 = vpop.f32.mrb[0].mxu0
          %v1289 = vadd.f32 %v1148, %v1288
          %v1290 = vpop.f32.mrb[0].mxu0
          %1291 = vmatprep.mubr.bf16.mxu0 0
          %1292 = vmatmul.mubr.bf16.gmra.mrb[0].mxu0 %v1246
          %v1293 = vpop.f32.mrb[0].mxu0
          %v1294 = vadd.f32 %v1147, %v1293
          %v1295 = vpop.f32.mrb[0].mxu0
          %v1296 = vpop.f32.mrb[0].mxu0
          %v1297 = vadd.f32 %v1148, %v1296
          %v1298 = vpop.f32.mrb[0].mxu0
          %1299 = vdwg.mxu0
          %vm1300 = vcmask 130048
          %v1301 = vsel %vm1300, %v1286, -inf
          %1302 = vmax.xlane.f32.xlu0 %v1301
          %v1303 = vpop.xlane.xlu0 %1302
          %v1304 = vsel %vm1300, %v1289, -inf
          %1305 = vmax.xlane.f32.xlu0 %v1304
          %v1306 = vpop.xlane.xlu0 %1305
          %v1307 = vsel %vm1300, %v1294, -inf
          %1308 = vmax.xlane.f32.xlu0 %v1307
          %v1309 = vpop.xlane.xlu0 %1308
          %v1310 = vsel %vm1300, %v1297, -inf
          %1311 = vmax.xlane.f32.xlu0 %v1310
          %v1312 = vpop.xlane.xlu0 %1311
          %v1313 = vsub.f32 %v1286, %v1303
          %v1314 = vsub.f32 %v1289, %v1306
          %v1315 = vsub.f32 %v1294, %v1309
          %v1316 = vsub.f32 %v1297, %v1312
          %v1317 = vmul.f32 %v1313, 1.442695
          %v1318 = vpow.pop %v1317
          %v1319 = vmul.f32 %v1314, 1.442695
          %v1320 = vpow.pop %v1319
          %v1321 = vmul.f32 %v1315, 1.442695
          %v1322 = vpow.pop %v1321
          %v1323 = vmul.f32 %v1316, 1.442695
          %v1324 = vpow.pop %v1323
          %v1325 = vsel %vm1300, %v1318, 0.0
          %1326 = vadd.xlane.f32.xlu0 %v1325
          %v1327 = vpop.xlane.xlu0 %1326
          %v1328 = vsel %vm1300, %v1320, 0.0
          %1329 = vadd.xlane.f32.xlu0 %v1328
          %v1330 = vpop.xlane.xlu0 %1329
          %v1331 = vsel %vm1300, %v1322, 0.0
          %1332 = vadd.xlane.f32.xlu0 %v1331
          %v1333 = vpop.xlane.xlu0 %1332
          %v1334 = vsel %vm1300, %v1324, 0.0
          %1335 = vadd.xlane.f32.xlu0 %v1334
          %v1336 = vpop.xlane.xlu0 %1335
          %v1337 = vrcp.pop %v1327
          %v1338 = vmul.f32 %v1318, %v1337
          %v1339 = vrcp.pop %v1330
          %v1340 = vmul.f32 %v1320, %v1339
          %v1341 = vrcp.pop %v1333
          %v1342 = vmul.f32 %v1322, %v1341
          %v1343 = vrcp.pop %v1336
          %v1344 = vmul.f32 %v1324, %v1343
          %v1345 = vpack.c.bf16 %v1340, %v1338
          %v1346 = vpack.c.bf16 %v1344, %v1342
          %1347 = vrot.lane.b32.xlu0 %v1232, 112
          %v1348 = vpop.permute.xlu0 %1347
          %v1351 = vsel %vm1300, %v1345, 0
          %v1354 = vsel %vm1300, %v1346, 0
          %1356 = vmatprep.subr.bf16.mxu0 0
          %1357 = vmatpush1.bf16.msra.mxu0 %v1348
          %1358 = vmatprep.subr.bf16.mxu0 0
          %1359 = vmatpush1.bf16.msra.mxu0 0
          %1360 = vmatprep.subr.bf16.mxu0 0
          %1361 = vmatpush1.bf16.msra.mxu0 0
          %1362 = vmatprep.subr.bf16.mxu0 0
          %1363 = vmatpush1.bf16.msra.mxu0 0
          %1364 = vmatprep.subr.bf16.mxu0 0
          %1365 = vmatpush1.bf16.msra.mxu0 0
          %1366 = vmatprep.subr.bf16.mxu0 0
          %1367 = vmatpush1.bf16.msra.mxu0 0
          %1368 = vmatprep.subr.bf16.mxu0 0
          %1369 = vmatpush1.bf16.msra.mxu0 0
          %1370 = vmatprep.subr.bf16.mxu0 0
          %1371 = vmatpush1.bf16.msra.mxu0 0
          %1372 = vmatprep.subr.bf16.mxu0 0
          %1373 = vmatpush1.bf16.msra.mxu0 0
          %1374 = vmatprep.subr.bf16.mxu0 0
          %1375 = vmatpush1.bf16.msra.mxu0 0
          %1376 = vmatprep.subr.bf16.mxu0 0
          %1377 = vmatpush1.bf16.msra.mxu0 0
          %1378 = vmatprep.subr.bf16.mxu0 0
          %1379 = vmatpush1.bf16.msra.mxu0 0
          %1380 = vmatprep.subr.bf16.mxu0 0
          %1381 = vmatpush1.bf16.msra.mxu0 0
          %1382 = vmatprep.subr.bf16.mxu0 0
          %1383 = vmatpush1.bf16.msra.mxu0 0
          %1384 = vmatprep.subr.bf16.mxu0 0
          %1385 = vmatpush1.bf16.msra.mxu0 0
          %1386 = vmatprep.subr.bf16.mxu0 0
          %1387 = vmatpush1.bf16.msra.mxu0 0
          %1388 = vmatprep.mubr.bf16.mxu0 0
          %1389 = vmatmul.mubr.bf16.gmra.mrb[0].mxu0 %v1351
          %v1390 = vpop.f32.mrb[0].mxu0
          %v1391 = vadd.f32 0.0, %v1390
          %v1392 = vpop.f32.mrb[0].mxu0
          %v1393 = vpop.f32.mrb[0].mxu0
          %v1394 = vadd.f32 0.0, %v1393
          %v1395 = vpop.f32.mrb[0].mxu0
          %1396 = vmatprep.mubr.bf16.mxu0 0
          %1397 = vmatmul.mubr.bf16.gmra.mrb[0].mxu0 %v1354
          %v1398 = vpop.f32.mrb[0].mxu0
          %v1399 = vadd.f32 0.0, %v1398
          %v1400 = vpop.f32.mrb[0].mxu0
          %v1401 = vpop.f32.mrb[0].mxu0
          %v1402 = vadd.f32 0.0, %v1401
          %v1403 = vpop.f32.mrb[0].mxu0
          %1404 = vdwg.mxu0
          %vm1405 = vcmask 31744
          %v1406 = vsel %vm1405, %v1391, %v1399
          %v1407 = vsel %vm1405, %v1394, %v1402
          %v1408 = vpack.c.bf16 %v1407, %v1406
          %s1409 = smul.addr %s1164, 4
          %s1410 = scalar_lea.vmem [#allocation11], %s1409
          %v1411 = vld [vmem:[%s1410] sm:$0xf]
          %s1412 = scalar_lea.vmem [#allocation13], %s1164
          %v1413 = vld [vmem:[%s1412] sm:$0x1]
          %v1415 = vlaneseq
          %v1416 = vshrl.u32 %v1415, 7
          %v1417 = vsub.s32 0, %v1416
          %v1418 = vrot.slane %v1413, %v1417
          %v1421 = vsel %vm1183, %v1408, 0
          %v1424 = vsel %vm1187, %v1411, 0
          %1426 = vmatprep.subr.bf16.mxu0 0
          %1427 = vmatpush1.bf16.msra.mxu0 %v1424
          %1428 = vmatprep.subr.bf16.mxu0 0
          %1429 = vmatpush1.bf16.msra.mxu0 0
          %1430 = vmatprep.subr.bf16.mxu0 0
          %1431 = vmatpush1.bf16.msra.mxu0 0
          %1432 = vmatprep.subr.bf16.mxu0 0
          %1433 = vmatpush1.bf16.msra.mxu0 0
          %1434 = vmatprep.subr.bf16.mxu0 0
          %1435 = vmatpush1.bf16.msra.mxu0 0
          %1436 = vmatprep.subr.bf16.mxu0 0
          %1437 = vmatpush1.bf16.msra.mxu0 0
          %1438 = vmatprep.subr.bf16.mxu0 0
          %1439 = vmatpush1.bf16.msra.mxu0 0
          %1440 = vmatprep.subr.bf16.mxu0 0
          %1441 = vmatpush1.bf16.msra.mxu0 0
          %1442 = vmatprep.subr.bf16.mxu0 0
          %1443 = vmatpush1.bf16.msra.mxu0 0
          %1444 = vmatprep.subr.bf16.mxu0 0
          %1445 = vmatpush1.bf16.msra.mxu0 0
          %1446 = vmatprep.subr.bf16.mxu0 0
          %1447 = vmatpush1.bf16.msra.mxu0 0
          %1448 = vmatprep.subr.bf16.mxu0 0
          %1449 = vmatpush1.bf16.msra.mxu0 0
          %1450 = vmatprep.subr.bf16.mxu0 0
          %1451 = vmatpush1.bf16.msra.mxu0 0
          %1452 = vmatprep.subr.bf16.mxu0 0
          %1453 = vmatpush1.bf16.msra.mxu0 0
          %1454 = vmatprep.subr.bf16.mxu0 0
          %1455 = vmatpush1.bf16.msra.mxu0 0
          %1456 = vmatprep.subr.bf16.mxu0 0
          %1457 = vmatpush1.bf16.msra.mxu0 0
          %1458 = vmatprep.mubr.bf16.mxu0 0
          %1459 = vmatmul.mubr.bf16.gmra.mrb[0].mxu0 %v1421
          %v1460 = vpop.f32.mrb[0].mxu0
          %v1461 = vadd.f32 %v1418, %v1460
          %v1462 = vpop.f32.mrb[0].mxu0
          %v1463 = vpop.f32.mrb[0].mxu0
          %v1464 = vadd.f32 %v1418, %v1463
          %v1465 = vpop.f32.mrb[0].mxu0
          %1466 = vdwg.mxu0
          %v1467 = vadd.f32 %v1169, %v1461
          %v1468 = vadd.f32 %v1170, %v1464
          %s1469 = scalar_lea.vmem [#allocation14], %s1164
          %v1470 = vld [vmem:[%s1469] sm:$0x1]
          %s1471 = scalar_lea.vmem [#allocation16], %s1164
          %v1472 = vld [vmem:[%s1471] sm:$0x1]
          %v1473 = vsel %vm1183, %v1467, 0.0
          %1474 = vadd.xlane.f32.xlu0 %v1473
          %v1475 = vpop.xlane.xlu0 %1474
          %v1476 = vsel %vm1183, %v1468, 0.0
          %1477 = vadd.xlane.f32.xlu0 %v1476
          %v1478 = vpop.xlane.xlu0 %1477
          %v1479 = vrcp.pop 8.0
          %v1480 = vmul.f32 %v1475, %v1479
          %v1481 = vmul.f32 %v1478, %v1479
          %v1482 = vsub.f32 %v1467, %v1480
          %v1483 = vsub.f32 %v1468, %v1481
          %v1484 = vmul.f32 %v1482, %v1482
          %v1485 = vmul.f32 %v1483, %v1483
          %v1486 = vsel %vm1183, %v1484, 0.0
          %1487 = vadd.xlane.f32.xlu0 %v1486
          %v1488 = vpop.xlane.xlu0 %1487
          %v1489 = vsel %vm1183, %v1485, 0.0
          %1490 = vadd.xlane.f32.xlu0 %v1489
          %v1491 = vpop.xlane.xlu0 %1490
          %v1492 = vmul.f32 %v1488, %v1479
          %v1493 = vmul.f32 %v1491, %v1479
          %v1494 = vadd.f32 %v1492, 1e-05
          %v1495 = vadd.f32 %v1493, 1e-05
          %v1496 = vrsqrt.pop %v1494
          %v1497 = vrsqrt.pop %v1495
          %v1498 = vmul.f32 %v1482, %v1496
          %v1499 = vmul.f32 %v1483, %v1497
          %v1501 = vlaneseq
          %v1502 = vshrl.u32 %v1501, 7
          %v1503 = vsub.s32 0, %v1502
          %v1504 = vrot.slane %v1470, %v1503
          %v1506 = vmul.f32 %v1498, %v1504
          %v1507 = vmul.f32 %v1499, %v1504
          %v1509 = vlaneseq
          %v1510 = vshrl.u32 %v1509, 7
          %v1511 = vsub.s32 0, %v1510
          %v1512 = vrot.slane %v1472, %v1511
          %v1514 = vadd.f32 %v1506, %v1512
          %v1515 = vadd.f32 %v1507, %v1512
          %v1516 = vmul.f32 %v1514, %v1130
          %v1517 = vmul.f32 %v1515, %v1135
          %s1518 = smul.u32 %s1164, 3
          %s1519 = smul.addr %s1518, 4
          %s1520 = scalar_lea.vmem [#allocation17], %s1519
          %v1521 = vld [vmem:[%s1520] sm:$0xf]
          %v1522 = vld [vmem:[%s1520 + $0x4] sm:$0xf]
          %v1523 = vld [vmem:[%s1520 + $0x8] sm:$0xf]
          %s1524 = scalar_lea.vmem [#allocation19], %s1164
          %v1525 = vld [vmem:[%s1524] sm:$0x1]
          %vm1528 = vcmask 1040384
          %v1529 = vrot.slane %v1516, 7
          %v1530 = vrot.slane %v1517, 7
          %v1531 = vsel %vm1528, %v1529, %v1530
          %v1534 = vsel %vm1528, 0.0, %v1529
          %vm1535 = vcmask 1046528
          %v1536 = vrot.slane %v1516, 1
          %v1537 = vrot.slane %v1517, 1
          %v1538 = vsel %vm1535, %v1536, %v1537
          %v1540 = vsel %vm1535, %v1537, 0.0
          %1541 = vrot.lane.b32.xlu0 %v1516, 8
          %v1542 = vpop.permute.xlu0 %1541
          %1543 = vrot.lane.b32.xlu0 %v1517, 8
          %v1544 = vpop.permute.xlu0 %1543
          %1548 = vrot.lane.b32.xlu0 %v1538, 16
          %v1549 = vpop.permute.xlu0 %1548
          %1550 = vrot.lane.b32.xlu0 %v1540, 16
          %v1551 = vpop.permute.xlu0 %1550
          %v1554 = vsel %vm1183, %v1534, %v1542
          %v1555 = vsel %vm1183, %v1531, %v1544
          %v1556 = vsel %vm1300, %v1554, %v1549
          %v1557 = vsel %vm1300, %v1555, %v1551
          %v1558 = vpack.c.bf16 %v1557, %v1556
          %v1560 = vlaneseq
          %v1561 = vshrl.u32 %v1560, 7
          %v1562 = vsub.s32 0, %v1561
          %v1563 = vrot.slane %v1525, %v1562
          %v1568 = vunpack.c.l.b16 %v1521
          %v1569 = vunpack.c.l.b16 %v1522
          %v1570 = vunpack.c.l.b16 %v1523
          %v1571 = vpack.c.b16 %v1569, %v1568
          %v1572 = vpack.c.b16 %v1570, %v1570
          %vm1574 = vcmask 195584
          %v1576 = vsel %vm1574, %v1558, 0
          %v1579 = vsel %vm1187, %v1572, 0
          %1581 = vmatprep.subr.bf16.mxu0 0
          %1582 = vmatpush1.bf16.msra.mxu0 %v1571
          %1583 = vmatprep.subr.bf16.mxu0 0
          %1584 = vmatpush1.bf16.msra.mxu0 %v1579
          %1585 = vmatprep.subr.bf16.mxu0 0
          %1586 = vmatpush1.bf16.msra.mxu0 0
          %1587 = vmatprep.subr.bf16.mxu0 0
          %1588 = vmatpush1.bf16.msra.mxu0 0
          %1589 = vmatprep.subr.bf16.mxu0 0
          %1590 = vmatpush1.bf16.msra.mxu0 0
          %1591 = vmatprep.subr.bf16.mxu0 0
          %1592 = vmatpush1.bf16.msra.mxu0 0
          %1593 = vmatprep.subr.bf16.mxu0 0
          %1594 = vmatpush1.bf16.msra.mxu0 0
          %1595 = vmatprep.subr.bf16.mxu0 0
          %1596 = vmatpush1.bf16.msra.mxu0 0
          %1597 = vmatprep.subr.bf16.mxu0 0
          %1598 = vmatpush1.bf16.msra.mxu0 0
          %1599 = vmatprep.subr.bf16.mxu0 0
          %1600 = vmatpush1.bf16.msra.mxu0 0
          %1601 = vmatprep.subr.bf16.mxu0 0
          %1602 = vmatpush1.bf16.msra.mxu0 0
          %1603 = vmatprep.subr.bf16.mxu0 0
          %1604 = vmatpush1.bf16.msra.mxu0 0
          %1605 = vmatprep.subr.bf16.mxu0 0
          %1606 = vmatpush1.bf16.msra.mxu0 0
          %1607 = vmatprep.subr.bf16.mxu0 0
          %1608 = vmatpush1.bf16.msra.mxu0 0
          %1609 = vmatprep.subr.bf16.mxu0 0
          %1610 = vmatpush1.bf16.msra.mxu0 0
          %1611 = vmatprep.subr.bf16.mxu0 0
          %1612 = vmatpush1.bf16.msra.mxu0 0
          %1613 = vmatprep.mubr.bf16.mxu0 0
          %1614 = vmatmul.mubr.bf16.gmra.mrb[0].mxu0 %v1576
          %v1615 = vpop.f32.mrb[0].mxu0
          %v1616 = vadd.f32 %v1563, %v1615
          %v1617 = vpop.f32.mrb[0].mxu0
          %v1618 = vpop.f32.mrb[0].mxu0
          %v1619 = vadd.f32 %v1563, %v1618
          %v1620 = vpop.f32.mrb[0].mxu0
          %1621 = vdwg.mxu0
          %v1622 = vmax.f32 %v1616, 0.0
          %v1623 = vmax.f32 %v1619, 0.0
          %v1624 = vmul.f32 %v1622, %v1130
          %v1625 = vmul.f32 %v1623, %v1135
          %s1626 = smul.addr %s1518, 4
          %s1627 = scalar_lea.vmem [#allocation20], %s1626
          %v1628 = vld [vmem:[%s1627] sm:$0xf]
          %v1629 = vld [vmem:[%s1627 + $0x4] sm:$0xf]
          %v1630 = vld [vmem:[%s1627 + $0x8] sm:$0xf]
          %s1631 = scalar_lea.vmem [#allocation22], %s1164
          %v1632 = vld [vmem:[%s1631] sm:$0x1]
          %v1635 = vrot.slane %v1624, 7
          %v1636 = vrot.slane %v1625, 7
          %v1637 = vsel %vm1528, %v1635, %v1636
          %v1640 = vsel %vm1528, 0.0, %v1635
          %v1641 = vrot.slane %v1624, 1
          %v1642 = vrot.slane %v1625, 1
          %v1643 = vsel %vm1535, %v1641, %v1642
          %v1645 = vsel %vm1535, %v1642, 0.0
          %1646 = vrot.lane.b32.xlu0 %v1624, 8
          %v1647 = vpop.permute.xlu0 %1646
          %1648 = vrot.lane.b32.xlu0 %v1625, 8
          %v1649 = vpop.permute.xlu0 %1648
          %1653 = vrot.lane.b32.xlu0 %v1643, 16
          %v1654 = vpop.permute.xlu0 %1653
          %1655 = vrot.lane.b32.xlu0 %v1645, 16
          %v1656 = vpop.permute.xlu0 %1655
          %v1659 = vsel %vm1183, %v1640, %v1647
          %v1660 = vsel %vm1183, %v1637, %v1649
          %v1661 = vsel %vm1300, %v1659, %v1654
          %v1662 = vsel %vm1300, %v1660, %v1656
          %v1663 = vpack.c.bf16 %v1662, %v1661
          %v1665 = vlaneseq
          %v1666 = vshrl.u32 %v1665, 7
          %v1667 = vsub.s32 0, %v1666
          %v1668 = vrot.slane %v1632, %v1667
          %v1673 = vunpack.c.l.b16 %v1628
          %v1674 = vunpack.c.l.b16 %v1629
          %v1675 = vunpack.c.l.b16 %v1630
          %v1676 = vpack.c.b16 %v1674, %v1673
          %v1677 = vpack.c.b16 %v1675, %v1675
          %v1680 = vsel %vm1574, %v1663, 0
          %v1683 = vsel %vm1187, %v1677, 0
          %1685 = vmatprep.subr.bf16.mxu0 0
          %1686 = vmatpush1.bf16.msra.mxu0 %v1676
          %1687 = vmatprep.subr.bf16.mxu0 0
          %1688 = vmatpush1.bf16.msra.mxu0 %v1683
          %1689 = vmatprep.subr.bf16.mxu0 0
          %1690 = vmatpush1.bf16.msra.mxu0 0
          %1691 = vmatprep.subr.bf16.mxu0 0
          %1692 = vmatpush1.bf16.msra.mxu0 0
          %1693 = vmatprep.subr.bf16.mxu0 0
          %1694 = vmatpush1.bf16.msra.mxu0 0
          %1695 = vmatprep.subr.bf16.mxu0 0
          %1696 = vmatpush1.bf16.msra.mxu0 0
          %1697 = vmatprep.subr.bf16.mxu0 0
          %1698 = vmatpush1.bf16.msra.mxu0 0
          %1699 = vmatprep.subr.bf16.mxu0 0
          %1700 = vmatpush1.bf16.msra.mxu0 0
          %1701 = vmatprep.subr.bf16.mxu0 0
          %1702 = vmatpush1.bf16.msra.mxu0 0
          %1703 = vmatprep.subr.bf16.mxu0 0
          %1704 = vmatpush1.bf16.msra.mxu0 0
          %1705 = vmatprep.subr.bf16.mxu0 0
          %1706 = vmatpush1.bf16.msra.mxu0 0
          %1707 = vmatprep.subr.bf16.mxu0 0
          %1708 = vmatpush1.bf16.msra.mxu0 0
          %1709 = vmatprep.subr.bf16.mxu0 0
          %1710 = vmatpush1.bf16.msra.mxu0 0
          %1711 = vmatprep.subr.bf16.mxu0 0
          %1712 = vmatpush1.bf16.msra.mxu0 0
          %1713 = vmatprep.subr.bf16.mxu0 0
          %1714 = vmatpush1.bf16.msra.mxu0 0
          %1715 = vmatprep.subr.bf16.mxu0 0
          %1716 = vmatpush1.bf16.msra.mxu0 0
          %1717 = vmatprep.mubr.bf16.mxu0 0
          %1718 = vmatmul.mubr.bf16.gmra.mrb[0].mxu0 %v1680
          %v1719 = vpop.f32.mrb[0].mxu0
          %v1720 = vadd.f32 %v1668, %v1719
          %v1721 = vpop.f32.mrb[0].mxu0
          %v1722 = vpop.f32.mrb[0].mxu0
          %v1723 = vadd.f32 %v1668, %v1722
          %v1724 = vpop.f32.mrb[0].mxu0
          %1725 = vdwg.mxu0
          %v1726 = vmul.f32 %v1720, %v1130
          %v1727 = vmul.f32 %v1723, %v1135
          %v1728 = vadd.f32 %v1514, %v1726
          %v1729 = vadd.f32 %v1515, %v1727
          %s1730 = scalar_lea.vmem [#allocation23], %s1164
          %v1731 = vld [vmem:[%s1730] sm:$0x1]
          %s1732 = scalar_lea.vmem [#allocation25], %s1164
          %v1733 = vld [vmem:[%s1732] sm:$0x1]
          %v1734 = vsel %vm1183, %v1728, 0.0
          %1735 = vadd.xlane.f32.xlu0 %v1734
          %v1736 = vpop.xlane.xlu0 %1735
          %v1737 = vsel %vm1183, %v1729, 0.0
          %1738 = vadd.xlane.f32.xlu0 %v1737
          %v1739 = vpop.xlane.xlu0 %1738
          %v1740 = vmul.f32 %v1736, %v1479
          %v1741 = vmul.f32 %v1739, %v1479
          %v1742 = vsub.f32 %v1728, %v1740
          %v1743 = vsub.f32 %v1729, %v1741
          %v1744 = vmul.f32 %v1742, %v1742
          %v1745 = vmul.f32 %v1743, %v1743
          %v1746 = vsel %vm1183, %v1744, 0.0
          %1747 = vadd.xlane.f32.xlu0 %v1746
          %v1748 = vpop.xlane.xlu0 %1747
          %v1749 = vsel %vm1183, %v1745, 0.0
          %1750 = vadd.xlane.f32.xlu0 %v1749
          %v1751 = vpop.xlane.xlu0 %1750
          %v1752 = vmul.f32 %v1748, %v1479
          %v1753 = vmul.f32 %v1751, %v1479
          %v1754 = vadd.f32 %v1752, 1e-05
          %v1755 = vadd.f32 %v1753, 1e-05
          %v1756 = vrsqrt.pop %v1754
          %v1757 = vrsqrt.pop %v1755
          %v1758 = vmul.f32 %v1742, %v1756
          %v1759 = vmul.f32 %v1743, %v1757
          %v1761 = vlaneseq
          %v1762 = vshrl.u32 %v1761, 7
          %v1763 = vsub.s32 0, %v1762
          %v1764 = vrot.slane %v1731, %v1763
          %v1766 = vmul.f32 %v1758, %v1764
          %v1767 = vmul.f32 %v1759, %v1764
          %v1769 = vlaneseq
          %v1770 = vshrl.u32 %v1769, 7
          %v1771 = vsub.s32 0, %v1770
          %v1772 = vrot.slane %v1733, %v1771
          %v1774 = vadd.f32 %v1766, %v1772
          %v1775 = vadd.f32 %v1767, %v1772
        $region209: #{tpu_custom_call.1} parent=111 // loop_footer
          %s1168 = sadd.s32 1, %s1164
        $region210: #{tpu_custom_call.1} parent=111 // loop_footer_branch
          %1163 = sbr.rel target = $region206
        $region211: #{tpu_custom_call.1} parent=111 // loop_exit
          _
        %v1776 = vmul.f32 %v1169, %v1130
        %v1777 = vmul.f32 %v1170, %v1135
        %v1778 = vadd.f32 %v1776, %v1122
        %v1779 = vadd.f32 %v1777, %v1123
        %v1780 = vpack.c.bf16 %v1779, %v1778
        %v1781 = vld [vmem:[#allocation26] sm:$0xf]
        %v1782 = vld [vmem:[#allocation28] sm:$0x1]
        %v1784 = vlaneseq
        %v1785 = vshrl.u32 %v1784, 7
        %v1786 = vsub.s32 0, %v1785
        %v1787 = vrot.slane %v1782, %v1786
        %vm1789 = vcmask 64512
        %v1791 = vsel %vm1789, %v1780, 0
        %vm1793 = vcmask 1043456
        %v1795 = vsel %vm1793, %v1781, 0
        %1797 = vmatprep.subr.bf16.mxu0 0
        %1798 = vmatpush1.bf16.msra.mxu0 %v1795
        %1799 = vmatprep.subr.bf16.mxu0 0
        %1800 = vmatpush1.bf16.msra.mxu0 0
        %1801 = vmatprep.subr.bf16.mxu0 0
        %1802 = vmatpush1.bf16.msra.mxu0 0
        %1803 = vmatprep.subr.bf16.mxu0 0
        %1804 = vmatpush1.bf16.msra.mxu0 0
        %1805 = vmatprep.subr.bf16.mxu0 0
        %1806 = vmatpush1.bf16.msra.mxu0 0
        %1807 = vmatprep.subr.bf16.mxu0 0
        %1808 = vmatpush1.bf16.msra.mxu0 0
        %1809 = vmatprep.subr.bf16.mxu0 0
        %1810 = vmatpush1.bf16.msra.mxu0 0
        %1811 = vmatprep.subr.bf16.mxu0 0
        %1812 = vmatpush1.bf16.msra.mxu0 0
        %1813 = vmatprep.subr.bf16.mxu0 0
        %1814 = vmatpush1.bf16.msra.mxu0 0
        %1815 = vmatprep.subr.bf16.mxu0 0
        %1816 = vmatpush1.bf16.msra.mxu0 0
        %1817 = vmatprep.subr.bf16.mxu0 0
        %1818 = vmatpush1.bf16.msra.mxu0 0
        %1819 = vmatprep.subr.bf16.mxu0 0
        %1820 = vmatpush1.bf16.msra.mxu0 0
        %1821 = vmatprep.subr.bf16.mxu0 0
        %1822 = vmatpush1.bf16.msra.mxu0 0
        %1823 = vmatprep.subr.bf16.mxu0 0
        %1824 = vmatpush1.bf16.msra.mxu0 0
        %1825 = vmatprep.subr.bf16.mxu0 0
        %1826 = vmatpush1.bf16.msra.mxu0 0
        %1827 = vmatprep.subr.bf16.mxu0 0
        %1828 = vmatpush1.bf16.msra.mxu0 0
        %1829 = vmatprep.mubr.bf16.mxu0 0
        %1830 = vmatmul.mubr.bf16.gmra.mrb[0].mxu0 %v1791
        %v1831 = vpop.f32.mrb[0].mxu0
        %v1832 = vadd.f32 %v1787, %v1831
        %v1833 = vpop.f32.mrb[0].mxu0
        %v1834 = vpop.f32.mrb[0].mxu0
        %v1835 = vadd.f32 %v1787, %v1834
        %v1836 = vpop.f32.mrb[0].mxu0
        %1837 = vdwg.mxu0
        %v1838 = vmul.f32 %v1832, %v1130
        %v1839 = vmul.f32 %v1835, %v1135
        loop: start=0, step=1, limit=4
        $region212: #{tpu_custom_call.1} parent=111 // loop_pre_header
          _
        $region213: #{tpu_custom_call.1} parent=111 // loop_header
          %s1841 = sphi 0, %s1845
          %p1842 = scmp.ge.s32.totalorder %s1841, 4
          %v1846 = vphi %v1838, %v2787
          %v1847 = vphi %v1839, %v2788
          %v1848 = vphi 0.0, %v2789
          %v1849 = vphi 0.0, %v2790
        $region214: #{tpu_custom_call.1} parent=111 // loop_header_branch
          %1844 = sbr.rel (%p1842) target = $region218
        $region215: #{tpu_custom_call.1} parent=111 // loop_body
          %s1850 = smul.u32 %s1841, 160
          %s1851 = smul.addr %s1850, 4
          %s1852 = scalar_lea.vmem [#allocation29], %s1851
          %v1853 = vld [vmem:[%s1852] sm:$0xff]
          %v1854 = vld [vmem:[%s1852 + $0x8] sm:$0xff]
          %v1855 = vld [vmem:[%s1852 + $0x10] sm:$0xff]
          %v1856 = vld [vmem:[%s1852 + $0x18] sm:$0xff]
          %v1857 = vld [vmem:[%s1852 + $0x20] sm:$0xff]
          %v1858 = vld [vmem:[%s1852 + $0x28] sm:$0xff]
          %v1859 = vld [vmem:[%s1852 + $0x30] sm:$0xff]
          %v1860 = vld [vmem:[%s1852 + $0x38] sm:$0xff]
          %v1861 = vld [vmem:[%s1852 + $0x40] sm:$0xff]
          %v1862 = vld [vmem:[%s1852 + $0x48] sm:$0xff]
          %v1863 = vld [vmem:[%s1852 + $0x50] sm:$0xff]
          %v1864 = vld [vmem:[%s1852 + $0x58] sm:$0xff]
          %v1865 = vld [vmem:[%s1852 + $0x60] sm:$0xff]
          %v1866 = vld [vmem:[%s1852 + $0x68] sm:$0xff]
          %v1867 = vld [vmem:[%s1852 + $0x70] sm:$0xff]
          %v1868 = vld [vmem:[%s1852 + $0x78] sm:$0xff]
          %v1869 = vld [vmem:[%s1852 + $0x80] sm:$0xff]
          %v1870 = vld [vmem:[%s1852 + $0x88] sm:$0xff]
          %v1871 = vld [vmem:[%s1852 + $0x90] sm:$0xff]
          %v1872 = vld [vmem:[%s1852 + $0x98] sm:$0xff]
          %v1873 = vld [vmem:[%s1852 + $0xa0] sm:$0xff]
          %v1874 = vld [vmem:[%s1852 + $0xa8] sm:$0xff]
          %v1875 = vld [vmem:[%s1852 + $0xb0] sm:$0xff]
          %v1876 = vld [vmem:[%s1852 + $0xb8] sm:$0xff]
          %v1877 = vld [vmem:[%s1852 + $0xc0] sm:$0xff]
          %v1878 = vld [vmem:[%s1852 + $0xc8] sm:$0xff]
          %v1879 = vld [vmem:[%s1852 + $0xd0] sm:$0xff]
          %v1880 = vld [vmem:[%s1852 + $0xd8] sm:$0xff]
          %v1881 = vld [vmem:[%s1852 + $0xe0] sm:$0xff]
          %v1882 = vld [vmem:[%s1852 + $0xe8] sm:$0xff]
          %v1883 = vld [vmem:[%s1852 + $0xf0] sm:$0xff]
          %v1884 = vld [vmem:[%s1852 + $0xf8] sm:$0xff]
          %v1885 = vld [vmem:[%s1852 + $0x100] sm:$0xff]
          %v1886 = vld [vmem:[%s1852 + $0x108] sm:$0xff]
          %v1887 = vld [vmem:[%s1852 + $0x110] sm:$0xff]
          %v1888 = vld [vmem:[%s1852 + $0x118] sm:$0xff]
          %v1889 = vld [vmem:[%s1852 + $0x120] sm:$0xff]
          %v1890 = vld [vmem:[%s1852 + $0x128] sm:$0xff]
          %v1891 = vld [vmem:[%s1852 + $0x130] sm:$0xff]
          %v1892 = vld [vmem:[%s1852 + $0x138] sm:$0xff]
          %v1893 = vld [vmem:[%s1852 + $0x140] sm:$0xff]
          %v1894 = vld [vmem:[%s1852 + $0x148] sm:$0xff]
          %v1895 = vld [vmem:[%s1852 + $0x150] sm:$0xff]
          %v1896 = vld [vmem:[%s1852 + $0x158] sm:$0xff]
          %v1897 = vld [vmem:[%s1852 + $0x160] sm:$0xff]
          %v1898 = vld [vmem:[%s1852 + $0x168] sm:$0xff]
          %v1899 = vld [vmem:[%s1852 + $0x170] sm:$0xff]
          %v1900 = vld [vmem:[%s1852 + $0x178] sm:$0xff]
          %v1901 = vld [vmem:[%s1852 + $0x180] sm:$0xff]
          %v1902 = vld [vmem:[%s1852 + $0x188] sm:$0xff]
          %v1903 = vld [vmem:[%s1852 + $0x190] sm:$0xff]
          %v1904 = vld [vmem:[%s1852 + $0x198] sm:$0xff]
          %v1905 = vld [vmem:[%s1852 + $0x1a0] sm:$0xff]
          %v1906 = vld [vmem:[%s1852 + $0x1a8] sm:$0xff]
          %v1907 = vld [vmem:[%s1852 + $0x1b0] sm:$0xff]
          %v1908 = vld [vmem:[%s1852 + $0x1b8] sm:$0xff]
          %v1909 = vld [vmem:[%s1852 + $0x1c0] sm:$0xff]
          %v1910 = vld [vmem:[%s1852 + $0x1c8] sm:$0xff]
          %v1911 = vld [vmem:[%s1852 + $0x1d0] sm:$0xff]
          %v1912 = vld [vmem:[%s1852 + $0x1d8] sm:$0xff]
          %v1913 = vld [vmem:[%s1852 + $0x1e0] sm:$0xff]
          %v1914 = vld [vmem:[%s1852 + $0x1e8] sm:$0xff]
          %v1915 = vld [vmem:[%s1852 + $0x1f0] sm:$0xff]
          %v1916 = vld [vmem:[%s1852 + $0x1f8] sm:$0xff]
          %v1917 = vld [vmem:[%s1852 + $0x200] sm:$0xff]
          %v1918 = vld [vmem:[%s1852 + $0x208] sm:$0xff]
          %v1919 = vld [vmem:[%s1852 + $0x210] sm:$0xff]
          %v1920 = vld [vmem:[%s1852 + $0x218] sm:$0xff]
          %v1921 = vld [vmem:[%s1852 + $0x220] sm:$0xff]
          %v1922 = vld [vmem:[%s1852 + $0x228] sm:$0xff]
          %v1923 = vld [vmem:[%s1852 + $0x230] sm:$0xff]
          %v1924 = vld [vmem:[%s1852 + $0x238] sm:$0xff]
          %v1925 = vld [vmem:[%s1852 + $0x240] sm:$0xff]
          %v1926 = vld [vmem:[%s1852 + $0x248] sm:$0xff]
          %v1927 = vld [vmem:[%s1852 + $0x250] sm:$0xff]
          %v1928 = vld [vmem:[%s1852 + $0x258] sm:$0xff]
          %v1929 = vld [vmem:[%s1852 + $0x260] sm:$0xff]
          %v1930 = vld [vmem:[%s1852 + $0x268] sm:$0xff]
          %v1931 = vld [vmem:[%s1852 + $0x270] sm:$0xff]
          %v1932 = vld [vmem:[%s1852 + $0x278] sm:$0xff]
          %s1933 = smul.u32 %s1841, 2
          %s1934 = scalar_lea.vmem [#allocation31], %s1933
          %v1935 = vld [vmem:[%s1934] sm:$0x3]
          %vm1938 = vcmask 1041408
          %v1939 = vrot.slane %v1846, 6
          %v1940 = vrot.slane %v1847, 6
          %v1941 = vsel %vm1938, %v1939, %v1940
          %v1944 = vsel %vm1938, 0.0, %v1939
          %v1945 = vpack.c.bf16 %v1941, %v1944
          %vm1946 = vcmask 1040384
          %v1947 = vrot.slane %v1846, 7
          %v1948 = vrot.slane %v1847, 7
          %v1949 = vsel %vm1946, %v1947, %v1948
          %v1952 = vsel %vm1946, 0.0, %v1947
          %v1953 = vpack.c.bf16 %v1949, %v1952
          %v1970 = vunpack.c.l.b16 %v1869
          %v1971 = vunpack.c.h.b16 %v1869
          %v1972 = vunpack.c.l.b16 %v1870
          %v1973 = vunpack.c.h.b16 %v1870
          %v1974 = vunpack.c.l.b16 %v1871
          %v1975 = vunpack.c.h.b16 %v1871
          %v1976 = vunpack.c.l.b16 %v1872
          %v1977 = vunpack.c.h.b16 %v1872
          %v1978 = vunpack.c.l.b16 %v1873
          %v1979 = vunpack.c.h.b16 %v1873
          %v1980 = vunpack.c.l.b16 %v1874
          %v1981 = vunpack.c.h.b16 %v1874
          %v1982 = vunpack.c.l.b16 %v1875
          %v1983 = vunpack.c.h.b16 %v1875
          %v1984 = vunpack.c.l.b16 %v1876
          %v1985 = vunpack.c.h.b16 %v1876
          %v1986 = vunpack.c.l.b16 %v1877
          %v1987 = vunpack.c.h.b16 %v1877
          %v1988 = vunpack.c.l.b16 %v1878
          %v1989 = vunpack.c.h.b16 %v1878
          %v1990 = vunpack.c.l.b16 %v1879
          %v1991 = vunpack.c.h.b16 %v1879
          %v1992 = vunpack.c.l.b16 %v1880
          %v1993 = vunpack.c.h.b16 %v1880
          %v1994 = vunpack.c.l.b16 %v1881
          %v1995 = vunpack.c.h.b16 %v1881
          %v1996 = vunpack.c.l.b16 %v1882
          %v1997 = vunpack.c.h.b16 %v1882
          %v1998 = vunpack.c.l.b16 %v1883
          %v1999 = vunpack.c.h.b16 %v1883
          %v2000 = vunpack.c.l.b16 %v1884
          %v2001 = vunpack.c.h.b16 %v1884
          %v2002 = vpack.c.b16 %v1972, %v1970
          %v2003 = vpack.c.b16 %v1973, %v1971
          %v2004 = vpack.c.b16 %v1976, %v1974
          %v2005 = vpack.c.b16 %v1977, %v1975
          %v2006 = vpack.c.b16 %v1980, %v1978
          %v2007 = vpack.c.b16 %v1981, %v1979
          %v2008 = vpack.c.b16 %v1984, %v1982
          %v2009 = vpack.c.b16 %v1985, %v1983
          %v2010 = vpack.c.b16 %v1988, %v1986
          %v2011 = vpack.c.b16 %v1989, %v1987
          %v2012 = vpack.c.b16 %v1992, %v1990
          %v2013 = vpack.c.b16 %v1993, %v1991
          %v2014 = vpack.c.b16 %v1996, %v1994
          %v2015 = vpack.c.b16 %v1997, %v1995
          %v2016 = vpack.c.b16 %v2000, %v1998
          %v2017 = vpack.c.b16 %v2001, %v1999
          %2034 = vmatprep.subr.bf16.mxu0 %v2003
          %2035 = vmatpush1.bf16.msra.mxu0 %v2002
          %2036 = vmatprep.subr.bf16.mxu0 %v2005
          %2037 = vmatpush1.bf16.msra.mxu0 %v2004
          %2038 = vmatprep.subr.bf16.mxu0 %v2007
          %2039 = vmatpush1.bf16.msra.mxu0 %v2006
          %2040 = vmatprep.subr.bf16.mxu0 %v2009
          %2041 = vmatpush1.bf16.msra.mxu0 %v2008
          %2042 = vmatprep.subr.bf16.mxu0 %v2011
          %2043 = vmatpush1.bf16.msra.mxu0 %v2010
          %2044 = vmatprep.subr.bf16.mxu0 %v2013
          %2045 = vmatpush1.bf16.msra.mxu0 %v2012
          %2046 = vmatprep.subr.bf16.mxu0 %v2015
          %2047 = vmatpush1.bf16.msra.mxu0 %v2014
          %2048 = vmatprep.subr.bf16.mxu0 %v2017
          %2049 = vmatpush1.bf16.msra.mxu0 %v2016
          %2050 = vmatprep.subr.bf16.mxu0 0
          %2051 = vmatpush1.bf16.msra.mxu0 0
          %2052 = vmatprep.subr.bf16.mxu0 0
          %2053 = vmatpush1.bf16.msra.mxu0 0
          %2054 = vmatprep.subr.bf16.mxu0 0
          %2055 = vmatpush1.bf16.msra.mxu0 0
          %2056 = vmatprep.subr.bf16.mxu0 0
          %2057 = vmatpush1.bf16.msra.mxu0 0
          %2058 = vmatprep.subr.bf16.mxu0 0
          %2059 = vmatpush1.bf16.msra.mxu0 0
          %2060 = vmatprep.subr.bf16.mxu0 0
          %2061 = vmatpush1.bf16.msra.mxu0 0
          %2062 = vmatprep.subr.bf16.mxu0 0
          %2063 = vmatpush1.bf16.msra.mxu0 0
          %2064 = vmatprep.subr.bf16.mxu0 0
          %2065 = vmatpush1.bf16.msra.mxu0 0
          %2066 = vmatprep.mubr.bf16.mxu0 0
          %2067 = vmatmul.mubr.bf16.gmra.mrb[0].mxu0 %v1953
          %v2068 = vpop.f32.mrb[0].mxu0
          %v2069 = vadd.f32 0.0, %v2068
          %v2070 = vpop.f32.mrb[0].mxu0
          %v2071 = vadd.f32 0.0, %v2070
          %v2072 = vpop.f32.mrb[0].mxu0
          %v2073 = vadd.f32 0.0, %v2072
          %v2074 = vpop.f32.mrb[0].mxu0
          %v2075 = vadd.f32 0.0, %v2074
          %2076 = vdwg.mxu0
          %v2093 = vunpack.c.l.b16 %v1853
          %v2094 = vunpack.c.h.b16 %v1853
          %v2095 = vunpack.c.l.b16 %v1854
          %v2096 = vunpack.c.h.b16 %v1854
          %v2097 = vunpack.c.l.b16 %v1855
          %v2098 = vunpack.c.h.b16 %v1855
          %v2099 = vunpack.c.l.b16 %v1856
          %v2100 = vunpack.c.h.b16 %v1856
          %v2101 = vunpack.c.l.b16 %v1857
          %v2102 = vunpack.c.h.b16 %v1857
          %v2103 = vunpack.c.l.b16 %v1858
          %v2104 = vunpack.c.h.b16 %v1858
          %v2105 = vunpack.c.l.b16 %v1859
          %v2106 = vunpack.c.h.b16 %v1859
          %v2107 = vunpack.c.l.b16 %v1860
          %v2108 = vunpack.c.h.b16 %v1860
          %v2109 = vunpack.c.l.b16 %v1861
          %v2110 = vunpack.c.h.b16 %v1861
          %v2111 = vunpack.c.l.b16 %v1862
          %v2112 = vunpack.c.h.b16 %v1862
          %v2113 = vunpack.c.l.b16 %v1863
          %v2114 = vunpack.c.h.b16 %v1863
          %v2115 = vunpack.c.l.b16 %v1864
          %v2116 = vunpack.c.h.b16 %v1864
          %v2117 = vunpack.c.l.b16 %v1865
          %v2118 = vunpack.c.h.b16 %v1865
          %v2119 = vunpack.c.l.b16 %v1866
          %v2120 = vunpack.c.h.b16 %v1866
          %v2121 = vunpack.c.l.b16 %v1867
          %v2122 = vunpack.c.h.b16 %v1867
          %v2123 = vunpack.c.l.b16 %v1868
          %v2124 = vunpack.c.h.b16 %v1868
          %v2125 = vpack.c.b16 %v2095, %v2093
          %v2126 = vpack.c.b16 %v2096, %v2094
          %v2127 = vpack.c.b16 %v2099, %v2097
          %v2128 = vpack.c.b16 %v2100, %v2098
          %v2129 = vpack.c.b16 %v2103, %v2101
          %v2130 = vpack.c.b16 %v2104, %v2102
          %v2131 = vpack.c.b16 %v2107, %v2105
          %v2132 = vpack.c.b16 %v2108, %v2106
          %v2133 = vpack.c.b16 %v2111, %v2109
          %v2134 = vpack.c.b16 %v2112, %v2110
          %v2135 = vpack.c.b16 %v2115, %v2113
          %v2136 = vpack.c.b16 %v2116, %v2114
          %v2137 = vpack.c.b16 %v2119, %v2117
          %v2138 = vpack.c.b16 %v2120, %v2118
          %v2139 = vpack.c.b16 %v2123, %v2121
          %v2140 = vpack.c.b16 %v2124, %v2122
          %2157 = vmatprep.subr.bf16.mxu0 %v2126
          %2158 = vmatpush1.bf16.msra.mxu0 %v2125
          %2159 = vmatprep.subr.bf16.mxu0 %v2128
          %2160 = vmatpush1.bf16.msra.mxu0 %v2127
          %2161 = vmatprep.subr.bf16.mxu0 %v2130
          %2162 = vmatpush1.bf16.msra.mxu0 %v2129
          %2163 = vmatprep.subr.bf16.mxu0 %v2132
          %2164 = vmatpush1.bf16.msra.mxu0 %v2131
          %2165 = vmatprep.subr.bf16.mxu0 %v2134
          %2166 = vmatpush1.bf16.msra.mxu0 %v2133
          %2167 = vmatprep.subr.bf16.mxu0 %v2136
          %2168 = vmatpush1.bf16.msra.mxu0 %v2135
          %2169 = vmatprep.subr.bf16.mxu0 %v2138
          %2170 = vmatpush1.bf16.msra.mxu0 %v2137
          %2171 = vmatprep.subr.bf16.mxu0 %v2140
          %2172 = vmatpush1.bf16.msra.mxu0 %v2139
          %2173 = vmatprep.subr.bf16.mxu0 0
          %2174 = vmatpush1.bf16.msra.mxu0 0
          %2175 = vmatprep.subr.bf16.mxu0 0
          %2176 = vmatpush1.bf16.msra.mxu0 0
          %2177 = vmatprep.subr.bf16.mxu0 0
          %2178 = vmatpush1.bf16.msra.mxu0 0
          %2179 = vmatprep.subr.bf16.mxu0 0
          %2180 = vmatpush1.bf16.msra.mxu0 0
          %2181 = vmatprep.subr.bf16.mxu0 0
          %2182 = vmatpush1.bf16.msra.mxu0 0
          %2183 = vmatprep.subr.bf16.mxu0 0
          %2184 = vmatpush1.bf16.msra.mxu0 0
          %2185 = vmatprep.subr.bf16.mxu0 0
          %2186 = vmatpush1.bf16.msra.mxu0 0
          %2187 = vmatprep.subr.bf16.mxu0 0
          %2188 = vmatpush1.bf16.msra.mxu0 0
          %2189 = vmatprep.mubr.bf16.mxu0 0
          %2190 = vmatmul.mubr.bf16.gmra.mrb[0].mxu0 %v1945
          %v2191 = vpop.f32.mrb[0].mxu0
          %v2192 = vadd.f32 %v2069, %v2191
          %v2193 = vpop.f32.mrb[0].mxu0
          %v2194 = vadd.f32 %v2071, %v2193
          %v2195 = vpop.f32.mrb[0].mxu0
          %v2196 = vadd.f32 %v2073, %v2195
          %v2197 = vpop.f32.mrb[0].mxu0
          %v2198 = vadd.f32 %v2075, %v2197
          %2199 = vdwg.mxu0
          %v2200 = vpack.c.bf16 %v1847, %v1846
          %v2217 = vunpack.c.l.b16 %v1885
          %v2218 = vunpack.c.h.b16 %v1885
          %v2219 = vunpack.c.l.b16 %v1886
          %v2220 = vunpack.c.h.b16 %v1886
          %v2221 = vunpack.c.l.b16 %v1887
          %v2222 = vunpack.c.h.b16 %v1887
          %v2223 = vunpack.c.l.b16 %v1888
          %v2224 = vunpack.c.h.b16 %v1888
          %v2225 = vunpack.c.l.b16 %v1889
          %v2226 = vunpack.c.h.b16 %v1889
          %v2227 = vunpack.c.l.b16 %v1890
          %v2228 = vunpack.c.h.b16 %v1890
          %v2229 = vunpack.c.l.b16 %v1891
          %v2230 = vunpack.c.h.b16 %v1891
          %v2231 = vunpack.c.l.b16 %v1892
          %v2232 = vunpack.c.h.b16 %v1892
          %v2233 = vunpack.c.l.b16 %v1893
          %v2234 = vunpack.c.h.b16 %v1893
          %v2235 = vunpack.c.l.b16 %v1894
          %v2236 = vunpack.c.h.b16 %v1894
          %v2237 = vunpack.c.l.b16 %v1895
          %v2238 = vunpack.c.h.b16 %v1895
          %v2239 = vunpack.c.l.b16 %v1896
          %v2240 = vunpack.c.h.b16 %v1896
          %v2241 = vunpack.c.l.b16 %v1897
          %v2242 = vunpack.c.h.b16 %v1897
          %v2243 = vunpack.c.l.b16 %v1898
          %v2244 = vunpack.c.h.b16 %v1898
          %v2245 = vunpack.c.l.b16 %v1899
          %v2246 = vunpack.c.h.b16 %v1899
          %v2247 = vunpack.c.l.b16 %v1900
          %v2248 = vunpack.c.h.b16 %v1900
          %v2249 = vpack.c.b16 %v2219, %v2217
          %v2250 = vpack.c.b16 %v2220, %v2218
          %v2251 = vpack.c.b16 %v2223, %v2221
          %v2252 = vpack.c.b16 %v2224, %v2222
          %v2253 = vpack.c.b16 %v2227, %v2225
          %v2254 = vpack.c.b16 %v2228, %v2226
          %v2255 = vpack.c.b16 %v2231, %v2229
          %v2256 = vpack.c.b16 %v2232, %v2230
          %v2257 = vpack.c.b16 %v2235, %v2233
          %v2258 = vpack.c.b16 %v2236, %v2234
          %v2259 = vpack.c.b16 %v2239, %v2237
          %v2260 = vpack.c.b16 %v2240, %v2238
          %v2261 = vpack.c.b16 %v2243, %v2241
          %v2262 = vpack.c.b16 %v2244, %v2242
          %v2263 = vpack.c.b16 %v2247, %v2245
          %v2264 = vpack.c.b16 %v2248, %v2246
          %2281 = vmatprep.subr.bf16.mxu0 %v2250
          %2282 = vmatpush1.bf16.msra.mxu0 %v2249
          %2283 = vmatprep.subr.bf16.mxu0 %v2252
          %2284 = vmatpush1.bf16.msra.mxu0 %v2251
          %2285 = vmatprep.subr.bf16.mxu0 %v2254
          %2286 = vmatpush1.bf16.msra.mxu0 %v2253
          %2287 = vmatprep.subr.bf16.mxu0 %v2256
          %2288 = vmatpush1.bf16.msra.mxu0 %v2255
          %2289 = vmatprep.subr.bf16.mxu0 %v2258
          %2290 = vmatpush1.bf16.msra.mxu0 %v2257
          %2291 = vmatprep.subr.bf16.mxu0 %v2260
          %2292 = vmatpush1.bf16.msra.mxu0 %v2259
          %2293 = vmatprep.subr.bf16.mxu0 %v2262
          %2294 = vmatpush1.bf16.msra.mxu0 %v2261
          %2295 = vmatprep.subr.bf16.mxu0 %v2264
          %2296 = vmatpush1.bf16.msra.mxu0 %v2263
          %2297 = vmatprep.subr.bf16.mxu0 0
          %2298 = vmatpush1.bf16.msra.mxu0 0
          %2299 = vmatprep.subr.bf16.mxu0 0
          %2300 = vmatpush1.bf16.msra.mxu0 0
          %2301 = vmatprep.subr.bf16.mxu0 0
          %2302 = vmatpush1.bf16.msra.mxu0 0
          %2303 = vmatprep.subr.bf16.mxu0 0
          %2304 = vmatpush1.bf16.msra.mxu0 0
          %2305 = vmatprep.subr.bf16.mxu0 0
          %2306 = vmatpush1.bf16.msra.mxu0 0
          %2307 = vmatprep.subr.bf16.mxu0 0
          %2308 = vmatpush1.bf16.msra.mxu0 0
          %2309 = vmatprep.subr.bf16.mxu0 0
          %2310 = vmatpush1.bf16.msra.mxu0 0
          %2311 = vmatprep.subr.bf16.mxu0 0
          %2312 = vmatpush1.bf16.msra.mxu0 0
          %2313 = vmatprep.mubr.bf16.mxu0 0
          %2314 = vmatmul.mubr.bf16.gmra.mrb[0].mxu0 %v2200
          %v2315 = vpop.f32.mrb[0].mxu0
          %v2316 = vadd.f32 0.0, %v2315
          %v2317 = vpop.f32.mrb[0].mxu0
          %v2318 = vadd.f32 0.0, %v2317
          %v2319 = vpop.f32.mrb[0].mxu0
          %v2320 = vadd.f32 0.0, %v2319
          %v2321 = vpop.f32.mrb[0].mxu0
          %v2322 = vadd.f32 0.0, %v2321
          %2323 = vdwg.mxu0
          %v2324 = vadd.f32 %v2192, %v2316
          %v2325 = vadd.f32 %v2194, %v2318
          %v2326 = vadd.f32 %v2196, %v2320
          %v2327 = vadd.f32 %v2198, %v2322
          %vm2328 = vcmask 1046528
          %v2329 = vrot.slane %v1846, 1
          %v2330 = vrot.slane %v1847, 1
          %v2331 = vsel %vm2328, %v2329, %v2330
          %v2334 = vsel %vm2328, %v2330, 0.0
          %v2335 = vpack.c.bf16 %v2334, %v2331
          %v2352 = vunpack.c.l.b16 %v1901
          %v2353 = vunpack.c.h.b16 %v1901
          %v2354 = vunpack.c.l.b16 %v1902
          %v2355 = vunpack.c.h.b16 %v1902
          %v2356 = vunpack.c.l.b16 %v1903
          %v2357 = vunpack.c.h.b16 %v1903
          %v2358 = vunpack.c.l.b16 %v1904
          %v2359 = vunpack.c.h.b16 %v1904
          %v2360 = vunpack.c.l.b16 %v1905
          %v2361 = vunpack.c.h.b16 %v1905
          %v2362 = vunpack.c.l.b16 %v1906
          %v2363 = vunpack.c.h.b16 %v1906
          %v2364 = vunpack.c.l.b16 %v1907
          %v2365 = vunpack.c.h.b16 %v1907
          %v2366 = vunpack.c.l.b16 %v1908
          %v2367 = vunpack.c.h.b16 %v1908
          %v2368 = vunpack.c.l.b16 %v1909
          %v2369 = vunpack.c.h.b16 %v1909
          %v2370 = vunpack.c.l.b16 %v1910
          %v2371 = vunpack.c.h.b16 %v1910
          %v2372 = vunpack.c.l.b16 %v1911
          %v2373 = vunpack.c.h.b16 %v1911
          %v2374 = vunpack.c.l.b16 %v1912
          %v2375 = vunpack.c.h.b16 %v1912
          %v2376 = vunpack.c.l.b16 %v1913
          %v2377 = vunpack.c.h.b16 %v1913
          %v2378 = vunpack.c.l.b16 %v1914
          %v2379 = vunpack.c.h.b16 %v1914
          %v2380 = vunpack.c.l.b16 %v1915
          %v2381 = vunpack.c.h.b16 %v1915
          %v2382 = vunpack.c.l.b16 %v1916
          %v2383 = vunpack.c.h.b16 %v1916
          %v2384 = vpack.c.b16 %v2354, %v2352
          %v2385 = vpack.c.b16 %v2355, %v2353
          %v2386 = vpack.c.b16 %v2358, %v2356
          %v2387 = vpack.c.b16 %v2359, %v2357
          %v2388 = vpack.c.b16 %v2362, %v2360
          %v2389 = vpack.c.b16 %v2363, %v2361
          %v2390 = vpack.c.b16 %v2366, %v2364
          %v2391 = vpack.c.b16 %v2367, %v2365
          %v2392 = vpack.c.b16 %v2370, %v2368
          %v2393 = vpack.c.b16 %v2371, %v2369
          %v2394 = vpack.c.b16 %v2374, %v2372
          %v2395 = vpack.c.b16 %v2375, %v2373
          %v2396 = vpack.c.b16 %v2378, %v2376
          %v2397 = vpack.c.b16 %v2379, %v2377
          %v2398 = vpack.c.b16 %v2382, %v2380
          %v2399 = vpack.c.b16 %v2383, %v2381
          %2416 = vmatprep.subr.bf16.mxu0 %v2385
          %2417 = vmatpush1.bf16.msra.mxu0 %v2384
          %2418 = vmatprep.subr.bf16.mxu0 %v2387
          %2419 = vmatpush1.bf16.msra.mxu0 %v2386
          %2420 = vmatprep.subr.bf16.mxu0 %v2389
          %2421 = vmatpush1.bf16.msra.mxu0 %v2388
          %2422 = vmatprep.subr.bf16.mxu0 %v2391
          %2423 = vmatpush1.bf16.msra.mxu0 %v2390
          %2424 = vmatprep.subr.bf16.mxu0 %v2393
          %2425 = vmatpush1.bf16.msra.mxu0 %v2392
          %2426 = vmatprep.subr.bf16.mxu0 %v2395
          %2427 = vmatpush1.bf16.msra.mxu0 %v2394
          %2428 = vmatprep.subr.bf16.mxu0 %v2397
          %2429 = vmatpush1.bf16.msra.mxu0 %v2396
          %2430 = vmatprep.subr.bf16.mxu0 %v2399
          %2431 = vmatpush1.bf16.msra.mxu0 %v2398
          %2432 = vmatprep.subr.bf16.mxu0 0
          %2433 = vmatpush1.bf16.msra.mxu0 0
          %2434 = vmatprep.subr.bf16.mxu0 0
          %2435 = vmatpush1.bf16.msra.mxu0 0
          %2436 = vmatprep.subr.bf16.mxu0 0
          %2437 = vmatpush1.bf16.msra.mxu0 0
          %2438 = vmatprep.subr.bf16.mxu0 0
          %2439 = vmatpush1.bf16.msra.mxu0 0
          %2440 = vmatprep.subr.bf16.mxu0 0
          %2441 = vmatpush1.bf16.msra.mxu0 0
          %2442 = vmatprep.subr.bf16.mxu0 0
          %2443 = vmatpush1.bf16.msra.mxu0 0
          %2444 = vmatprep.subr.bf16.mxu0 0
          %2445 = vmatpush1.bf16.msra.mxu0 0
          %2446 = vmatprep.subr.bf16.mxu0 0
          %2447 = vmatpush1.bf16.msra.mxu0 0
          %2448 = vmatprep.mubr.bf16.mxu0 0
          %2449 = vmatmul.mubr.bf16.gmra.mrb[0].mxu0 %v2335
          %v2450 = vpop.f32.mrb[0].mxu0
          %v2451 = vadd.f32 0.0, %v2450
          %v2452 = vpop.f32.mrb[0].mxu0
          %v2453 = vadd.f32 0.0, %v2452
          %v2454 = vpop.f32.mrb[0].mxu0
          %v2455 = vadd.f32 0.0, %v2454
          %v2456 = vpop.f32.mrb[0].mxu0
          %v2457 = vadd.f32 0.0, %v2456
          %2458 = vdwg.mxu0
          %v2459 = vadd.f32 %v2324, %v2451
          %v2460 = vadd.f32 %v2325, %v2453
          %v2461 = vadd.f32 %v2326, %v2455
          %v2462 = vadd.f32 %v2327, %v2457
          %vm2463 = vcmask 1045504
          %v2464 = vrot.slane %v1846, 2
          %v2465 = vrot.slane %v1847, 2
          %v2466 = vsel %vm2463, %v2464, %v2465
          %v2469 = vsel %vm2463, %v2465, 0.0
          %v2470 = vpack.c.bf16 %v2469, %v2466
          %v2487 = vunpack.c.l.b16 %v1917
          %v2488 = vunpack.c.h.b16 %v1917
          %v2489 = vunpack.c.l.b16 %v1918
          %v2490 = vunpack.c.h.b16 %v1918
          %v2491 = vunpack.c.l.b16 %v1919
          %v2492 = vunpack.c.h.b16 %v1919
          %v2493 = vunpack.c.l.b16 %v1920
          %v2494 = vunpack.c.h.b16 %v1920
          %v2495 = vunpack.c.l.b16 %v1921
          %v2496 = vunpack.c.h.b16 %v1921
          %v2497 = vunpack.c.l.b16 %v1922
          %v2498 = vunpack.c.h.b16 %v1922
          %v2499 = vunpack.c.l.b16 %v1923
          %v2500 = vunpack.c.h.b16 %v1923
          %v2501 = vunpack.c.l.b16 %v1924
          %v2502 = vunpack.c.h.b16 %v1924
          %v2503 = vunpack.c.l.b16 %v1925
          %v2504 = vunpack.c.h.b16 %v1925
          %v2505 = vunpack.c.l.b16 %v1926
          %v2506 = vunpack.c.h.b16 %v1926
          %v2507 = vunpack.c.l.b16 %v1927
          %v2508 = vunpack.c.h.b16 %v1927
          %v2509 = vunpack.c.l.b16 %v1928
          %v2510 = vunpack.c.h.b16 %v1928
          %v2511 = vunpack.c.l.b16 %v1929
          %v2512 = vunpack.c.h.b16 %v1929
          %v2513 = vunpack.c.l.b16 %v1930
          %v2514 = vunpack.c.h.b16 %v1930
          %v2515 = vunpack.c.l.b16 %v1931
          %v2516 = vunpack.c.h.b16 %v1931
          %v2517 = vunpack.c.l.b16 %v1932
          %v2518 = vunpack.c.h.b16 %v1932
          %v2519 = vpack.c.b16 %v2489, %v2487
          %v2520 = vpack.c.b16 %v2490, %v2488
          %v2521 = vpack.c.b16 %v2493, %v2491
          %v2522 = vpack.c.b16 %v2494, %v2492
          %v2523 = vpack.c.b16 %v2497, %v2495
          %v2524 = vpack.c.b16 %v2498, %v2496
          %v2525 = vpack.c.b16 %v2501, %v2499
          %v2526 = vpack.c.b16 %v2502, %v2500
          %v2527 = vpack.c.b16 %v2505, %v2503
          %v2528 = vpack.c.b16 %v2506, %v2504
          %v2529 = vpack.c.b16 %v2509, %v2507
          %v2530 = vpack.c.b16 %v2510, %v2508
          %v2531 = vpack.c.b16 %v2513, %v2511
          %v2532 = vpack.c.b16 %v2514, %v2512
          %v2533 = vpack.c.b16 %v2517, %v2515
          %v2534 = vpack.c.b16 %v2518, %v2516
          %2551 = vmatprep.subr.bf16.mxu0 %v2520
          %2552 = vmatpush1.bf16.msra.mxu0 %v2519
          %2553 = vmatprep.subr.bf16.mxu0 %v2522
          %2554 = vmatpush1.bf16.msra.mxu0 %v2521
          %2555 = vmatprep.subr.bf16.mxu0 %v2524
          %2556 = vmatpush1.bf16.msra.mxu0 %v2523
          %2557 = vmatprep.subr.bf16.mxu0 %v2526
          %2558 = vmatpush1.bf16.msra.mxu0 %v2525
          %2559 = vmatprep.subr.bf16.mxu0 %v2528
          %2560 = vmatpush1.bf16.msra.mxu0 %v2527
          %2561 = vmatprep.subr.bf16.mxu0 %v2530
          %2562 = vmatpush1.bf16.msra.mxu0 %v2529
          %2563 = vmatprep.subr.bf16.mxu0 %v2532
          %2564 = vmatpush1.bf16.msra.mxu0 %v2531
          %2565 = vmatprep.subr.bf16.mxu0 %v2534
          %2566 = vmatpush1.bf16.msra.mxu0 %v2533
          %2567 = vmatprep.subr.bf16.mxu0 0
          %2568 = vmatpush1.bf16.msra.mxu0 0
          %2569 = vmatprep.subr.bf16.mxu0 0
          %2570 = vmatpush1.bf16.msra.mxu0 0
          %2571 = vmatprep.subr.bf16.mxu0 0
          %2572 = vmatpush1.bf16.msra.mxu0 0
          %2573 = vmatprep.subr.bf16.mxu0 0
          %2574 = vmatpush1.bf16.msra.mxu0 0
          %2575 = vmatprep.subr.bf16.mxu0 0
          %2576 = vmatpush1.bf16.msra.mxu0 0
          %2577 = vmatprep.subr.bf16.mxu0 0
          %2578 = vmatpush1.bf16.msra.mxu0 0
          %2579 = vmatprep.subr.bf16.mxu0 0
          %2580 = vmatpush1.bf16.msra.mxu0 0
          %2581 = vmatprep.subr.bf16.mxu0 0
          %2582 = vmatpush1.bf16.msra.mxu0 0
          %2583 = vmatprep.mubr.bf16.mxu0 0
          %2584 = vmatmul.mubr.bf16.gmra.mrb[0].mxu0 %v2470
          %v2585 = vpop.f32.mrb[0].mxu0
          %v2586 = vadd.f32 0.0, %v2585
          %v2587 = vpop.f32.mrb[0].mxu0
          %v2588 = vadd.f32 0.0, %v2587
          %v2589 = vpop.f32.mrb[0].mxu0
          %v2590 = vadd.f32 0.0, %v2589
          %v2591 = vpop.f32.mrb[0].mxu0
          %v2592 = vadd.f32 0.0, %v2591
          %2593 = vdwg.mxu0
          %v2594 = vadd.f32 %v2459, %v2586
          %v2595 = vadd.f32 %v2460, %v2588
          %v2596 = vadd.f32 %v2461, %v2590
          %v2597 = vadd.f32 %v2462, %v2592
          %v2599 = vlaneseq
          %v2600 = vshrl.u32 %v2599, 7
          %v2601 = vsub.s32 0, %v2600
          %v2602 = vrot.slane %v1935, %v2601
          %v2603 = vlaneseq
          %v2604 = vshrl.u32 %v2603, 7
          %v2605 = vsub.s32 1, %v2604
          %v2606 = vrot.slane %v1935, %v2605
          %v2609 = vadd.f32 %v2594, %v2602
          %v2610 = vadd.f32 %v2595, %v2606
          %v2611 = vadd.f32 %v2596, %v2602
          %v2612 = vadd.f32 %v2597, %v2606
          %v2613 = vtanh.pop %v2609
          %v2614 = vtanh.pop %v2611
          %v2615 = vxor.u32 %v2610, 2147483648
          %v2616 = vxor.u32 %v2612, 2147483648
          %v2617 = vmul.f32 %v2615, 1.442695
          %v2618 = vpow.pop %v2617
          %v2619 = vmul.f32 %v2616, 1.442695
          %v2620 = vpow.pop %v2619
          %v2621 = vadd.f32 %v2618, 1.0
          %v2622 = vadd.f32 %v2620, 1.0
          %v2623 = vrcp.pop %v2621
          %v2624 = vmul.f32 1.0, %v2623
          %v2625 = vrcp.pop %v2622
          %v2626 = vmul.f32 1.0, %v2625
          %v2627 = vmul.f32 %v2613, %v2624
          %v2628 = vmul.f32 %v2614, %v2626
          %v2629 = vpack.c.bf16 %v2628, %v2627
          %s2630 = smul.u32 %s1841, 32
          %s2631 = smul.addr %s2630, 4
          %s2632 = scalar_lea.vmem [#allocation32], %s2631
          %v2633 = vld [vmem:[%s2632] sm:$0xff]
          %v2634 = vld [vmem:[%s2632 + $0x8] sm:$0xff]
          %v2635 = vld [vmem:[%s2632 + $0x10] sm:$0xff]
          %v2636 = vld [vmem:[%s2632 + $0x18] sm:$0xff]
          %v2637 = vld [vmem:[%s2632 + $0x20] sm:$0xff]
          %v2638 = vld [vmem:[%s2632 + $0x28] sm:$0xff]
          %v2639 = vld [vmem:[%s2632 + $0x30] sm:$0xff]
          %v2640 = vld [vmem:[%s2632 + $0x38] sm:$0xff]
          %v2641 = vld [vmem:[%s2632 + $0x40] sm:$0xff]
          %v2642 = vld [vmem:[%s2632 + $0x48] sm:$0xff]
          %v2643 = vld [vmem:[%s2632 + $0x50] sm:$0xff]
          %v2644 = vld [vmem:[%s2632 + $0x58] sm:$0xff]
          %v2645 = vld [vmem:[%s2632 + $0x60] sm:$0xff]
          %v2646 = vld [vmem:[%s2632 + $0x68] sm:$0xff]
          %v2647 = vld [vmem:[%s2632 + $0x70] sm:$0xff]
          %v2648 = vld [vmem:[%s2632 + $0x78] sm:$0xff]
          %s2649 = scalar_lea.vmem [#allocation34], %s1933
          %v2650 = vld [vmem:[%s2649] sm:$0x3]
          %v2652 = vlaneseq
          %v2653 = vshrl.u32 %v2652, 7
          %v2654 = vsub.s32 0, %v2653
          %v2655 = vrot.slane %v2650, %v2654
          %v2656 = vlaneseq
          %v2657 = vshrl.u32 %v2656, 7
          %v2658 = vsub.s32 1, %v2657
          %v2659 = vrot.slane %v2650, %v2658
          %v2678 = vunpack.c.l.b16 %v2633
          %v2679 = vunpack.c.h.b16 %v2633
          %v2680 = vunpack.c.l.b16 %v2634
          %v2681 = vunpack.c.h.b16 %v2634
          %v2682 = vunpack.c.l.b16 %v2635
          %v2683 = vunpack.c.h.b16 %v2635
          %v2684 = vunpack.c.l.b16 %v2636
          %v2685 = vunpack.c.h.b16 %v2636
          %v2686 = vunpack.c.l.b16 %v2637
          %v2687 = vunpack.c.h.b16 %v2637
          %v2688 = vunpack.c.l.b16 %v2638
          %v2689 = vunpack.c.h.b16 %v2638
          %v2690 = vunpack.c.l.b16 %v2639
          %v2691 = vunpack.c.h.b16 %v2639
          %v2692 = vunpack.c.l.b16 %v2640
          %v2693 = vunpack.c.h.b16 %v2640
          %v2694 = vunpack.c.l.b16 %v2641
          %v2695 = vunpack.c.h.b16 %v2641
          %v2696 = vunpack.c.l.b16 %v2642
          %v2697 = vunpack.c.h.b16 %v2642
          %v2698 = vunpack.c.l.b16 %v2643
          %v2699 = vunpack.c.h.b16 %v2643
          %v2700 = vunpack.c.l.b16 %v2644
          %v2701 = vunpack.c.h.b16 %v2644
          %v2702 = vunpack.c.l.b16 %v2645
          %v2703 = vunpack.c.h.b16 %v2645
          %v2704 = vunpack.c.l.b16 %v2646
          %v2705 = vunpack.c.h.b16 %v2646
          %v2706 = vunpack.c.l.b16 %v2647
          %v2707 = vunpack.c.h.b16 %v2647
          %v2708 = vunpack.c.l.b16 %v2648
          %v2709 = vunpack.c.h.b16 %v2648
          %v2710 = vpack.c.b16 %v2680, %v2678
          %v2711 = vpack.c.b16 %v2681, %v2679
          %v2712 = vpack.c.b16 %v2684, %v2682
          %v2713 = vpack.c.b16 %v2685, %v2683
          %v2714 = vpack.c.b16 %v2688, %v2686
          %v2715 = vpack.c.b16 %v2689, %v2687
          %v2716 = vpack.c.b16 %v2692, %v2690
          %v2717 = vpack.c.b16 %v2693, %v2691
          %v2718 = vpack.c.b16 %v2696, %v2694
          %v2719 = vpack.c.b16 %v2697, %v2695
          %v2720 = vpack.c.b16 %v2700, %v2698
          %v2721 = vpack.c.b16 %v2701, %v2699
          %v2722 = vpack.c.b16 %v2704, %v2702
          %v2723 = vpack.c.b16 %v2705, %v2703
          %v2724 = vpack.c.b16 %v2708, %v2706
          %v2725 = vpack.c.b16 %v2709, %v2707
          %2742 = vmatprep.subr.bf16.mxu0 %v2711
          %2743 = vmatpush1.bf16.msra.mxu0 %v2710
          %2744 = vmatprep.subr.bf16.mxu0 %v2713
          %2745 = vmatpush1.bf16.msra.mxu0 %v2712
          %2746 = vmatprep.subr.bf16.mxu0 %v2715
          %2747 = vmatpush1.bf16.msra.mxu0 %v2714
          %2748 = vmatprep.subr.bf16.mxu0 %v2717
          %2749 = vmatpush1.bf16.msra.mxu0 %v2716
          %2750 = vmatprep.subr.bf16.mxu0 %v2719
          %2751 = vmatpush1.bf16.msra.mxu0 %v2718
          %2752 = vmatprep.subr.bf16.mxu0 %v2721
          %2753 = vmatpush1.bf16.msra.mxu0 %v2720
          %2754 = vmatprep.subr.bf16.mxu0 %v2723
          %2755 = vmatpush1.bf16.msra.mxu0 %v2722
          %2756 = vmatprep.subr.bf16.mxu0 %v2725
          %2757 = vmatpush1.bf16.msra.mxu0 %v2724
          %2758 = vmatprep.subr.bf16.mxu0 0
          %2759 = vmatpush1.bf16.msra.mxu0 0
          %2760 = vmatprep.subr.bf16.mxu0 0
          %2761 = vmatpush1.bf16.msra.mxu0 0
          %2762 = vmatprep.subr.bf16.mxu0 0
          %2763 = vmatpush1.bf16.msra.mxu0 0
          %2764 = vmatprep.subr.bf16.mxu0 0
          %2765 = vmatpush1.bf16.msra.mxu0 0
          %2766 = vmatprep.subr.bf16.mxu0 0
          %2767 = vmatpush1.bf16.msra.mxu0 0
          %2768 = vmatprep.subr.bf16.mxu0 0
          %2769 = vmatpush1.bf16.msra.mxu0 0
          %2770 = vmatprep.subr.bf16.mxu0 0
          %2771 = vmatpush1.bf16.msra.mxu0 0
          %2772 = vmatprep.subr.bf16.mxu0 0
          %2773 = vmatpush1.bf16.msra.mxu0 0
          %2774 = vmatprep.mubr.bf16.mxu0 0
          %2775 = vmatmul.mubr.bf16.gmra.mrb[0].mxu0 %v2629
          %v2776 = vpop.f32.mrb[0].mxu0
          %v2777 = vadd.f32 %v2655, %v2776
          %v2778 = vpop.f32.mrb[0].mxu0
          %v2779 = vadd.f32 %v2659, %v2778
          %v2780 = vpop.f32.mrb[0].mxu0
          %v2781 = vadd.f32 %v2655, %v2780
          %v2782 = vpop.f32.mrb[0].mxu0
          %v2783 = vadd.f32 %v2659, %v2782
          %2784 = vdwg.mxu0
          %v2785 = vadd.f32 %v1846, %v2777
          %v2786 = vadd.f32 %v1847, %v2781
          %v2787 = vmul.f32 %v2785, %v1130
          %v2788 = vmul.f32 %v2786, %v1135
          %v2789 = vadd.f32 %v1848, %v2779
          %v2790 = vadd.f32 %v1849, %v2783
        $region216: #{tpu_custom_call.1} parent=111 // loop_footer
          %s1845 = sadd.s32 1, %s1841
        $region217: #{tpu_custom_call.1} parent=111 // loop_footer_branch
          %1840 = sbr.rel target = $region213
        $region218: #{tpu_custom_call.1} parent=111 // loop_exit
          _
        %v2791 = vmul.f32 %v1848, %v1130
        %v2792 = vmul.f32 %v1849, %v1135
        %v2793 = vpack.c.bf16 %v2792, %v2791
        %v2794 = vld [vmem:[#allocation35] sm:$0xf]
        %v2795 = vld [vmem:[#allocation35 + $0x4] sm:$0xf]
        %v2796 = vld [vmem:[#allocation35 + $0x8] sm:$0xf]
        %v2797 = vld [vmem:[#allocation35 + $0xc] sm:$0xf]
        %v2798 = vld [vmem:[#allocation35 + $0x10] sm:$0xf]
        %v2799 = vld [vmem:[#allocation35 + $0x14] sm:$0xf]
        %v2800 = vld [vmem:[#allocation35 + $0x18] sm:$0xf]
        %v2801 = vld [vmem:[#allocation35 + $0x1c] sm:$0xf]
        %v2802 = vld [vmem:[#allocation35 + $0x20] sm:$0xf]
        %v2803 = vld [vmem:[#allocation35 + $0x24] sm:$0xf]
        %v2804 = vld [vmem:[#allocation35 + $0x28] sm:$0xf]
        %v2805 = vld [vmem:[#allocation35 + $0x2c] sm:$0xf]
        %v2806 = vld [vmem:[#allocation35 + $0x30] sm:$0xf]
        %v2807 = vld [vmem:[#allocation35 + $0x34] sm:$0xf]
        %v2808 = vld [vmem:[#allocation35 + $0x38] sm:$0xf]
        %v2809 = vld [vmem:[#allocation35 + $0x3c] sm:$0xf]
        %v2810 = vld [vmem:[#allocation37] sm:$0x1]
        %v2812 = vlaneseq
        %v2813 = vshrl.u32 %v2812, 7
        %v2814 = vsub.s32 0, %v2813
        %v2815 = vrot.slane %v2810, %v2814
        %v2833 = vunpack.c.l.b16 %v2794
        %v2834 = vunpack.c.l.b16 %v2795
        %v2835 = vunpack.c.l.b16 %v2796
        %v2836 = vunpack.c.l.b16 %v2797
        %v2837 = vunpack.c.l.b16 %v2798
        %v2838 = vunpack.c.l.b16 %v2799
        %v2839 = vunpack.c.l.b16 %v2800
        %v2840 = vunpack.c.l.b16 %v2801
        %v2841 = vunpack.c.l.b16 %v2802
        %v2842 = vunpack.c.l.b16 %v2803
        %v2843 = vunpack.c.l.b16 %v2804
        %v2844 = vunpack.c.l.b16 %v2805
        %v2845 = vunpack.c.l.b16 %v2806
        %v2846 = vunpack.c.l.b16 %v2807
        %v2847 = vunpack.c.l.b16 %v2808
        %v2848 = vunpack.c.l.b16 %v2809
        %v2849 = vpack.c.b16 %v2834, %v2833
        %v2850 = vpack.c.b16 %v2836, %v2835
        %v2851 = vpack.c.b16 %v2838, %v2837
        %v2852 = vpack.c.b16 %v2840, %v2839
        %v2853 = vpack.c.b16 %v2842, %v2841
        %v2854 = vpack.c.b16 %v2844, %v2843
        %v2855 = vpack.c.b16 %v2846, %v2845
        %v2856 = vpack.c.b16 %v2848, %v2847
        %2865 = vmatprep.subr.bf16.mxu0 0
        %2866 = vmatpush1.bf16.msra.mxu0 %v2849
        %2867 = vmatprep.subr.bf16.mxu0 0
        %2868 = vmatpush1.bf16.msra.mxu0 %v2850
        %2869 = vmatprep.subr.bf16.mxu0 0
        %2870 = vmatpush1.bf16.msra.mxu0 %v2851
        %2871 = vmatprep.subr.bf16.mxu0 0
        %2872 = vmatpush1.bf16.msra.mxu0 %v2852
        %2873 = vmatprep.subr.bf16.mxu0 0
        %2874 = vmatpush1.bf16.msra.mxu0 %v2853
        %2875 = vmatprep.subr.bf16.mxu0 0
        %2876 = vmatpush1.bf16.msra.mxu0 %v2854
        %2877 = vmatprep.subr.bf16.mxu0 0
        %2878 = vmatpush1.bf16.msra.mxu0 %v2855
        %2879 = vmatprep.subr.bf16.mxu0 0
        %2880 = vmatpush1.bf16.msra.mxu0 %v2856
        %2881 = vmatprep.subr.bf16.mxu0 0
        %2882 = vmatpush1.bf16.msra.mxu0 0
        %2883 = vmatprep.subr.bf16.mxu0 0
        %2884 = vmatpush1.bf16.msra.mxu0 0
        %2885 = vmatprep.subr.bf16.mxu0 0
        %2886 = vmatpush1.bf16.msra.mxu0 0
        %2887 = vmatprep.subr.bf16.mxu0 0
        %2888 = vmatpush1.bf16.msra.mxu0 0
        %2889 = vmatprep.subr.bf16.mxu0 0
        %2890 = vmatpush1.bf16.msra.mxu0 0
        %2891 = vmatprep.subr.bf16.mxu0 0
        %2892 = vmatpush1.bf16.msra.mxu0 0
        %2893 = vmatprep.subr.bf16.mxu0 0
        %2894 = vmatpush1.bf16.msra.mxu0 0
        %2895 = vmatprep.subr.bf16.mxu0 0
        %2896 = vmatpush1.bf16.msra.mxu0 0
        %2897 = vmatprep.mubr.bf16.mxu0 0
        %2898 = vmatmul.mubr.bf16.gmra.mrb[0].mxu0 %v2793
        %v2899 = vpop.f32.mrb[0].mxu0
        %v2900 = vadd.f32 %v2815, %v2899
        %v2901 = vpop.f32.mrb[0].mxu0
        %v2902 = vpop.f32.mrb[0].mxu0
        %v2903 = vadd.f32 %v2815, %v2902
        %v2904 = vpop.f32.mrb[0].mxu0
        %2905 = vdwg.mxu0
        %v2906 = vmul.f32 %v2900, %v1130
        %v2907 = vmul.f32 %v2903, %v1135
        %v2908 = vmul.f32 %v2906, 1.442695
        %v2909 = vpow.pop %v2908
        %v2910 = vmul.f32 %v2907, 1.442695
        %v2911 = vpow.pop %v2910
        %v2912 = vmul.f32 %v1122, %v2909
        %v2913 = vmul.f32 %v1123, %v2911
        %v2914 = vmul.f32 %v2912, %v1130
        %v2915 = vmul.f32 %v2913, %v1135
        %2918 = vrot.lane.b32.xlu0 %v2914, 120
        %v2919 = vpop.permute.xlu0 %2918
        %2920 = vrot.lane.b32.xlu0 %v2915, 120
        %v2921 = vpop.permute.xlu0 %2920
        %v2924 = vadd.f32 %v2906, %v2919
        %v2925 = vadd.f32 %v2907, %v2921
        %2926 = vst.msk [vmem:[%s1114] sm:$0xff] %vm1789, %v1122
        %2927 = vst.msk [vmem:[%s1114 + $0x8] sm:$0xff] %vm1789, %v1123
        %2930 = vrot.lane.b32.xlu0 %v2924, 8
        %v2931 = vpop.permute.xlu0 %2930
        %2932 = vrot.lane.b32.xlu0 %v2925, 8
        %v2933 = vpop.permute.xlu0 %2932
        %vm2936 = vcmask 130112
        %2937 = vst.msk [vmem:[%s1114] sm:$0xff] %vm2936, %v2931
        %2938 = vst.msk [vmem:[%s1114 + $0x8] sm:$0xff] %vm2936, %v2933
        %v2939 = vsel %vm2936, %v2906, 0.0
        %v2940 = vsel %vm2936, %v2907, 0.0
        %v2941 = vadd.f32 %v2939, %v2940
        %v2942 = vrot.slane %v2941, 4
        %v2943 = vadd.f32 %v2941, %v2942
        %v2944 = vrot.slane %v2943, 2
        %v2945 = vadd.f32 %v2943, %v2944
        %v2946 = vrot.slane %v2945, 1
        %v2947 = vadd.f32 %v2945, %v2946
        %2949 = vrot.lane.b32.xlu0 %v2947, 120
        %v2950 = vpop.permute.xlu0 %2949
        %vm2952 = vcmask 57344
        %2953 = vst.msk [vmem:[%s1120] sm:$0x1] %vm2952, %v2950
        %s2954 = sand.u32 %s564, 1
        %s2955 = scalar_lea.sflag [#allocation4], %s2954
        %s2956 = sand.u32 %s564, 1
        %s2957 = smul.addr %s2956, 16
        %s2958 = scalar_lea.vmem [#allocation38], %s2957
        %s2959 = sand.u32 %s590, 1
        %s2960 = scalar_lea.sflag [#allocation40], %s2959
        %s2961 = sand.u32 %s590, 1
        %s2962 = scalar_lea.vmem [#allocation39], %s2961
        // Predicated region
        $region219: #{tpu_custom_call.1} parent=111 // pred_check
          %p2963 = pneg %p574
        $region220: #{tpu_custom_call.1} parent=111 // pred_check_branch
          %2965 = sbr.rel (%p2963) target = $region222
        $region221: #{tpu_custom_call.1} parent=111 // pred_region
          %s2967 = ssub.s32 256, 256
          %2968 = vsyncadd %s2955, %s2967
          %s2969 = smul.addr %s58, 2
          %s2970 = smul.addr %s2969, 128
          %s2971 = scalar_lea.hbm %s23, %s2970
          %s2972 = sshll.u32 %s2958, 4
          %s2973 = int_to_ptr.vmem [resolvable:$true] %s2972
          %2978 = dma.vmem_to_hbm [thread:$0]  %s2973, 256, %s2971, %s2955, 128, 128, 8
        $region222: #{tpu_custom_call.1} parent=111 // pred_fallthru
          _
        // Predicated region
        $region223: #{tpu_custom_call.1} parent=111 // pred_check
          %p2979 = pneg %p600
        $region224: #{tpu_custom_call.1} parent=111 // pred_check_branch
          %2981 = sbr.rel (%p2979) target = $region226
        $region225: #{tpu_custom_call.1} parent=111 // pred_region
          %s2983 = ssub.s32 16, 16
          %2984 = vsyncadd %s2960, %s2983
          %s2985 = smul.addr %s58, 16
          %s2986 = scalar_lea.hbm %s24, %s2985
          %s2988 = sshll.u32 %s2962, 4
          %s2989 = int_to_ptr.vmem [resolvable:$true] %s2988
          %2991 = dma.vmem_to_hbm [thread:$0]  %s2989, 16, %s2986, %s2960
        $region226: #{tpu_custom_call.1} parent=111 // pred_fallthru
          _
      $region112: #{tpu_custom_call.1} parent=5 // pred_fallthru
        _
      %p2992 = scmp.le.s32.totalorder 2, %s53
      // Predicated region
      $region227: #{tpu_custom_call.1} parent=5 // pred_check
        %p2993 = pneg %p2992
      $region228: #{tpu_custom_call.1} parent=5 // pred_check_branch
        %2995 = sbr.rel (%p2993) target = $region230
      $region229: #{tpu_custom_call.1} parent=5 // pred_region
        %s2996 = ssub.s32 %s53, 2
        // Predicated region
        $region231: #{tpu_custom_call.1} parent=229 // pred_check
          %p2997 = pneg %p580
        $region232: #{tpu_custom_call.1} parent=229 // pred_check_branch
          %2999 = sbr.rel (%p2997) target = $region234
        $region233: #{tpu_custom_call.1} parent=229 // pred_region
          %s3000 = sand.u32 %s565, 1
          %s3001 = scalar_lea.sflag [#allocation4], %s3000
          %s3002 = sand.u32 %s565, 1
          %s3003 = smul.addr %s3002, 16
          %s3004 = scalar_lea.vmem [#allocation38], %s3003
          %3005 = dma.done %s3001, 256
        $region234: #{tpu_custom_call.1} parent=229 // pred_fallthru
          _
        // Predicated region
        $region235: #{tpu_custom_call.1} parent=229 // pred_check
          %p3006 = pneg %p606
        $region236: #{tpu_custom_call.1} parent=229 // pred_check_branch
          %3008 = sbr.rel (%p3006) target = $region238
        $region237: #{tpu_custom_call.1} parent=229 // pred_region
          %s3009 = sand.u32 %s591, 1
          %s3010 = scalar_lea.sflag [#allocation40], %s3009
          %s3011 = sand.u32 %s591, 1
          %s3012 = scalar_lea.vmem [#allocation39], %s3011
          %3013 = dma.done %s3010, 16
        $region238: #{tpu_custom_call.1} parent=229 // pred_fallthru
          _
      $region230: #{tpu_custom_call.1} parent=5 // pred_fallthru
        _
    $region6: #{tpu_custom_call.1} parent=1 // loop_footer
      %s57 = sadd.s32 1, %s53
    $region7: #{tpu_custom_call.1} parent=1 // loop_footer_branch
      %52 = sbr.rel target = $region3
    $region8: #{tpu_custom_call.1} parent=1 // loop_exit
      _
    %3014 = vsyncpa [#allocation3], 1
    %s3015 = scalar_lea.sflag [#allocation3], 1
    %3016 = vsyncpa %s3015, 1
    %3017 = vsyncpa [#allocation6], 1
    %s3018 = scalar_lea.sflag [#allocation6], 1
    %3019 = vsyncpa %s3018, 1
    %3020 = vsyncpa [#allocation9], 1
    %3021 = vsyncpa [#allocation12], 1
    %3022 = vsyncpa [#allocation15], 1
    %3023 = vsyncpa [#allocation18], 1
    %3024 = vsyncpa [#allocation21], 1
    %3025 = vsyncpa [#allocation24], 1
    %3026 = vsyncpa [#allocation27], 1
    %3027 = vsyncpa [#allocation30], 1
    %3028 = vsyncpa [#allocation33], 1
    %3029 = vsyncpa [#allocation36], 1
    %3030 = vsyncpa [#allocation4], 1
    %s3031 = scalar_lea.sflag [#allocation4], 1
    %3032 = vsyncpa %s3031, 1
    %3033 = vsyncpa [#allocation40], 1
    %s3034 = scalar_lea.sflag [#allocation40], 1
    %3035 = vsyncpa %s3034, 1

</llo_original>
